<compile_context>
chip_gen: v6e
topology: v6e:2x2x1
jax: 0.10.0
libtpu: 0.0.40
codegen_flags: <defaults>
</compile_context>

<pallas_src>
import functools

import jax
import jax.numpy as jnp
from jax.experimental import pallas as pl
from jax.experimental.pallas import tpu as pltpu


def _round_up(n, m):
    return ((n + m - 1) // m) * m


def _largest_divisor_le(n, cap, multiple=1):
    """Largest divisor of n that is <= cap and a multiple of `multiple` (fallback: n)."""
    best = None
    for d in range(1, n + 1):
        if n % d == 0 and d <= cap and d % multiple == 0:
            best = d
    return best if best is not None else n


def snn_generator_kernel(x_ref, w1_ref, b1_ref, w2_ref, b2_ref, w3_ref, b3_ref,
                         spk_ref, mem1_ref, mem2_ref, mem3_ref,
                         *, beta, threshold, t_block, unroll):
    t_blk = pl.program_id(1)          # time-block index (sequential axis)

    # init_leaky(): membrane potentials start at zero at the beginning of each batch block's
    # time sweep (time is the innermost grid axis).
    @pl.when(t_blk == 0)
    def _():
        mem1_ref[...] = jnp.zeros_like(mem1_ref)
        mem2_ref[...] = jnp.zeros_like(mem2_ref)
        mem3_ref[...] = jnp.zeros_like(mem3_ref)

    bb = mem1_ref.shape[0]

    # Hoist weights and materialized bias broadcasts out of the time loop
    # (reward_scale is already folded into the weights/biases by the wrapper).
    w1 = w1_ref[...]
    w2 = w2_ref[...]
    w3 = w3_ref[...]
    b1 = jnp.broadcast_to(b1_ref[...], (bb, w1.shape[1]))
    b2 = jnp.broadcast_to(b2_ref[...], (bb, w2.shape[1]))
    b3 = jnp.broadcast_to(b3_ref[...], (bb, w3.shape[1]))

    def leaky(cur, mem_prev):
        # snn.Leaky (subtract reset): reset is based on the *previous* membrane.
        reset = (mem_prev > threshold).astype(jnp.float32)
        mem = beta * mem_prev + cur - reset * threshold
        spk = (mem > threshold).astype(jnp.float32)
        return spk, mem

    def step(t, carry):
        mem1, mem2, mem3 = carry
        x_t = x_ref[t]                                            # (BB, Dp)
        cur1 = jnp.maximum(
            jnp.dot(x_t, w1, preferred_element_type=jnp.float32) + b1, 0.0)
        spk1, mem1 = leaky(cur1, mem1)
        cur2 = jnp.maximum(
            jnp.dot(spk1, w2, preferred_element_type=jnp.float32) + b2, 0.0)
        spk2, mem2 = leaky(cur2, mem2)
        cur3 = jnp.maximum(
            jnp.dot(spk2, w3, preferred_element_type=jnp.float32) + b3, 0.0)
        spk3, mem3 = leaky(cur3, mem3)
        spk_ref[t] = spk3.astype(spk_ref.dtype)
        return (mem1, mem2, mem3)

    carry = (mem1_ref[...], mem2_ref[...], mem3_ref[...])
    carry = jax.lax.fori_loop(0, t_block, step, carry, unroll=unroll)
    mem1_ref[...], mem2_ref[...], mem3_ref[...] = carry


def generator_forward(x, params, *, beta=0.95, reward_scale=2.0, threshold=1.0):
    """x: (B, T, noise_dim) float32. Returns (B, T, gen_num_outputs) float32 spikes."""
    w1, b1, w2, b2, w3, b3 = params
    B, T, D = x.shape
    H1, H2, O = w1.shape[1], w2.shape[1], w3.shape[1]

    # Fold reward_scale into the parameters once: relu(s*(xW+b)) == relu(x(sW) + sb), s > 0.
    s = jnp.float32(reward_scale)
    w1s, b1s = s * w1, s * b1
    w2s, b2s = s * w2, s * b2
    w3s, b3s = s * w3, s * b3

    # Pad feature dims to multiples of 128 (lanes) and batch to a multiple of 8 (sublanes).
    # Padded columns receive zero current -> zero membrane -> zero spikes, so results match.
    Dp, H1p, H2p, Op = (_round_up(d, 128) for d in (D, H1, H2, O))
    Bp = _round_up(B, 8)

    def pad2(a, r, c):
        return jnp.pad(a, ((0, r - a.shape[0]), (0, c - a.shape[1])))

    w1p, b1p = pad2(w1s, Dp, H1p), pad2(b1s, 1, H1p)
    w2p, b2p = pad2(w2s, H1p, H2p), pad2(b2s, 1, H2p)
    w3p, b3p = pad2(w3s, H2p, Op), pad2(b3s, 1, Op)

    # Time-major, padded input (T, Bp, Dp): B on sublanes, features on lanes.
    x_t = jnp.transpose(x, (1, 0, 2))
    x_t = jnp.pad(x_t, ((0, 0), (0, Bp - B), (0, Dp - D)))

    # Batch block (gives v7x dual-TC parallelism when B is large; BB must stay a multiple
    # of 8 for the (8,128) tiling rule) and time block (amortizes per-grid-step overhead;
    # sized against a conservative scoped-VMEM budget so defaults work on v5e/v6e/v7x).
    BB = _largest_divisor_le(Bp, 256, multiple=8)
    step_bytes = BB * (Dp + Op) * 4                      # per-step x block + out block bytes
    budget = 4 * 1024 * 1024                             # per-buffer budget (double-buffered)
    TB = _largest_divisor_le(T, max(1, budget // step_bytes))

    kernel = functools.partial(
        snn_generator_kernel,
        beta=float(beta), threshold=float(threshold),
        t_block=TB, unroll=min(TB, 8))

    spk_tbo = pl.pallas_call(
        kernel,
        out_shape=jax.ShapeDtypeStruct((T, Bp, Op), jnp.float32),
        grid_spec=pltpu.PrefetchScalarGridSpec(
            num_scalar_prefetch=0,
            grid=(Bp // BB, T // TB),
            in_specs=[
                pl.BlockSpec((TB, BB, Dp), lambda b, t: (t, b, 0)),   # x time/batch block
                pl.BlockSpec((Dp, H1p), lambda b, t: (0, 0)),         # fc1 weight (resident)
                pl.BlockSpec((1, H1p), lambda b, t: (0, 0)),          # fc1 bias
                pl.BlockSpec((H1p, H2p), lambda b, t: (0, 0)),        # fc2 weight
                pl.BlockSpec((1, H2p), lambda b, t: (0, 0)),          # fc2 bias
                pl.BlockSpec((H2p, Op), lambda b, t: (0, 0)),         # fc3 weight
                pl.BlockSpec((1, Op), lambda b, t: (0, 0)),           # fc3 bias
            ],
            out_specs=pl.BlockSpec((TB, BB, Op), lambda b, t: (t, b, 0)),
            scratch_shapes=[
                pltpu.VMEM((BB, H1p), jnp.float32),                   # mem1 carry
                pltpu.VMEM((BB, H2p), jnp.float32),                   # mem2 carry
                pltpu.VMEM((BB, Op), jnp.float32),                    # mem3 carry
            ],
        ),
        compiler_params=pltpu.CompilerParams(
            dimension_semantics=("parallel", "arbitrary")),           # batch parallel, time seq
    )(x_t, w1p, b1p, w2p, b2p, w3p, b3p)

    # (T, Bp, Op) -> (B, T, O), matching torch.stack(spk3_rec, dim=1).
    # TODO(synk): if the consumer can accept time-major (T, B, O), drop this transpose.
    return jnp.transpose(spk_tbo[:, :B, :O], (1, 0, 2))


def generator_ref(x, params, *, beta=0.95, reward_scale=2.0, threshold=1.0):
    """Pure-JAX reference mirroring the PyTorch forward."""
    w1, b1, w2, b2, w3, b3 = params
    x_t = jnp.transpose(x, (1, 0, 2))
    B = x.shape[0]
    mem1 = jnp.zeros((B, w1.shape[1]), jnp.float32)
    mem2 = jnp.zeros((B, w2.shape[1]), jnp.float32)
    mem3 = jnp.zeros((B, w3.shape[1]), jnp.float32)

    def leaky(inp, w, b, mem):
        cur = jnp.maximum(reward_scale * (inp @ w + b), 0.0)
        reset = (mem > threshold).astype(jnp.float32)
        mem_new = beta * mem + cur - reset * threshold
        spk = (mem_new > threshold).astype(jnp.float32)
        return spk, mem_new

    spks = []
    for t in range(x.shape[1]):
        spk1, mem1 = leaky(x_t[t], w1, b1, mem1)
        spk2, mem2 = leaky(spk1, w2, b2, mem2)
        spk3, mem3 = leaky(spk2, w3, b3, mem3)
        spks.append(spk3)
    return jnp.stack(spks, axis=1)


def linear_init(key, fan_in, fan_out):
    """Deterministic nn.Linear-style init: U(-1/sqrt(fan_in), 1/sqrt(fan_in))."""
    kw, kb = jax.random.split(key)
    bound = 1.0 / (fan_in ** 0.5)
    w = jax.random.uniform(kw, (fan_in, fan_out), jnp.float32, -bound, bound)
    b = jax.random.uniform(kb, (1, fan_out), jnp.float32, -bound, bound)
    return w, b


if __name__ == "__main__":
    # Small shapes consistent with the module's structure; deliberately non-aligned
    # batch / hidden sizes to exercise the padding path.
    batch, num_steps = 6, 8
    noise_dim, h1, h2, out_dim = 64, 100, 128, 256
    beta, reward_scale = 0.95, 2.0

    key = jax.random.PRNGKey(0)
    k_x, k1, k2, k3 = jax.random.split(key, 4)
    w1, b1 = linear_init(k1, noise_dim, h1)
    w2, b2 = linear_init(k2, h1, h2)
    w3, b3 = linear_init(k3, h2, out_dim)
    params = (w1, b1, w2, b2, w3, b3)

    x = jax.random.uniform(k_x, (batch, num_steps, noise_dim), jnp.float32)

    out = jax.jit(functools.partial(
        generator_forward, beta=beta, reward_scale=reward_scale))(x, params)
    out = jax.block_until_ready(out)

    ref = generator_ref(x, params, beta=beta, reward_scale=reward_scale)
    assert out.shape == (batch, num_steps, out_dim), out.shape
    # Spikes are binary; allow a vanishingly small spike-flip budget so the test is not
    # fragile to fp summation-order differences at membranes sitting exactly on threshold.
    mismatch_frac = float(jnp.mean(jnp.abs(out - ref)))
    assert mismatch_frac <= 1e-3, f"spike mismatch fraction {mismatch_frac}"

    print("KERNEL_OK")
</pallas_src>

<mosaic_0001>
module attributes {stable_mosaic.version = 11 : i64} {
  func.func @snn_generator_kernel(%arg0: i32, %arg1: i32, %arg2: memref<8x8x128xf32, #tpu.memory_space<vmem>>, %arg3: memref<128x128xf32, #tpu.memory_space<vmem>>, %arg4: memref<1x128xf32, #tpu.memory_space<vmem>>, %arg5: memref<128x128xf32, #tpu.memory_space<vmem>>, %arg6: memref<1x128xf32, #tpu.memory_space<vmem>>, %arg7: memref<128x256xf32, #tpu.memory_space<vmem>>, %arg8: memref<1x256xf32, #tpu.memory_space<vmem>>, %arg9: memref<8x8x256xf32, #tpu.memory_space<vmem>>, %arg10: memref<8x128xf32, #tpu.memory_space<vmem>>, %arg11: memref<8x128xf32, #tpu.memory_space<vmem>>, %arg12: memref<8x256xf32, #tpu.memory_space<vmem>>) attributes {dimension_semantics = [#tpu.dimension_semantics<parallel>, #tpu.dimension_semantics<arbitrary>], iteration_bounds = array<i64: 1, 1>, scalar_prefetch = 0 : i64, scratch_operands = 3 : i64, tpu.core_type = #tpu.core_type<tc>, window_params = [{transform_indices = @transform_0, window_bounds = array<i64: 8, 8, 128>}, {pipeline_mode = #tpu.pipeline_mode<synchronous>, transform_indices = @transform_1, window_bounds = array<i64: 128, 128>}, {pipeline_mode = #tpu.pipeline_mode<synchronous>, transform_indices = @transform_2, window_bounds = array<i64: 1, 128>}, {pipeline_mode = #tpu.pipeline_mode<synchronous>, transform_indices = @transform_3, window_bounds = array<i64: 128, 128>}, {pipeline_mode = #tpu.pipeline_mode<synchronous>, transform_indices = @transform_4, window_bounds = array<i64: 1, 128>}, {pipeline_mode = #tpu.pipeline_mode<synchronous>, transform_indices = @transform_5, window_bounds = array<i64: 128, 256>}, {pipeline_mode = #tpu.pipeline_mode<synchronous>, transform_indices = @transform_6, window_bounds = array<i64: 1, 256>}, {transform_indices = @transform_7, window_bounds = array<i64: 8, 8, 256>}]} {
    %c0_i32 = arith.constant 0 : i32
    %0 = arith.cmpi eq, %arg1, %c0_i32 : i32
    %1 = arith.extui %0 : i1 to i32
    %c0_i32_0 = arith.constant 0 : i32
    %2 = arith.cmpi ne, %1, %c0_i32_0 : i32
    scf.if %2 {
      %cst_200 = arith.constant 0.000000e+00 : f32
      %509 = vector.broadcast %cst_200 : f32 to vector<8x128xf32>
      %c0_201 = arith.constant 0 : index
      %c0_202 = arith.constant 0 : index
      %510 = vector.load %arg10[%c0_201, %c0_202] : memref<8x128xf32, #tpu.memory_space<vmem>>, vector<8x128xf32>
      tpu.vector_store %arg10[%c0_201, %c0_202], %509 {strides = array<i32>} : memref<8x128xf32, #tpu.memory_space<vmem>>, vector<8x128xf32>,
      %cst_203 = arith.constant 0.000000e+00 : f32
      %511 = vector.broadcast %cst_203 : f32 to vector<8x128xf32>
      %c0_204 = arith.constant 0 : index
      %c0_205 = arith.constant 0 : index
      %512 = vector.load %arg11[%c0_204, %c0_205] : memref<8x128xf32, #tpu.memory_space<vmem>>, vector<8x128xf32>
      tpu.vector_store %arg11[%c0_204, %c0_205], %511 {strides = array<i32>} : memref<8x128xf32, #tpu.memory_space<vmem>>, vector<8x128xf32>,
      %cst_206 = arith.constant 0.000000e+00 : f32
      %513 = vector.broadcast %cst_206 : f32 to vector<8x256xf32>
      %c0_207 = arith.constant 0 : index
      %c0_208 = arith.constant 0 : index
      %514 = vector.load %arg12[%c0_207, %c0_208] : memref<8x256xf32, #tpu.memory_space<vmem>>, vector<8x256xf32>
      tpu.vector_store %arg12[%c0_207, %c0_208], %513 {strides = array<i32>} : memref<8x256xf32, #tpu.memory_space<vmem>>, vector<8x256xf32>,
    } else {
    }
    %c0 = arith.constant 0 : index
    %c0_1 = arith.constant 0 : index
    %3 = vector.load %arg3[%c0, %c0_1] : memref<128x128xf32, #tpu.memory_space<vmem>>, vector<128x128xf32>
    %c0_2 = arith.constant 0 : index
    %c0_3 = arith.constant 0 : index
    %4 = vector.load %arg5[%c0_2, %c0_3] : memref<128x128xf32, #tpu.memory_space<vmem>>, vector<128x128xf32>
    %c0_4 = arith.constant 0 : index
    %c0_5 = arith.constant 0 : index
    %5 = vector.load %arg7[%c0_4, %c0_5] : memref<128x256xf32, #tpu.memory_space<vmem>>, vector<128x256xf32>
    %c0_6 = arith.constant 0 : index
    %c0_7 = arith.constant 0 : index
    %6 = vector.load %arg4[%c0_6, %c0_7] : memref<1x128xf32, #tpu.memory_space<vmem>>, vector<1x128xf32>
    %7 = vector.shape_cast %6 : vector<1x128xf32> to vector<1x128xf32>
    %8 = vector.broadcast %7 : vector<1x128xf32> to vector<8x128xf32>
    %c0_8 = arith.constant 0 : index
    %c0_9 = arith.constant 0 : index
    %9 = vector.load %arg6[%c0_8, %c0_9] : memref<1x128xf32, #tpu.memory_space<vmem>>, vector<1x128xf32>
    %10 = vector.shape_cast %9 : vector<1x128xf32> to vector<1x128xf32>
    %11 = vector.broadcast %10 : vector<1x128xf32> to vector<8x128xf32>
    %c0_10 = arith.constant 0 : index
    %c0_11 = arith.constant 0 : index
    %12 = vector.load %arg8[%c0_10, %c0_11] : memref<1x256xf32, #tpu.memory_space<vmem>>, vector<1x256xf32>
    %13 = vector.shape_cast %12 : vector<1x256xf32> to vector<1x256xf32>
    %14 = vector.broadcast %13 : vector<1x256xf32> to vector<8x256xf32>
    %c0_12 = arith.constant 0 : index
    %c0_13 = arith.constant 0 : index
    %15 = vector.load %arg10[%c0_12, %c0_13] : memref<8x128xf32, #tpu.memory_space<vmem>>, vector<8x128xf32>
    %c0_14 = arith.constant 0 : index
    %c0_15 = arith.constant 0 : index
    %16 = vector.load %arg11[%c0_14, %c0_15] : memref<8x128xf32, #tpu.memory_space<vmem>>, vector<8x128xf32>
    %c0_16 = arith.constant 0 : index
    %c0_17 = arith.constant 0 : index
    %17 = vector.load %arg12[%c0_16, %c0_17] : memref<8x256xf32, #tpu.memory_space<vmem>>, vector<8x256xf32>
    %c0_i32_18 = arith.constant 0 : i32
    %18 = arith.index_cast %c0_i32_18 : i32 to index
    %c0_19 = arith.constant 0 : index
    %c0_20 = arith.constant 0 : index
    %19 = vector.load %arg2[%18, %c0_19, %c0_20] : memref<8x8x128xf32, #tpu.memory_space<vmem>>, vector<1x8x128xf32>
    %20 = vector.shape_cast %19 : vector<1x8x128xf32> to vector<8x128xf32>
    %cst = arith.constant dense<0.000000e+00> : vector<8x128xf32>
    %21 = tpu.matmul %20, %3, %cst {dimension_numbers = #tpu.dot_dimension_numbers<[1], [0], [0], [1], [0, 0, 1, 1], [], []>} : vector<8x128xf32>, vector<128x128xf32>, vector<8x128xf32> -> vector<8x128xf32>
    %22 = arith.addf %21, %8 : vector<8x128xf32>
    %cst_21 = arith.constant 0.000000e+00 : f32
    %23 = vector.broadcast %cst_21 : f32 to vector<8x128xf32>
    %24 = arith.maximumf %22, %23 : vector<8x128xf32>
    %cst_22 = arith.constant 1.000000e+00 : f32
    %25 = vector.broadcast %cst_22 : f32 to vector<8x128xf32>
    %26 = arith.cmpf ogt, %15, %25 : vector<8x128xf32>
    %27 = arith.extui %26 : vector<8x128xi1> to vector<8x128xi32>
    %28 = arith.sitofp %27 : vector<8x128xi32> to vector<8x128xf32>
    %cst_23 = arith.constant 0.949999988 : f32
    %29 = vector.broadcast %cst_23 : f32 to vector<8x128xf32>
    %30 = arith.mulf %29, %15 : vector<8x128xf32>
    %31 = arith.addf %30, %24 : vector<8x128xf32>
    %cst_24 = arith.constant 1.000000e+00 : f32
    %32 = vector.broadcast %cst_24 : f32 to vector<8x128xf32>
    %33 = arith.mulf %28, %32 : vector<8x128xf32>
    %34 = arith.subf %31, %33 : vector<8x128xf32>
    %cst_25 = arith.constant 1.000000e+00 : f32
    %35 = vector.broadcast %cst_25 : f32 to vector<8x128xf32>
    %36 = arith.cmpf ogt, %34, %35 : vector<8x128xf32>
    %37 = arith.extui %36 : vector<8x128xi1> to vector<8x128xi32>
    %38 = arith.sitofp %37 : vector<8x128xi32> to vector<8x128xf32>
    %cst_26 = arith.constant dense<0.000000e+00> : vector<8x128xf32>
    %39 = tpu.matmul %38, %4, %cst_26 {dimension_numbers = #tpu.dot_dimension_numbers<[1], [0], [0], [1], [0, 0, 1, 1], [], []>} : vector<8x128xf32>, vector<128x128xf32>, vector<8x128xf32> -> vector<8x128xf32>
    %40 = arith.addf %39, %11 : vector<8x128xf32>
    %cst_27 = arith.constant 0.000000e+00 : f32
    %41 = vector.broadcast %cst_27 : f32 to vector<8x128xf32>
    %42 = arith.maximumf %40, %41 : vector<8x128xf32>
    %cst_28 = arith.constant 1.000000e+00 : f32
    %43 = vector.broadcast %cst_28 : f32 to vector<8x128xf32>
    %44 = arith.cmpf ogt, %16, %43 : vector<8x128xf32>
    %45 = arith.extui %44 : vector<8x128xi1> to vector<8x128xi32>
    %46 = arith.sitofp %45 : vector<8x128xi32> to vector<8x128xf32>
    %cst_29 = arith.constant 0.949999988 : f32
    %47 = vector.broadcast %cst_29 : f32 to vector<8x128xf32>
    %48 = arith.mulf %47, %16 : vector<8x128xf32>
    %49 = arith.addf %48, %42 : vector<8x128xf32>
    %cst_30 = arith.constant 1.000000e+00 : f32
    %50 = vector.broadcast %cst_30 : f32 to vector<8x128xf32>
    %51 = arith.mulf %46, %50 : vector<8x128xf32>
    %52 = arith.subf %49, %51 : vector<8x128xf32>
    %cst_31 = arith.constant 1.000000e+00 : f32
    %53 = vector.broadcast %cst_31 : f32 to vector<8x128xf32>
    %54 = arith.cmpf ogt, %52, %53 : vector<8x128xf32>
    %55 = arith.extui %54 : vector<8x128xi1> to vector<8x128xi32>
    %56 = arith.sitofp %55 : vector<8x128xi32> to vector<8x128xf32>
    %cst_32 = arith.constant dense<0.000000e+00> : vector<8x256xf32>
    %57 = tpu.matmul %56, %5, %cst_32 {dimension_numbers = #tpu.dot_dimension_numbers<[1], [0], [0], [1], [0, 0, 1, 1], [], []>} : vector<8x128xf32>, vector<128x256xf32>, vector<8x256xf32> -> vector<8x256xf32>
    %58 = arith.addf %57, %14 : vector<8x256xf32>
    %cst_33 = arith.constant 0.000000e+00 : f32
    %59 = vector.broadcast %cst_33 : f32 to vector<8x256xf32>
    %60 = arith.maximumf %58, %59 : vector<8x256xf32>
    %cst_34 = arith.constant 1.000000e+00 : f32
    %61 = vector.broadcast %cst_34 : f32 to vector<8x256xf32>
    %62 = arith.cmpf ogt, %17, %61 : vector<8x256xf32>
    %63 = arith.extui %62 : vector<8x256xi1> to vector<8x256xi32>
    %64 = arith.sitofp %63 : vector<8x256xi32> to vector<8x256xf32>
    %cst_35 = arith.constant 0.949999988 : f32
    %65 = vector.broadcast %cst_35 : f32 to vector<8x256xf32>
    %66 = arith.mulf %65, %17 : vector<8x256xf32>
    %67 = arith.addf %66, %60 : vector<8x256xf32>
    %cst_36 = arith.constant 1.000000e+00 : f32
    %68 = vector.broadcast %cst_36 : f32 to vector<8x256xf32>
    %69 = arith.mulf %64, %68 : vector<8x256xf32>
    %70 = arith.subf %67, %69 : vector<8x256xf32>
    %cst_37 = arith.constant 1.000000e+00 : f32
    %71 = vector.broadcast %cst_37 : f32 to vector<8x256xf32>
    %72 = arith.cmpf ogt, %70, %71 : vector<8x256xf32>
    %73 = arith.extui %72 : vector<8x256xi1> to vector<8x256xi32>
    %74 = arith.sitofp %73 : vector<8x256xi32> to vector<8x256xf32>
    %75 = arith.index_cast %c0_i32_18 : i32 to index
    %c0_38 = arith.constant 0 : index
    %c0_39 = arith.constant 0 : index
    %76 = vector.load %arg9[%75, %c0_38, %c0_39] : memref<8x8x256xf32, #tpu.memory_space<vmem>>, vector<1x8x256xf32>
    %77 = vector.shape_cast %76 : vector<1x8x256xf32> to vector<8x256xf32>
    %78 = vector.shape_cast %74 : vector<8x256xf32> to vector<1x8x256xf32>
    tpu.vector_store %arg9[%75, %c0_38, %c0_39], %78 {strides = array<i32>} : memref<8x8x256xf32, #tpu.memory_space<vmem>>, vector<1x8x256xf32>,
    %c1_i32 = arith.constant 1 : i32
    %79 = arith.index_cast %c1_i32 : i32 to index
    %c0_40 = arith.constant 0 : index
    %c0_41 = arith.constant 0 : index
    %80 = vector.load %arg2[%79, %c0_40, %c0_41] : memref<8x8x128xf32, #tpu.memory_space<vmem>>, vector<1x8x128xf32>
    %81 = vector.shape_cast %80 : vector<1x8x128xf32> to vector<8x128xf32>
    %cst_42 = arith.constant dense<0.000000e+00> : vector<8x128xf32>
    %82 = tpu.matmul %81, %3, %cst_42 {dimension_numbers = #tpu.dot_dimension_numbers<[1], [0], [0], [1], [0, 0, 1, 1], [], []>} : vector<8x128xf32>, vector<128x128xf32>, vector<8x128xf32> -> vector<8x128xf32>
    %83 = arith.addf %82, %8 : vector<8x128xf32>
    %cst_43 = arith.constant 0.000000e+00 : f32
    %84 = vector.broadcast %cst_43 : f32 to vector<8x128xf32>
    %85 = arith.maximumf %83, %84 : vector<8x128xf32>
    %cst_44 = arith.constant 1.000000e+00 : f32
    %86 = vector.broadcast %cst_44 : f32 to vector<8x128xf32>
    %87 = arith.cmpf ogt, %34, %86 : vector<8x128xf32>
    %88 = arith.extui %87 : vector<8x128xi1> to vector<8x128xi32>
    %89 = arith.sitofp %88 : vector<8x128xi32> to vector<8x128xf32>
    %cst_45 = arith.constant 0.949999988 : f32
    %90 = vector.broadcast %cst_45 : f32 to vector<8x128xf32>
    %91 = arith.mulf %90, %34 : vector<8x128xf32>
    %92 = arith.addf %91, %85 : vector<8x128xf32>
    %cst_46 = arith.constant 1.000000e+00 : f32
    %93 = vector.broadcast %cst_46 : f32 to vector<8x128xf32>
    %94 = arith.mulf %89, %93 : vector<8x128xf32>
    %95 = arith.subf %92, %94 : vector<8x128xf32>
    %cst_47 = arith.constant 1.000000e+00 : f32
    %96 = vector.broadcast %cst_47 : f32 to vector<8x128xf32>
    %97 = arith.cmpf ogt, %95, %96 : vector<8x128xf32>
    %98 = arith.extui %97 : vector<8x128xi1> to vector<8x128xi32>
    %99 = arith.sitofp %98 : vector<8x128xi32> to vector<8x128xf32>
    %cst_48 = arith.constant dense<0.000000e+00> : vector<8x128xf32>
    %100 = tpu.matmul %99, %4, %cst_48 {dimension_numbers = #tpu.dot_dimension_numbers<[1], [0], [0], [1], [0, 0, 1, 1], [], []>} : vector<8x128xf32>, vector<128x128xf32>, vector<8x128xf32> -> vector<8x128xf32>
    %101 = arith.addf %100, %11 : vector<8x128xf32>
    %cst_49 = arith.constant 0.000000e+00 : f32
    %102 = vector.broadcast %cst_49 : f32 to vector<8x128xf32>
    %103 = arith.maximumf %101, %102 : vector<8x128xf32>
    %cst_50 = arith.constant 1.000000e+00 : f32
    %104 = vector.broadcast %cst_50 : f32 to vector<8x128xf32>
    %105 = arith.cmpf ogt, %52, %104 : vector<8x128xf32>
    %106 = arith.extui %105 : vector<8x128xi1> to vector<8x128xi32>
    %107 = arith.sitofp %106 : vector<8x128xi32> to vector<8x128xf32>
    %cst_51 = arith.constant 0.949999988 : f32
    %108 = vector.broadcast %cst_51 : f32 to vector<8x128xf32>
    %109 = arith.mulf %108, %52 : vector<8x128xf32>
    %110 = arith.addf %109, %103 : vector<8x128xf32>
    %cst_52 = arith.constant 1.000000e+00 : f32
    %111 = vector.broadcast %cst_52 : f32 to vector<8x128xf32>
    %112 = arith.mulf %107, %111 : vector<8x128xf32>
    %113 = arith.subf %110, %112 : vector<8x128xf32>
    %cst_53 = arith.constant 1.000000e+00 : f32
    %114 = vector.broadcast %cst_53 : f32 to vector<8x128xf32>
    %115 = arith.cmpf ogt, %113, %114 : vector<8x128xf32>
    %116 = arith.extui %115 : vector<8x128xi1> to vector<8x128xi32>
    %117 = arith.sitofp %116 : vector<8x128xi32> to vector<8x128xf32>
    %cst_54 = arith.constant dense<0.000000e+00> : vector<8x256xf32>
    %118 = tpu.matmul %117, %5, %cst_54 {dimension_numbers = #tpu.dot_dimension_numbers<[1], [0], [0], [1], [0, 0, 1, 1], [], []>} : vector<8x128xf32>, vector<128x256xf32>, vector<8x256xf32> -> vector<8x256xf32>
    %119 = arith.addf %118, %14 : vector<8x256xf32>
    %cst_55 = arith.constant 0.000000e+00 : f32
    %120 = vector.broadcast %cst_55 : f32 to vector<8x256xf32>
    %121 = arith.maximumf %119, %120 : vector<8x256xf32>
    %cst_56 = arith.constant 1.000000e+00 : f32
    %122 = vector.broadcast %cst_56 : f32 to vector<8x256xf32>
    %123 = arith.cmpf ogt, %70, %122 : vector<8x256xf32>
    %124 = arith.extui %123 : vector<8x256xi1> to vector<8x256xi32>
    %125 = arith.sitofp %124 : vector<8x256xi32> to vector<8x256xf32>
    %cst_57 = arith.constant 0.949999988 : f32
    %126 = vector.broadcast %cst_57 : f32 to vector<8x256xf32>
    %127 = arith.mulf %126, %70 : vector<8x256xf32>
    %128 = arith.addf %127, %121 : vector<8x256xf32>
    %cst_58 = arith.constant 1.000000e+00 : f32
    %129 = vector.broadcast %cst_58 : f32 to vector<8x256xf32>
    %130 = arith.mulf %125, %129 : vector<8x256xf32>
    %131 = arith.subf %128, %130 : vector<8x256xf32>
    %cst_59 = arith.constant 1.000000e+00 : f32
    %132 = vector.broadcast %cst_59 : f32 to vector<8x256xf32>
    %133 = arith.cmpf ogt, %131, %132 : vector<8x256xf32>
    %134 = arith.extui %133 : vector<8x256xi1> to vector<8x256xi32>
    %135 = arith.sitofp %134 : vector<8x256xi32> to vector<8x256xf32>
    %136 = arith.index_cast %c1_i32 : i32 to index
    %c0_60 = arith.constant 0 : index
    %c0_61 = arith.constant 0 : index
    %137 = vector.load %arg9[%136, %c0_60, %c0_61] : memref<8x8x256xf32, #tpu.memory_space<vmem>>, vector<1x8x256xf32>
    %138 = vector.shape_cast %137 : vector<1x8x256xf32> to vector<8x256xf32>
    %139 = vector.shape_cast %135 : vector<8x256xf32> to vector<1x8x256xf32>
    tpu.vector_store %arg9[%136, %c0_60, %c0_61], %139 {strides = array<i32>} : memref<8x8x256xf32, #tpu.memory_space<vmem>>, vector<1x8x256xf32>,
    %c2_i32 = arith.constant 2 : i32
    %140 = arith.index_cast %c2_i32 : i32 to index
    %c0_62 = arith.constant 0 : index
    %c0_63 = arith.constant 0 : index
    %141 = vector.load %arg2[%140, %c0_62, %c0_63] : memref<8x8x128xf32, #tpu.memory_space<vmem>>, vector<1x8x128xf32>
    %142 = vector.shape_cast %141 : vector<1x8x128xf32> to vector<8x128xf32>
    %cst_64 = arith.constant dense<0.000000e+00> : vector<8x128xf32>
    %143 = tpu.matmul %142, %3, %cst_64 {dimension_numbers = #tpu.dot_dimension_numbers<[1], [0], [0], [1], [0, 0, 1, 1], [], []>} : vector<8x128xf32>, vector<128x128xf32>, vector<8x128xf32> -> vector<8x128xf32>
    %144 = arith.addf %143, %8 : vector<8x128xf32>
    %cst_65 = arith.constant 0.000000e+00 : f32
    %145 = vector.broadcast %cst_65 : f32 to vector<8x128xf32>
    %146 = arith.maximumf %144, %145 : vector<8x128xf32>
    %cst_66 = arith.constant 1.000000e+00 : f32
    %147 = vector.broadcast %cst_66 : f32 to vector<8x128xf32>
    %148 = arith.cmpf ogt, %95, %147 : vector<8x128xf32>
    %149 = arith.extui %148 : vector<8x128xi1> to vector<8x128xi32>
    %150 = arith.sitofp %149 : vector<8x128xi32> to vector<8x128xf32>
    %cst_67 = arith.constant 0.949999988 : f32
    %151 = vector.broadcast %cst_67 : f32 to vector<8x128xf32>
    %152 = arith.mulf %151, %95 : vector<8x128xf32>
    %153 = arith.addf %152, %146 : vector<8x128xf32>
    %cst_68 = arith.constant 1.000000e+00 : f32
    %154 = vector.broadcast %cst_68 : f32 to vector<8x128xf32>
    %155 = arith.mulf %150, %154 : vector<8x128xf32>
    %156 = arith.subf %153, %155 : vector<8x128xf32>
    %cst_69 = arith.constant 1.000000e+00 : f32
    %157 = vector.broadcast %cst_69 : f32 to vector<8x128xf32>
    %158 = arith.cmpf ogt, %156, %157 : vector<8x128xf32>
    %159 = arith.extui %158 : vector<8x128xi1> to vector<8x128xi32>
    %160 = arith.sitofp %159 : vector<8x128xi32> to vector<8x128xf32>
    %cst_70 = arith.constant dense<0.000000e+00> : vector<8x128xf32>
    %161 = tpu.matmul %160, %4, %cst_70 {dimension_numbers = #tpu.dot_dimension_numbers<[1], [0], [0], [1], [0, 0, 1, 1], [], []>} : vector<8x128xf32>, vector<128x128xf32>, vector<8x128xf32> -> vector<8x128xf32>
    %162 = arith.addf %161, %11 : vector<8x128xf32>
    %cst_71 = arith.constant 0.000000e+00 : f32
    %163 = vector.broadcast %cst_71 : f32 to vector<8x128xf32>
    %164 = arith.maximumf %162, %163 : vector<8x128xf32>
    %cst_72 = arith.constant 1.000000e+00 : f32
    %165 = vector.broadcast %cst_72 : f32 to vector<8x128xf32>
    %166 = arith.cmpf ogt, %113, %165 : vector<8x128xf32>
    %167 = arith.extui %166 : vector<8x128xi1> to vector<8x128xi32>
    %168 = arith.sitofp %167 : vector<8x128xi32> to vector<8x128xf32>
    %cst_73 = arith.constant 0.949999988 : f32
    %169 = vector.broadcast %cst_73 : f32 to vector<8x128xf32>
    %170 = arith.mulf %169, %113 : vector<8x128xf32>
    %171 = arith.addf %170, %164 : vector<8x128xf32>
    %cst_74 = arith.constant 1.000000e+00 : f32
    %172 = vector.broadcast %cst_74 : f32 to vector<8x128xf32>
    %173 = arith.mulf %168, %172 : vector<8x128xf32>
    %174 = arith.subf %171, %173 : vector<8x128xf32>
    %cst_75 = arith.constant 1.000000e+00 : f32
    %175 = vector.broadcast %cst_75 : f32 to vector<8x128xf32>
    %176 = arith.cmpf ogt, %174, %175 : vector<8x128xf32>
    %177 = arith.extui %176 : vector<8x128xi1> to vector<8x128xi32>
    %178 = arith.sitofp %177 : vector<8x128xi32> to vector<8x128xf32>
    %cst_76 = arith.constant dense<0.000000e+00> : vector<8x256xf32>
    %179 = tpu.matmul %178, %5, %cst_76 {dimension_numbers = #tpu.dot_dimension_numbers<[1], [0], [0], [1], [0, 0, 1, 1], [], []>} : vector<8x128xf32>, vector<128x256xf32>, vector<8x256xf32> -> vector<8x256xf32>
    %180 = arith.addf %179, %14 : vector<8x256xf32>
    %cst_77 = arith.constant 0.000000e+00 : f32
    %181 = vector.broadcast %cst_77 : f32 to vector<8x256xf32>
    %182 = arith.maximumf %180, %181 : vector<8x256xf32>
    %cst_78 = arith.constant 1.000000e+00 : f32
    %183 = vector.broadcast %cst_78 : f32 to vector<8x256xf32>
    %184 = arith.cmpf ogt, %131, %183 : vector<8x256xf32>
    %185 = arith.extui %184 : vector<8x256xi1> to vector<8x256xi32>
    %186 = arith.sitofp %185 : vector<8x256xi32> to vector<8x256xf32>
    %cst_79 = arith.constant 0.949999988 : f32
    %187 = vector.broadcast %cst_79 : f32 to vector<8x256xf32>
    %188 = arith.mulf %187, %131 : vector<8x256xf32>
    %189 = arith.addf %188, %182 : vector<8x256xf32>
    %cst_80 = arith.constant 1.000000e+00 : f32
    %190 = vector.broadcast %cst_80 : f32 to vector<8x256xf32>
    %191 = arith.mulf %186, %190 : vector<8x256xf32>
    %192 = arith.subf %189, %191 : vector<8x256xf32>
    %cst_81 = arith.constant 1.000000e+00 : f32
    %193 = vector.broadcast %cst_81 : f32 to vector<8x256xf32>
    %194 = arith.cmpf ogt, %192, %193 : vector<8x256xf32>
    %195 = arith.extui %194 : vector<8x256xi1> to vector<8x256xi32>
    %196 = arith.sitofp %195 : vector<8x256xi32> to vector<8x256xf32>
    %197 = arith.index_cast %c2_i32 : i32 to index
    %c0_82 = arith.constant 0 : index
    %c0_83 = arith.constant 0 : index
    %198 = vector.load %arg9[%197, %c0_82, %c0_83] : memref<8x8x256xf32, #tpu.memory_space<vmem>>, vector<1x8x256xf32>
    %199 = vector.shape_cast %198 : vector<1x8x256xf32> to vector<8x256xf32>
    %200 = vector.shape_cast %196 : vector<8x256xf32> to vector<1x8x256xf32>
    tpu.vector_store %arg9[%197, %c0_82, %c0_83], %200 {strides = array<i32>} : memref<8x8x256xf32, #tpu.memory_space<vmem>>, vector<1x8x256xf32>,
    %c3_i32 = arith.constant 3 : i32
    %201 = arith.index_cast %c3_i32 : i32 to index
    %c0_84 = arith.constant 0 : index
    %c0_85 = arith.constant 0 : index
    %202 = vector.load %arg2[%201, %c0_84, %c0_85] : memref<8x8x128xf32, #tpu.memory_space<vmem>>, vector<1x8x128xf32>
    %203 = vector.shape_cast %202 : vector<1x8x128xf32> to vector<8x128xf32>
    %cst_86 = arith.constant dense<0.000000e+00> : vector<8x128xf32>
    %204 = tpu.matmul %203, %3, %cst_86 {dimension_numbers = #tpu.dot_dimension_numbers<[1], [0], [0], [1], [0, 0, 1, 1], [], []>} : vector<8x128xf32>, vector<128x128xf32>, vector<8x128xf32> -> vector<8x128xf32>
    %205 = arith.addf %204, %8 : vector<8x128xf32>
    %cst_87 = arith.constant 0.000000e+00 : f32
    %206 = vector.broadcast %cst_87 : f32 to vector<8x128xf32>
    %207 = arith.maximumf %205, %206 : vector<8x128xf32>
    %cst_88 = arith.constant 1.000000e+00 : f32
    %208 = vector.broadcast %cst_88 : f32 to vector<8x128xf32>
    %209 = arith.cmpf ogt, %156, %208 : vector<8x128xf32>
    %210 = arith.extui %209 : vector<8x128xi1> to vector<8x128xi32>
    %211 = arith.sitofp %210 : vector<8x128xi32> to vector<8x128xf32>
    %cst_89 = arith.constant 0.949999988 : f32
    %212 = vector.broadcast %cst_89 : f32 to vector<8x128xf32>
    %213 = arith.mulf %212, %156 : vector<8x128xf32>
    %214 = arith.addf %213, %207 : vector<8x128xf32>
    %cst_90 = arith.constant 1.000000e+00 : f32
    %215 = vector.broadcast %cst_90 : f32 to vector<8x128xf32>
    %216 = arith.mulf %211, %215 : vector<8x128xf32>
    %217 = arith.subf %214, %216 : vector<8x128xf32>
    %cst_91 = arith.constant 1.000000e+00 : f32
    %218 = vector.broadcast %cst_91 : f32 to vector<8x128xf32>
    %219 = arith.cmpf ogt, %217, %218 : vector<8x128xf32>
    %220 = arith.extui %219 : vector<8x128xi1> to vector<8x128xi32>
    %221 = arith.sitofp %220 : vector<8x128xi32> to vector<8x128xf32>
    %cst_92 = arith.constant dense<0.000000e+00> : vector<8x128xf32>
    %222 = tpu.matmul %221, %4, %cst_92 {dimension_numbers = #tpu.dot_dimension_numbers<[1], [0], [0], [1], [0, 0, 1, 1], [], []>} : vector<8x128xf32>, vector<128x128xf32>, vector<8x128xf32> -> vector<8x128xf32>
    %223 = arith.addf %222, %11 : vector<8x128xf32>
    %cst_93 = arith.constant 0.000000e+00 : f32
    %224 = vector.broadcast %cst_93 : f32 to vector<8x128xf32>
    %225 = arith.maximumf %223, %224 : vector<8x128xf32>
    %cst_94 = arith.constant 1.000000e+00 : f32
    %226 = vector.broadcast %cst_94 : f32 to vector<8x128xf32>
    %227 = arith.cmpf ogt, %174, %226 : vector<8x128xf32>
    %228 = arith.extui %227 : vector<8x128xi1> to vector<8x128xi32>
    %229 = arith.sitofp %228 : vector<8x128xi32> to vector<8x128xf32>
    %cst_95 = arith.constant 0.949999988 : f32
    %230 = vector.broadcast %cst_95 : f32 to vector<8x128xf32>
    %231 = arith.mulf %230, %174 : vector<8x128xf32>
    %232 = arith.addf %231, %225 : vector<8x128xf32>
    %cst_96 = arith.constant 1.000000e+00 : f32
    %233 = vector.broadcast %cst_96 : f32 to vector<8x128xf32>
    %234 = arith.mulf %229, %233 : vector<8x128xf32>
    %235 = arith.subf %232, %234 : vector<8x128xf32>
    %cst_97 = arith.constant 1.000000e+00 : f32
    %236 = vector.broadcast %cst_97 : f32 to vector<8x128xf32>
    %237 = arith.cmpf ogt, %235, %236 : vector<8x128xf32>
    %238 = arith.extui %237 : vector<8x128xi1> to vector<8x128xi32>
    %239 = arith.sitofp %238 : vector<8x128xi32> to vector<8x128xf32>
    %cst_98 = arith.constant dense<0.000000e+00> : vector<8x256xf32>
    %240 = tpu.matmul %239, %5, %cst_98 {dimension_numbers = #tpu.dot_dimension_numbers<[1], [0], [0], [1], [0, 0, 1, 1], [], []>} : vector<8x128xf32>, vector<128x256xf32>, vector<8x256xf32> -> vector<8x256xf32>
    %241 = arith.addf %240, %14 : vector<8x256xf32>
    %cst_99 = arith.constant 0.000000e+00 : f32
    %242 = vector.broadcast %cst_99 : f32 to vector<8x256xf32>
    %243 = arith.maximumf %241, %242 : vector<8x256xf32>
    %cst_100 = arith.constant 1.000000e+00 : f32
    %244 = vector.broadcast %cst_100 : f32 to vector<8x256xf32>
    %245 = arith.cmpf ogt, %192, %244 : vector<8x256xf32>
    %246 = arith.extui %245 : vector<8x256xi1> to vector<8x256xi32>
    %247 = arith.sitofp %246 : vector<8x256xi32> to vector<8x256xf32>
    %cst_101 = arith.constant 0.949999988 : f32
    %248 = vector.broadcast %cst_101 : f32 to vector<8x256xf32>
    %249 = arith.mulf %248, %192 : vector<8x256xf32>
    %250 = arith.addf %249, %243 : vector<8x256xf32>
    %cst_102 = arith.constant 1.000000e+00 : f32
    %251 = vector.broadcast %cst_102 : f32 to vector<8x256xf32>
    %252 = arith.mulf %247, %251 : vector<8x256xf32>
    %253 = arith.subf %250, %252 : vector<8x256xf32>
    %cst_103 = arith.constant 1.000000e+00 : f32
    %254 = vector.broadcast %cst_103 : f32 to vector<8x256xf32>
    %255 = arith.cmpf ogt, %253, %254 : vector<8x256xf32>
    %256 = arith.extui %255 : vector<8x256xi1> to vector<8x256xi32>
    %257 = arith.sitofp %256 : vector<8x256xi32> to vector<8x256xf32>
    %258 = arith.index_cast %c3_i32 : i32 to index
    %c0_104 = arith.constant 0 : index
    %c0_105 = arith.constant 0 : index
    %259 = vector.load %arg9[%258, %c0_104, %c0_105] : memref<8x8x256xf32, #tpu.memory_space<vmem>>, vector<1x8x256xf32>
    %260 = vector.shape_cast %259 : vector<1x8x256xf32> to vector<8x256xf32>
    %261 = vector.shape_cast %257 : vector<8x256xf32> to vector<1x8x256xf32>
    tpu.vector_store %arg9[%258, %c0_104, %c0_105], %261 {strides = array<i32>} : memref<8x8x256xf32, #tpu.memory_space<vmem>>, vector<1x8x256xf32>,
    %c4_i32 = arith.constant 4 : i32
    %262 = arith.index_cast %c4_i32 : i32 to index
    %c0_106 = arith.constant 0 : index
    %c0_107 = arith.constant 0 : index
    %263 = vector.load %arg2[%262, %c0_106, %c0_107] : memref<8x8x128xf32, #tpu.memory_space<vmem>>, vector<1x8x128xf32>
    %264 = vector.shape_cast %263 : vector<1x8x128xf32> to vector<8x128xf32>
    %cst_108 = arith.constant dense<0.000000e+00> : vector<8x128xf32>
    %265 = tpu.matmul %264, %3, %cst_108 {dimension_numbers = #tpu.dot_dimension_numbers<[1], [0], [0], [1], [0, 0, 1, 1], [], []>} : vector<8x128xf32>, vector<128x128xf32>, vector<8x128xf32> -> vector<8x128xf32>
    %266 = arith.addf %265, %8 : vector<8x128xf32>
    %cst_109 = arith.constant 0.000000e+00 : f32
    %267 = vector.broadcast %cst_109 : f32 to vector<8x128xf32>
    %268 = arith.maximumf %266, %267 : vector<8x128xf32>
    %cst_110 = arith.constant 1.000000e+00 : f32
    %269 = vector.broadcast %cst_110 : f32 to vector<8x128xf32>
    %270 = arith.cmpf ogt, %217, %269 : vector<8x128xf32>
    %271 = arith.extui %270 : vector<8x128xi1> to vector<8x128xi32>
    %272 = arith.sitofp %271 : vector<8x128xi32> to vector<8x128xf32>
    %cst_111 = arith.constant 0.949999988 : f32
    %273 = vector.broadcast %cst_111 : f32 to vector<8x128xf32>
    %274 = arith.mulf %273, %217 : vector<8x128xf32>
    %275 = arith.addf %274, %268 : vector<8x128xf32>
    %cst_112 = arith.constant 1.000000e+00 : f32
    %276 = vector.broadcast %cst_112 : f32 to vector<8x128xf32>
    %277 = arith.mulf %272, %276 : vector<8x128xf32>
    %278 = arith.subf %275, %277 : vector<8x128xf32>
    %cst_113 = arith.constant 1.000000e+00 : f32
    %279 = vector.broadcast %cst_113 : f32 to vector<8x128xf32>
    %280 = arith.cmpf ogt, %278, %279 : vector<8x128xf32>
    %281 = arith.extui %280 : vector<8x128xi1> to vector<8x128xi32>
    %282 = arith.sitofp %281 : vector<8x128xi32> to vector<8x128xf32>
    %cst_114 = arith.constant dense<0.000000e+00> : vector<8x128xf32>
    %283 = tpu.matmul %282, %4, %cst_114 {dimension_numbers = #tpu.dot_dimension_numbers<[1], [0], [0], [1], [0, 0, 1, 1], [], []>} : vector<8x128xf32>, vector<128x128xf32>, vector<8x128xf32> -> vector<8x128xf32>
    %284 = arith.addf %283, %11 : vector<8x128xf32>
    %cst_115 = arith.constant 0.000000e+00 : f32
    %285 = vector.broadcast %cst_115 : f32 to vector<8x128xf32>
    %286 = arith.maximumf %284, %285 : vector<8x128xf32>
    %cst_116 = arith.constant 1.000000e+00 : f32
    %287 = vector.broadcast %cst_116 : f32 to vector<8x128xf32>
    %288 = arith.cmpf ogt, %235, %287 : vector<8x128xf32>
    %289 = arith.extui %288 : vector<8x128xi1> to vector<8x128xi32>
    %290 = arith.sitofp %289 : vector<8x128xi32> to vector<8x128xf32>
    %cst_117 = arith.constant 0.949999988 : f32
    %291 = vector.broadcast %cst_117 : f32 to vector<8x128xf32>
    %292 = arith.mulf %291, %235 : vector<8x128xf32>
    %293 = arith.addf %292, %286 : vector<8x128xf32>
    %cst_118 = arith.constant 1.000000e+00 : f32
    %294 = vector.broadcast %cst_118 : f32 to vector<8x128xf32>
    %295 = arith.mulf %290, %294 : vector<8x128xf32>
    %296 = arith.subf %293, %295 : vector<8x128xf32>
    %cst_119 = arith.constant 1.000000e+00 : f32
    %297 = vector.broadcast %cst_119 : f32 to vector<8x128xf32>
    %298 = arith.cmpf ogt, %296, %297 : vector<8x128xf32>
    %299 = arith.extui %298 : vector<8x128xi1> to vector<8x128xi32>
    %300 = arith.sitofp %299 : vector<8x128xi32> to vector<8x128xf32>
    %cst_120 = arith.constant dense<0.000000e+00> : vector<8x256xf32>
    %301 = tpu.matmul %300, %5, %cst_120 {dimension_numbers = #tpu.dot_dimension_numbers<[1], [0], [0], [1], [0, 0, 1, 1], [], []>} : vector<8x128xf32>, vector<128x256xf32>, vector<8x256xf32> -> vector<8x256xf32>
    %302 = arith.addf %301, %14 : vector<8x256xf32>
    %cst_121 = arith.constant 0.000000e+00 : f32
    %303 = vector.broadcast %cst_121 : f32 to vector<8x256xf32>
    %304 = arith.maximumf %302, %303 : vector<8x256xf32>
    %cst_122 = arith.constant 1.000000e+00 : f32
    %305 = vector.broadcast %cst_122 : f32 to vector<8x256xf32>
    %306 = arith.cmpf ogt, %253, %305 : vector<8x256xf32>
    %307 = arith.extui %306 : vector<8x256xi1> to vector<8x256xi32>
    %308 = arith.sitofp %307 : vector<8x256xi32> to vector<8x256xf32>
    %cst_123 = arith.constant 0.949999988 : f32
    %309 = vector.broadcast %cst_123 : f32 to vector<8x256xf32>
    %310 = arith.mulf %309, %253 : vector<8x256xf32>
    %311 = arith.addf %310, %304 : vector<8x256xf32>
    %cst_124 = arith.constant 1.000000e+00 : f32
    %312 = vector.broadcast %cst_124 : f32 to vector<8x256xf32>
    %313 = arith.mulf %308, %312 : vector<8x256xf32>
    %314 = arith.subf %311, %313 : vector<8x256xf32>
    %cst_125 = arith.constant 1.000000e+00 : f32
    %315 = vector.broadcast %cst_125 : f32 to vector<8x256xf32>
    %316 = arith.cmpf ogt, %314, %315 : vector<8x256xf32>
    %317 = arith.extui %316 : vector<8x256xi1> to vector<8x256xi32>
    %318 = arith.sitofp %317 : vector<8x256xi32> to vector<8x256xf32>
    %319 = arith.index_cast %c4_i32 : i32 to index
    %c0_126 = arith.constant 0 : index
    %c0_127 = arith.constant 0 : index
    %320 = vector.load %arg9[%319, %c0_126, %c0_127] : memref<8x8x256xf32, #tpu.memory_space<vmem>>, vector<1x8x256xf32>
    %321 = vector.shape_cast %320 : vector<1x8x256xf32> to vector<8x256xf32>
    %322 = vector.shape_cast %318 : vector<8x256xf32> to vector<1x8x256xf32>
    tpu.vector_store %arg9[%319, %c0_126, %c0_127], %322 {strides = array<i32>} : memref<8x8x256xf32, #tpu.memory_space<vmem>>, vector<1x8x256xf32>,
    %c5_i32 = arith.constant 5 : i32
    %323 = arith.index_cast %c5_i32 : i32 to index
    %c0_128 = arith.constant 0 : index
    %c0_129 = arith.constant 0 : index
    %324 = vector.load %arg2[%323, %c0_128, %c0_129] : memref<8x8x128xf32, #tpu.memory_space<vmem>>, vector<1x8x128xf32>
    %325 = vector.shape_cast %324 : vector<1x8x128xf32> to vector<8x128xf32>
    %cst_130 = arith.constant dense<0.000000e+00> : vector<8x128xf32>
    %326 = tpu.matmul %325, %3, %cst_130 {dimension_numbers = #tpu.dot_dimension_numbers<[1], [0], [0], [1], [0, 0, 1, 1], [], []>} : vector<8x128xf32>, vector<128x128xf32>, vector<8x128xf32> -> vector<8x128xf32>
    %327 = arith.addf %326, %8 : vector<8x128xf32>
    %cst_131 = arith.constant 0.000000e+00 : f32
    %328 = vector.broadcast %cst_131 : f32 to vector<8x128xf32>
    %329 = arith.maximumf %327, %328 : vector<8x128xf32>
    %cst_132 = arith.constant 1.000000e+00 : f32
    %330 = vector.broadcast %cst_132 : f32 to vector<8x128xf32>
    %331 = arith.cmpf ogt, %278, %330 : vector<8x128xf32>
    %332 = arith.extui %331 : vector<8x128xi1> to vector<8x128xi32>
    %333 = arith.sitofp %332 : vector<8x128xi32> to vector<8x128xf32>
    %cst_133 = arith.constant 0.949999988 : f32
    %334 = vector.broadcast %cst_133 : f32 to vector<8x128xf32>
    %335 = arith.mulf %334, %278 : vector<8x128xf32>
    %336 = arith.addf %335, %329 : vector<8x128xf32>
    %cst_134 = arith.constant 1.000000e+00 : f32
    %337 = vector.broadcast %cst_134 : f32 to vector<8x128xf32>
    %338 = arith.mulf %333, %337 : vector<8x128xf32>
    %339 = arith.subf %336, %338 : vector<8x128xf32>
    %cst_135 = arith.constant 1.000000e+00 : f32
    %340 = vector.broadcast %cst_135 : f32 to vector<8x128xf32>
    %341 = arith.cmpf ogt, %339, %340 : vector<8x128xf32>
    %342 = arith.extui %341 : vector<8x128xi1> to vector<8x128xi32>
    %343 = arith.sitofp %342 : vector<8x128xi32> to vector<8x128xf32>
    %cst_136 = arith.constant dense<0.000000e+00> : vector<8x128xf32>
    %344 = tpu.matmul %343, %4, %cst_136 {dimension_numbers = #tpu.dot_dimension_numbers<[1], [0], [0], [1], [0, 0, 1, 1], [], []>} : vector<8x128xf32>, vector<128x128xf32>, vector<8x128xf32> -> vector<8x128xf32>
    %345 = arith.addf %344, %11 : vector<8x128xf32>
    %cst_137 = arith.constant 0.000000e+00 : f32
    %346 = vector.broadcast %cst_137 : f32 to vector<8x128xf32>
    %347 = arith.maximumf %345, %346 : vector<8x128xf32>
    %cst_138 = arith.constant 1.000000e+00 : f32
    %348 = vector.broadcast %cst_138 : f32 to vector<8x128xf32>
    %349 = arith.cmpf ogt, %296, %348 : vector<8x128xf32>
    %350 = arith.extui %349 : vector<8x128xi1> to vector<8x128xi32>
    %351 = arith.sitofp %350 : vector<8x128xi32> to vector<8x128xf32>
    %cst_139 = arith.constant 0.949999988 : f32
    %352 = vector.broadcast %cst_139 : f32 to vector<8x128xf32>
    %353 = arith.mulf %352, %296 : vector<8x128xf32>
    %354 = arith.addf %353, %347 : vector<8x128xf32>
    %cst_140 = arith.constant 1.000000e+00 : f32
    %355 = vector.broadcast %cst_140 : f32 to vector<8x128xf32>
    %356 = arith.mulf %351, %355 : vector<8x128xf32>
    %357 = arith.subf %354, %356 : vector<8x128xf32>
    %cst_141 = arith.constant 1.000000e+00 : f32
    %358 = vector.broadcast %cst_141 : f32 to vector<8x128xf32>
    %359 = arith.cmpf ogt, %357, %358 : vector<8x128xf32>
    %360 = arith.extui %359 : vector<8x128xi1> to vector<8x128xi32>
    %361 = arith.sitofp %360 : vector<8x128xi32> to vector<8x128xf32>
    %cst_142 = arith.constant dense<0.000000e+00> : vector<8x256xf32>
    %362 = tpu.matmul %361, %5, %cst_142 {dimension_numbers = #tpu.dot_dimension_numbers<[1], [0], [0], [1], [0, 0, 1, 1], [], []>} : vector<8x128xf32>, vector<128x256xf32>, vector<8x256xf32> -> vector<8x256xf32>
    %363 = arith.addf %362, %14 : vector<8x256xf32>
    %cst_143 = arith.constant 0.000000e+00 : f32
    %364 = vector.broadcast %cst_143 : f32 to vector<8x256xf32>
    %365 = arith.maximumf %363, %364 : vector<8x256xf32>
    %cst_144 = arith.constant 1.000000e+00 : f32
    %366 = vector.broadcast %cst_144 : f32 to vector<8x256xf32>
    %367 = arith.cmpf ogt, %314, %366 : vector<8x256xf32>
    %368 = arith.extui %367 : vector<8x256xi1> to vector<8x256xi32>
    %369 = arith.sitofp %368 : vector<8x256xi32> to vector<8x256xf32>
    %cst_145 = arith.constant 0.949999988 : f32
    %370 = vector.broadcast %cst_145 : f32 to vector<8x256xf32>
    %371 = arith.mulf %370, %314 : vector<8x256xf32>
    %372 = arith.addf %371, %365 : vector<8x256xf32>
    %cst_146 = arith.constant 1.000000e+00 : f32
    %373 = vector.broadcast %cst_146 : f32 to vector<8x256xf32>
    %374 = arith.mulf %369, %373 : vector<8x256xf32>
    %375 = arith.subf %372, %374 : vector<8x256xf32>
    %cst_147 = arith.constant 1.000000e+00 : f32
    %376 = vector.broadcast %cst_147 : f32 to vector<8x256xf32>
    %377 = arith.cmpf ogt, %375, %376 : vector<8x256xf32>
    %378 = arith.extui %377 : vector<8x256xi1> to vector<8x256xi32>
    %379 = arith.sitofp %378 : vector<8x256xi32> to vector<8x256xf32>
    %380 = arith.index_cast %c5_i32 : i32 to index
    %c0_148 = arith.constant 0 : index
    %c0_149 = arith.constant 0 : index
    %381 = vector.load %arg9[%380, %c0_148, %c0_149] : memref<8x8x256xf32, #tpu.memory_space<vmem>>, vector<1x8x256xf32>
    %382 = vector.shape_cast %381 : vector<1x8x256xf32> to vector<8x256xf32>
    %383 = vector.shape_cast %379 : vector<8x256xf32> to vector<1x8x256xf32>
    tpu.vector_store %arg9[%380, %c0_148, %c0_149], %383 {strides = array<i32>} : memref<8x8x256xf32, #tpu.memory_space<vmem>>, vector<1x8x256xf32>,
    %c6_i32 = arith.constant 6 : i32
    %384 = arith.index_cast %c6_i32 : i32 to index
    %c0_150 = arith.constant 0 : index
    %c0_151 = arith.constant 0 : index
    %385 = vector.load %arg2[%384, %c0_150, %c0_151] : memref<8x8x128xf32, #tpu.memory_space<vmem>>, vector<1x8x128xf32>
    %386 = vector.shape_cast %385 : vector<1x8x128xf32> to vector<8x128xf32>
    %cst_152 = arith.constant dense<0.000000e+00> : vector<8x128xf32>
    %387 = tpu.matmul %386, %3, %cst_152 {dimension_numbers = #tpu.dot_dimension_numbers<[1], [0], [0], [1], [0, 0, 1, 1], [], []>} : vector<8x128xf32>, vector<128x128xf32>, vector<8x128xf32> -> vector<8x128xf32>
    %388 = arith.addf %387, %8 : vector<8x128xf32>
    %cst_153 = arith.constant 0.000000e+00 : f32
    %389 = vector.broadcast %cst_153 : f32 to vector<8x128xf32>
    %390 = arith.maximumf %388, %389 : vector<8x128xf32>
    %cst_154 = arith.constant 1.000000e+00 : f32
    %391 = vector.broadcast %cst_154 : f32 to vector<8x128xf32>
    %392 = arith.cmpf ogt, %339, %391 : vector<8x128xf32>
    %393 = arith.extui %392 : vector<8x128xi1> to vector<8x128xi32>
    %394 = arith.sitofp %393 : vector<8x128xi32> to vector<8x128xf32>
    %cst_155 = arith.constant 0.949999988 : f32
    %395 = vector.broadcast %cst_155 : f32 to vector<8x128xf32>
    %396 = arith.mulf %395, %339 : vector<8x128xf32>
    %397 = arith.addf %396, %390 : vector<8x128xf32>
    %cst_156 = arith.constant 1.000000e+00 : f32
    %398 = vector.broadcast %cst_156 : f32 to vector<8x128xf32>
    %399 = arith.mulf %394, %398 : vector<8x128xf32>
    %400 = arith.subf %397, %399 : vector<8x128xf32>
    %cst_157 = arith.constant 1.000000e+00 : f32
    %401 = vector.broadcast %cst_157 : f32 to vector<8x128xf32>
    %402 = arith.cmpf ogt, %400, %401 : vector<8x128xf32>
    %403 = arith.extui %402 : vector<8x128xi1> to vector<8x128xi32>
    %404 = arith.sitofp %403 : vector<8x128xi32> to vector<8x128xf32>
    %cst_158 = arith.constant dense<0.000000e+00> : vector<8x128xf32>
    %405 = tpu.matmul %404, %4, %cst_158 {dimension_numbers = #tpu.dot_dimension_numbers<[1], [0], [0], [1], [0, 0, 1, 1], [], []>} : vector<8x128xf32>, vector<128x128xf32>, vector<8x128xf32> -> vector<8x128xf32>
    %406 = arith.addf %405, %11 : vector<8x128xf32>
    %cst_159 = arith.constant 0.000000e+00 : f32
    %407 = vector.broadcast %cst_159 : f32 to vector<8x128xf32>
    %408 = arith.maximumf %406, %407 : vector<8x128xf32>
    %cst_160 = arith.constant 1.000000e+00 : f32
    %409 = vector.broadcast %cst_160 : f32 to vector<8x128xf32>
    %410 = arith.cmpf ogt, %357, %409 : vector<8x128xf32>
    %411 = arith.extui %410 : vector<8x128xi1> to vector<8x128xi32>
    %412 = arith.sitofp %411 : vector<8x128xi32> to vector<8x128xf32>
    %cst_161 = arith.constant 0.949999988 : f32
    %413 = vector.broadcast %cst_161 : f32 to vector<8x128xf32>
    %414 = arith.mulf %413, %357 : vector<8x128xf32>
    %415 = arith.addf %414, %408 : vector<8x128xf32>
    %cst_162 = arith.constant 1.000000e+00 : f32
    %416 = vector.broadcast %cst_162 : f32 to vector<8x128xf32>
    %417 = arith.mulf %412, %416 : vector<8x128xf32>
    %418 = arith.subf %415, %417 : vector<8x128xf32>
    %cst_163 = arith.constant 1.000000e+00 : f32
    %419 = vector.broadcast %cst_163 : f32 to vector<8x128xf32>
    %420 = arith.cmpf ogt, %418, %419 : vector<8x128xf32>
    %421 = arith.extui %420 : vector<8x128xi1> to vector<8x128xi32>
    %422 = arith.sitofp %421 : vector<8x128xi32> to vector<8x128xf32>
    %cst_164 = arith.constant dense<0.000000e+00> : vector<8x256xf32>
    %423 = tpu.matmul %422, %5, %cst_164 {dimension_numbers = #tpu.dot_dimension_numbers<[1], [0], [0], [1], [0, 0, 1, 1], [], []>} : vector<8x128xf32>, vector<128x256xf32>, vector<8x256xf32> -> vector<8x256xf32>
    %424 = arith.addf %423, %14 : vector<8x256xf32>
    %cst_165 = arith.constant 0.000000e+00 : f32
    %425 = vector.broadcast %cst_165 : f32 to vector<8x256xf32>
    %426 = arith.maximumf %424, %425 : vector<8x256xf32>
    %cst_166 = arith.constant 1.000000e+00 : f32
    %427 = vector.broadcast %cst_166 : f32 to vector<8x256xf32>
    %428 = arith.cmpf ogt, %375, %427 : vector<8x256xf32>
    %429 = arith.extui %428 : vector<8x256xi1> to vector<8x256xi32>
    %430 = arith.sitofp %429 : vector<8x256xi32> to vector<8x256xf32>
    %cst_167 = arith.constant 0.949999988 : f32
    %431 = vector.broadcast %cst_167 : f32 to vector<8x256xf32>
    %432 = arith.mulf %431, %375 : vector<8x256xf32>
    %433 = arith.addf %432, %426 : vector<8x256xf32>
    %cst_168 = arith.constant 1.000000e+00 : f32
    %434 = vector.broadcast %cst_168 : f32 to vector<8x256xf32>
    %435 = arith.mulf %430, %434 : vector<8x256xf32>
    %436 = arith.subf %433, %435 : vector<8x256xf32>
    %cst_169 = arith.constant 1.000000e+00 : f32
    %437 = vector.broadcast %cst_169 : f32 to vector<8x256xf32>
    %438 = arith.cmpf ogt, %436, %437 : vector<8x256xf32>
    %439 = arith.extui %438 : vector<8x256xi1> to vector<8x256xi32>
    %440 = arith.sitofp %439 : vector<8x256xi32> to vector<8x256xf32>
    %441 = arith.index_cast %c6_i32 : i32 to index
    %c0_170 = arith.constant 0 : index
    %c0_171 = arith.constant 0 : index
    %442 = vector.load %arg9[%441, %c0_170, %c0_171] : memref<8x8x256xf32, #tpu.memory_space<vmem>>, vector<1x8x256xf32>
    %443 = vector.shape_cast %442 : vector<1x8x256xf32> to vector<8x256xf32>
    %444 = vector.shape_cast %440 : vector<8x256xf32> to vector<1x8x256xf32>
    tpu.vector_store %arg9[%441, %c0_170, %c0_171], %444 {strides = array<i32>} : memref<8x8x256xf32, #tpu.memory_space<vmem>>, vector<1x8x256xf32>,
    %c7_i32 = arith.constant 7 : i32
    %445 = arith.index_cast %c7_i32 : i32 to index
    %c0_172 = arith.constant 0 : index
    %c0_173 = arith.constant 0 : index
    %446 = vector.load %arg2[%445, %c0_172, %c0_173] : memref<8x8x128xf32, #tpu.memory_space<vmem>>, vector<1x8x128xf32>
    %447 = vector.shape_cast %446 : vector<1x8x128xf32> to vector<8x128xf32>
    %cst_174 = arith.constant dense<0.000000e+00> : vector<8x128xf32>
    %448 = tpu.matmul %447, %3, %cst_174 {dimension_numbers = #tpu.dot_dimension_numbers<[1], [0], [0], [1], [0, 0, 1, 1], [], []>} : vector<8x128xf32>, vector<128x128xf32>, vector<8x128xf32> -> vector<8x128xf32>
    %449 = arith.addf %448, %8 : vector<8x128xf32>
    %cst_175 = arith.constant 0.000000e+00 : f32
    %450 = vector.broadcast %cst_175 : f32 to vector<8x128xf32>
    %451 = arith.maximumf %449, %450 : vector<8x128xf32>
    %cst_176 = arith.constant 1.000000e+00 : f32
    %452 = vector.broadcast %cst_176 : f32 to vector<8x128xf32>
    %453 = arith.cmpf ogt, %400, %452 : vector<8x128xf32>
    %454 = arith.extui %453 : vector<8x128xi1> to vector<8x128xi32>
    %455 = arith.sitofp %454 : vector<8x128xi32> to vector<8x128xf32>
    %cst_177 = arith.constant 0.949999988 : f32
    %456 = vector.broadcast %cst_177 : f32 to vector<8x128xf32>
    %457 = arith.mulf %456, %400 : vector<8x128xf32>
    %458 = arith.addf %457, %451 : vector<8x128xf32>
    %cst_178 = arith.constant 1.000000e+00 : f32
    %459 = vector.broadcast %cst_178 : f32 to vector<8x128xf32>
    %460 = arith.mulf %455, %459 : vector<8x128xf32>
    %461 = arith.subf %458, %460 : vector<8x128xf32>
    %cst_179 = arith.constant 1.000000e+00 : f32
    %462 = vector.broadcast %cst_179 : f32 to vector<8x128xf32>
    %463 = arith.cmpf ogt, %461, %462 : vector<8x128xf32>
    %464 = arith.extui %463 : vector<8x128xi1> to vector<8x128xi32>
    %465 = arith.sitofp %464 : vector<8x128xi32> to vector<8x128xf32>
    %cst_180 = arith.constant dense<0.000000e+00> : vector<8x128xf32>
    %466 = tpu.matmul %465, %4, %cst_180 {dimension_numbers = #tpu.dot_dimension_numbers<[1], [0], [0], [1], [0, 0, 1, 1], [], []>} : vector<8x128xf32>, vector<128x128xf32>, vector<8x128xf32> -> vector<8x128xf32>
    %467 = arith.addf %466, %11 : vector<8x128xf32>
    %cst_181 = arith.constant 0.000000e+00 : f32
    %468 = vector.broadcast %cst_181 : f32 to vector<8x128xf32>
    %469 = arith.maximumf %467, %468 : vector<8x128xf32>
    %cst_182 = arith.constant 1.000000e+00 : f32
    %470 = vector.broadcast %cst_182 : f32 to vector<8x128xf32>
    %471 = arith.cmpf ogt, %418, %470 : vector<8x128xf32>
    %472 = arith.extui %471 : vector<8x128xi1> to vector<8x128xi32>
    %473 = arith.sitofp %472 : vector<8x128xi32> to vector<8x128xf32>
    %cst_183 = arith.constant 0.949999988 : f32
    %474 = vector.broadcast %cst_183 : f32 to vector<8x128xf32>
    %475 = arith.mulf %474, %418 : vector<8x128xf32>
    %476 = arith.addf %475, %469 : vector<8x128xf32>
    %cst_184 = arith.constant 1.000000e+00 : f32
    %477 = vector.broadcast %cst_184 : f32 to vector<8x128xf32>
    %478 = arith.mulf %473, %477 : vector<8x128xf32>
    %479 = arith.subf %476, %478 : vector<8x128xf32>
    %cst_185 = arith.constant 1.000000e+00 : f32
    %480 = vector.broadcast %cst_185 : f32 to vector<8x128xf32>
    %481 = arith.cmpf ogt, %479, %480 : vector<8x128xf32>
    %482 = arith.extui %481 : vector<8x128xi1> to vector<8x128xi32>
    %483 = arith.sitofp %482 : vector<8x128xi32> to vector<8x128xf32>
    %cst_186 = arith.constant dense<0.000000e+00> : vector<8x256xf32>
    %484 = tpu.matmul %483, %5, %cst_186 {dimension_numbers = #tpu.dot_dimension_numbers<[1], [0], [0], [1], [0, 0, 1, 1], [], []>} : vector<8x128xf32>, vector<128x256xf32>, vector<8x256xf32> -> vector<8x256xf32>
    %485 = arith.addf %484, %14 : vector<8x256xf32>
    %cst_187 = arith.constant 0.000000e+00 : f32
    %486 = vector.broadcast %cst_187 : f32 to vector<8x256xf32>
    %487 = arith.maximumf %485, %486 : vector<8x256xf32>
    %cst_188 = arith.constant 1.000000e+00 : f32
    %488 = vector.broadcast %cst_188 : f32 to vector<8x256xf32>
    %489 = arith.cmpf ogt, %436, %488 : vector<8x256xf32>
    %490 = arith.extui %489 : vector<8x256xi1> to vector<8x256xi32>
    %491 = arith.sitofp %490 : vector<8x256xi32> to vector<8x256xf32>
    %cst_189 = arith.constant 0.949999988 : f32
    %492 = vector.broadcast %cst_189 : f32 to vector<8x256xf32>
    %493 = arith.mulf %492, %436 : vector<8x256xf32>
    %494 = arith.addf %493, %487 : vector<8x256xf32>
    %cst_190 = arith.constant 1.000000e+00 : f32
    %495 = vector.broadcast %cst_190 : f32 to vector<8x256xf32>
    %496 = arith.mulf %491, %495 : vector<8x256xf32>
    %497 = arith.subf %494, %496 : vector<8x256xf32>
    %cst_191 = arith.constant 1.000000e+00 : f32
    %498 = vector.broadcast %cst_191 : f32 to vector<8x256xf32>
    %499 = arith.cmpf ogt, %497, %498 : vector<8x256xf32>
    %500 = arith.extui %499 : vector<8x256xi1> to vector<8x256xi32>
    %501 = arith.sitofp %500 : vector<8x256xi32> to vector<8x256xf32>
    %502 = arith.index_cast %c7_i32 : i32 to index
    %c0_192 = arith.constant 0 : index
    %c0_193 = arith.constant 0 : index
    %503 = vector.load %arg9[%502, %c0_192, %c0_193] : memref<8x8x256xf32, #tpu.memory_space<vmem>>, vector<1x8x256xf32>
    %504 = vector.shape_cast %503 : vector<1x8x256xf32> to vector<8x256xf32>
    %505 = vector.shape_cast %501 : vector<8x256xf32> to vector<1x8x256xf32>
    tpu.vector_store %arg9[%502, %c0_192, %c0_193], %505 {strides = array<i32>} : memref<8x8x256xf32, #tpu.memory_space<vmem>>, vector<1x8x256xf32>,
    %c8_i32 = arith.constant 8 : i32
    %c0_194 = arith.constant 0 : index
    %c0_195 = arith.constant 0 : index
    %506 = vector.load %arg10[%c0_194, %c0_195] : memref<8x128xf32, #tpu.memory_space<vmem>>, vector<8x128xf32>
    tpu.vector_store %arg10[%c0_194, %c0_195], %461 {strides = array<i32>} : memref<8x128xf32, #tpu.memory_space<vmem>>, vector<8x128xf32>,
    %c0_196 = arith.constant 0 : index
    %c0_197 = arith.constant 0 : index
    %507 = vector.load %arg11[%c0_196, %c0_197] : memref<8x128xf32, #tpu.memory_space<vmem>>, vector<8x128xf32>
    tpu.vector_store %arg11[%c0_196, %c0_197], %479 {strides = array<i32>} : memref<8x128xf32, #tpu.memory_space<vmem>>, vector<8x128xf32>,
    %c0_198 = arith.constant 0 : index
    %c0_199 = arith.constant 0 : index
    %508 = vector.load %arg12[%c0_198, %c0_199] : memref<8x256xf32, #tpu.memory_space<vmem>>, vector<8x256xf32>
    tpu.vector_store %arg12[%c0_198, %c0_199], %497 {strides = array<i32>} : memref<8x256xf32, #tpu.memory_space<vmem>>, vector<8x256xf32>,
    return
  }
  func.func @transform_0(%arg0: i32, %arg1: i32) -> (i32, i32, i32) {
    %c0_i32 = arith.constant 0 : i32
    %c0_i32_0 = arith.constant 0 : i32
    return %arg1, %arg0, %c0_i32 : i32, i32, i32
  }
  func.func @transform_1(%arg0: i32, %arg1: i32) -> (i32, i32) {
    %c0_i32 = arith.constant 0 : i32
    %c0_i32_0 = arith.constant 0 : i32
    %c0_i32_1 = arith.constant 0 : i32
    return %c0_i32, %c0_i32_0 : i32, i32
  }
  func.func @transform_2(%arg0: i32, %arg1: i32) -> (i32, i32) {
    %c0_i32 = arith.constant 0 : i32
    %c0_i32_0 = arith.constant 0 : i32
    %c0_i32_1 = arith.constant 0 : i32
    return %c0_i32, %c0_i32_0 : i32, i32
  }
  func.func @transform_3(%arg0: i32, %arg1: i32) -> (i32, i32) {
    %c0_i32 = arith.constant 0 : i32
    %c0_i32_0 = arith.constant 0 : i32
    %c0_i32_1 = arith.constant 0 : i32
    return %c0_i32, %c0_i32_0 : i32, i32
  }
  func.func @transform_4(%arg0: i32, %arg1: i32) -> (i32, i32) {
    %c0_i32 = arith.constant 0 : i32
    %c0_i32_0 = arith.constant 0 : i32
    %c0_i32_1 = arith.constant 0 : i32
    return %c0_i32, %c0_i32_0 : i32, i32
  }
  func.func @transform_5(%arg0: i32, %arg1: i32) -> (i32, i32) {
    %c0_i32 = arith.constant 0 : i32
    %c0_i32_0 = arith.constant 0 : i32
    %c0_i32_1 = arith.constant 0 : i32
    return %c0_i32, %c0_i32_0 : i32, i32
  }
  func.func @transform_6(%arg0: i32, %arg1: i32) -> (i32, i32) {
    %c0_i32 = arith.constant 0 : i32
    %c0_i32_0 = arith.constant 0 : i32
    %c0_i32_1 = arith.constant 0 : i32
    return %c0_i32, %c0_i32_0 : i32, i32
  }
  func.func @transform_7(%arg0: i32, %arg1: i32) -> (i32, i32, i32) {
    %c0_i32 = arith.constant 0 : i32
    %c0_i32_0 = arith.constant 0 : i32
    return %arg1, %arg0, %c0_i32 : i32, i32, i32
  }
}

</mosaic_0001>

<llo_original>
// kernel: generator_forward.1
$region0: #{generator_forward.1}
  #allocation0 [shape = 'u32[]', space=smem, size = 0x4, offset = 0x4, fixed_abs, tag = 'smem constant byte address 0x4 - core index']
  #allocation1 [shape = 'u32[144,128]{1,0:T(1,128)}', space=vmem, size = 0x12000, scoped, tag = 'internal scratch']
  #allocation2 [shape = 'f32[8,128]{1,0:T(8,128)}', space=vmem, size = 0x1000, scoped, tag = 'scratch operand']
  #allocation3 [shape = 'f32[8,128]{1,0:T(8,128)}', space=vmem, size = 0x1000, scoped, tag = 'scratch operand']
  #allocation4 [shape = 'f32[8,256]{1,0:T(8,128)}', space=vmem, size = 0x2000, scoped, tag = 'scratch operand']
  %s0 = inlined_call_operand.vmem [shape: f32[8,8,128], index: 0, kind: input, shape index: {}]
  %s1 = inlined_call_operand.vmem [shape: f32[128,128], index: 1, kind: input, shape index: {}]
  %s2 = inlined_call_operand.vmem [shape: f32[1,128], index: 2, kind: input, shape index: {}]
  %s3 = inlined_call_operand.vmem [shape: f32[128,128], index: 3, kind: input, shape index: {}]
  %s4 = inlined_call_operand.vmem [shape: f32[1,128], index: 4, kind: input, shape index: {}]
  %s5 = inlined_call_operand.vmem [shape: f32[128,256], index: 5, kind: input, shape index: {}]
  %s6 = inlined_call_operand.vmem [shape: f32[1,256], index: 6, kind: input, shape index: {}]
  %s7 = inlined_call_operand.vmem [shape: f32[8,8,256], index: 7, kind: output, shape index: {}]
  %s8 = sld [smem:[#allocation0]]
  $region42: #{generator_forward.1} parent=0
    _
  %s10 = ssub.s32 1, %s8
  %s11 = scalar_select 0, %s10, %s8
  // Predicated region
  $region2: #{generator_forward.1} parent=0 // pred_check
    _
  $region3: #{generator_forward.1} parent=0 // pred_check_branch
    %13 = sbr.rel (0) target = $region5
  $region4: #{generator_forward.1} parent=0 // pred_region
    _
  $region5: #{generator_forward.1} parent=0 // pred_fallthru
    _
  // Predicated region
  $region6: #{generator_forward.1} parent=0 // pred_check
    _
  $region7: #{generator_forward.1} parent=0 // pred_check_branch
    %15 = sbr.rel (0) target = $region9
  $region8: #{generator_forward.1} parent=0 // pred_region
    _
  $region9: #{generator_forward.1} parent=0 // pred_fallthru
    _
  // Predicated region
  $region10: #{generator_forward.1} parent=0 // pred_check
    _
  $region11: #{generator_forward.1} parent=0 // pred_check_branch
    %17 = sbr.rel (0) target = $region13
  $region12: #{generator_forward.1} parent=0 // pred_region
    _
  $region13: #{generator_forward.1} parent=0 // pred_fallthru
    _
  // Predicated region
  $region14: #{generator_forward.1} parent=0 // pred_check
    _
  $region15: #{generator_forward.1} parent=0 // pred_check_branch
    %19 = sbr.rel (0) target = $region17
  $region16: #{generator_forward.1} parent=0 // pred_region
    _
  $region17: #{generator_forward.1} parent=0 // pred_fallthru
    _
  // Predicated region
  $region18: #{generator_forward.1} parent=0 // pred_check
    _
  $region19: #{generator_forward.1} parent=0 // pred_check_branch
    %21 = sbr.rel (0) target = $region21
  $region20: #{generator_forward.1} parent=0 // pred_region
    _
  $region21: #{generator_forward.1} parent=0 // pred_fallthru
    _
  // Predicated region
  $region22: #{generator_forward.1} parent=0 // pred_check
    _
  $region23: #{generator_forward.1} parent=0 // pred_check_branch
    %23 = sbr.rel (0) target = $region25
  $region24: #{generator_forward.1} parent=0 // pred_region
    _
  $region25: #{generator_forward.1} parent=0 // pred_fallthru
    _
  // Predicated region
  $region26: #{generator_forward.1} parent=0 // pred_check
    _
  $region27: #{generator_forward.1} parent=0 // pred_check_branch
    %25 = sbr.rel (0) target = $region29
  $region28: #{generator_forward.1} parent=0 // pred_region
    _
  $region29: #{generator_forward.1} parent=0 // pred_fallthru
    _
  %p26 = scmp.eq.s32.totalorder 0, 0
  // Predicated region
  $region30: #{generator_forward.1} parent=0 // pred_check
    %p27 = pneg %p26
  $region31: #{generator_forward.1} parent=0 // pred_check_branch
    %29 = sbr.rel (%p27) target = $region33
  $region32: #{generator_forward.1} parent=0 // pred_region
    %30 = vst [vmem:[#allocation2] sm:$0xff] 0.0
    %31 = vst [vmem:[#allocation3] sm:$0xff] 0.0
    %32 = vst [vmem:[#allocation4] sm:$0xff] 0.0
    %33 = vst [vmem:[#allocation4 + $0x8] sm:$0xff] 0.0
  $region33: #{generator_forward.1} parent=0 // pred_fallthru
    _
  %v34 = vld [vmem:[%s1] sm:$0xff]
  %v35 = vld [vmem:[%s1 + $0x8] sm:$0xff]
  %v36 = vld [vmem:[%s1 + $0x10] sm:$0xff]
  %v37 = vld [vmem:[%s1 + $0x18] sm:$0xff]
  %v38 = vld [vmem:[%s1 + $0x20] sm:$0xff]
  %v39 = vld [vmem:[%s1 + $0x28] sm:$0xff]
  %v40 = vld [vmem:[%s1 + $0x30] sm:$0xff]
  %v41 = vld [vmem:[%s1 + $0x38] sm:$0xff]
  %v42 = vld [vmem:[%s1 + $0x40] sm:$0xff]
  %v43 = vld [vmem:[%s1 + $0x48] sm:$0xff]
  %v44 = vld [vmem:[%s1 + $0x50] sm:$0xff]
  %v45 = vld [vmem:[%s1 + $0x58] sm:$0xff]
  %v46 = vld [vmem:[%s1 + $0x60] sm:$0xff]
  %v47 = vld [vmem:[%s1 + $0x68] sm:$0xff]
  %v48 = vld [vmem:[%s1 + $0x70] sm:$0xff]
  %v49 = vld [vmem:[%s1 + $0x78] sm:$0xff]
  %v50 = vld [vmem:[%s3] sm:$0xff]
  %v51 = vld [vmem:[%s3 + $0x8] sm:$0xff]
  %v52 = vld [vmem:[%s3 + $0x10] sm:$0xff]
  %v53 = vld [vmem:[%s3 + $0x18] sm:$0xff]
  %v54 = vld [vmem:[%s3 + $0x20] sm:$0xff]
  %v55 = vld [vmem:[%s3 + $0x28] sm:$0xff]
  %v56 = vld [vmem:[%s3 + $0x30] sm:$0xff]
  %v57 = vld [vmem:[%s3 + $0x38] sm:$0xff]
  %v58 = vld [vmem:[%s3 + $0x40] sm:$0xff]
  %v59 = vld [vmem:[%s3 + $0x48] sm:$0xff]
  %v60 = vld [vmem:[%s3 + $0x50] sm:$0xff]
  %v61 = vld [vmem:[%s3 + $0x58] sm:$0xff]
  %v62 = vld [vmem:[%s3 + $0x60] sm:$0xff]
  %v63 = vld [vmem:[%s3 + $0x68] sm:$0xff]
  %v64 = vld [vmem:[%s3 + $0x70] sm:$0xff]
  %v65 = vld [vmem:[%s3 + $0x78] sm:$0xff]
  %v66 = vld [vmem:[%s5] sm:$0xff]
  %v67 = vld [vmem:[%s5 + $0x8] sm:$0xff]
  %v68 = vld [vmem:[%s5 + $0x10] sm:$0xff]
  %v69 = vld [vmem:[%s5 + $0x18] sm:$0xff]
  %v70 = vld [vmem:[%s5 + $0x20] sm:$0xff]
  %v71 = vld [vmem:[%s5 + $0x28] sm:$0xff]
  %v72 = vld [vmem:[%s5 + $0x30] sm:$0xff]
  %v73 = vld [vmem:[%s5 + $0x38] sm:$0xff]
  %v74 = vld [vmem:[%s5 + $0x40] sm:$0xff]
  %v75 = vld [vmem:[%s5 + $0x48] sm:$0xff]
  %v76 = vld [vmem:[%s5 + $0x50] sm:$0xff]
  %v77 = vld [vmem:[%s5 + $0x58] sm:$0xff]
  %v78 = vld [vmem:[%s5 + $0x60] sm:$0xff]
  %v79 = vld [vmem:[%s5 + $0x68] sm:$0xff]
  %v80 = vld [vmem:[%s5 + $0x70] sm:$0xff]
  %v81 = vld [vmem:[%s5 + $0x78] sm:$0xff]
  %v82 = vld [vmem:[%s5 + $0x80] sm:$0xff]
  %v83 = vld [vmem:[%s5 + $0x88] sm:$0xff]
  %v84 = vld [vmem:[%s5 + $0x90] sm:$0xff]
  %v85 = vld [vmem:[%s5 + $0x98] sm:$0xff]
  %v86 = vld [vmem:[%s5 + $0xa0] sm:$0xff]
  %v87 = vld [vmem:[%s5 + $0xa8] sm:$0xff]
  %v88 = vld [vmem:[%s5 + $0xb0] sm:$0xff]
  %v89 = vld [vmem:[%s5 + $0xb8] sm:$0xff]
  %v90 = vld [vmem:[%s5 + $0xc0] sm:$0xff]
  %v91 = vld [vmem:[%s5 + $0xc8] sm:$0xff]
  %v92 = vld [vmem:[%s5 + $0xd0] sm:$0xff]
  %v93 = vld [vmem:[%s5 + $0xd8] sm:$0xff]
  %v94 = vld [vmem:[%s5 + $0xe0] sm:$0xff]
  %v95 = vld [vmem:[%s5 + $0xe8] sm:$0xff]
  %v96 = vld [vmem:[%s5 + $0xf0] sm:$0xff]
  %v97 = vld [vmem:[%s5 + $0xf8] sm:$0xff]
  %v98 = vld [vmem:[%s2] sm:$0x1]
  %v100 = vlaneseq
  %v101 = vshrl.u32 %v100, 7
  %v102 = vsub.s32 0, %v101
  %v103 = vrot.slane %v98, %v102
  %v105 = vld [vmem:[%s4] sm:$0x1]
  %v107 = vlaneseq
  %v108 = vshrl.u32 %v107, 7
  %v109 = vsub.s32 0, %v108
  %v110 = vrot.slane %v105, %v109
  %v112 = vld [vmem:[%s6] sm:$0x3]
  %v114 = vlaneseq
  %v115 = vshrl.u32 %v114, 7
  %v116 = vsub.s32 0, %v115
  %v117 = vrot.slane %v112, %v116
  %v118 = vlaneseq
  %v119 = vshrl.u32 %v118, 7
  %v120 = vsub.s32 1, %v119
  %v121 = vrot.slane %v112, %v120
  %v124 = vld [vmem:[#allocation2] sm:$0xff]
  %v125 = vld [vmem:[#allocation3] sm:$0xff]
  %v126 = vld [vmem:[#allocation4] sm:$0xff]
  %v127 = vld [vmem:[#allocation4 + $0x8] sm:$0xff]
  %v128 = vld [vmem:[%s0] sm:$0xff]
  %129 = vmatprep.subr.mxu0 0.0
  %130 = vmatpush1.msra.mxu0 %v49
  %131 = vmatprep.subr.mxu0 0.0
  %132 = vmatpush1.msra.mxu0 %v48
  %133 = vmatprep.subr.mxu0 0.0
  %134 = vmatpush1.msra.mxu0 %v47
  %135 = vmatprep.subr.mxu0 0.0
  %136 = vmatpush1.msra.mxu0 %v46
  %137 = vmatprep.subr.mxu0 0.0
  %138 = vmatpush1.msra.mxu0 %v45
  %139 = vmatprep.subr.mxu0 0.0
  %140 = vmatpush1.msra.mxu0 %v44
  %141 = vmatprep.subr.mxu0 0.0
  %142 = vmatpush1.msra.mxu0 %v43
  %143 = vmatprep.subr.mxu0 0.0
  %144 = vmatpush1.msra.mxu0 %v42
  %145 = vmatprep.subr.mxu0 0.0
  %146 = vmatpush1.msra.mxu0 %v41
  %147 = vmatprep.subr.mxu0 0.0
  %148 = vmatpush1.msra.mxu0 %v40
  %149 = vmatprep.subr.mxu0 0.0
  %150 = vmatpush1.msra.mxu0 %v39
  %151 = vmatprep.subr.mxu0 0.0
  %152 = vmatpush1.msra.mxu0 %v38
  %153 = vmatprep.subr.mxu0 0.0
  %154 = vmatpush1.msra.mxu0 %v37
  %155 = vmatprep.subr.mxu0 0.0
  %156 = vmatpush1.msra.mxu0 %v36
  %157 = vmatprep.subr.mxu0 0.0
  %158 = vmatpush1.msra.mxu0 %v35
  %159 = vmatprep.subr.mxu0 0.0
  %160 = vmatpush1.msra.mxu0 %v34
  %161 = vmatprep.subr.mxu0 0.0
  %162 = vmatpush2.msra.mxu0 0.0
  %163 = vmatprep.subr.mxu0 0.0
  %164 = vmatpush2.msra.mxu0 0.0
  %165 = vmatprep.subr.mxu0 0.0
  %166 = vmatpush2.msra.mxu0 0.0
  %167 = vmatprep.subr.mxu0 0.0
  %168 = vmatpush2.msra.mxu0 0.0
  %169 = vmatprep.subr.mxu0 0.0
  %170 = vmatpush2.msra.mxu0 0.0
  %171 = vmatprep.subr.mxu0 0.0
  %172 = vmatpush2.msra.mxu0 0.0
  %173 = vmatprep.subr.mxu0 0.0
  %174 = vmatpush2.msra.mxu0 0.0
  %175 = vmatprep.subr.mxu0 0.0
  %176 = vmatpush2.msra.mxu0 0.0
  %177 = vmatprep.subr.mxu0 0.0
  %178 = vmatpush2.msra.mxu0 0.0
  %179 = vmatprep.subr.mxu0 0.0
  %180 = vmatpush2.msra.mxu0 0.0
  %181 = vmatprep.subr.mxu0 0.0
  %182 = vmatpush2.msra.mxu0 0.0
  %183 = vmatprep.subr.mxu0 0.0
  %184 = vmatpush2.msra.mxu0 0.0
  %185 = vmatprep.subr.mxu0 0.0
  %186 = vmatpush2.msra.mxu0 0.0
  %187 = vmatprep.subr.mxu0 0.0
  %188 = vmatpush2.msra.mxu0 0.0
  %189 = vmatprep.subr.mxu0 0.0
  %190 = vmatpush2.msra.mxu0 0.0
  %191 = vmatprep.subr.mxu0 0.0
  %192 = vmatpush2.msra.mxu0 0.0
  %193 = vmatprep.mubr.f32.mxu0 0.0
  %194 = vmatmul.mubr.f32.gmra.mxu0 %v128
  %v195 = vpop.f32.mrf.mxu0
  %v196 = vadd.f32 %v103, %v195
  %v197 = vpop.f32.mrf.mxu0
  %198 = vdwg.mxu0
  %v199 = vmax.f32 %v196, 0.0
  %vm200 = vcmp.gt.f32.partialorder %v124, 1.0
  %v201 = vsel %vm200, 1, 0
  %v202 = vcvt.s32.f32 %v201
  %v203 = vmul.f32 %v124, 0.95
  %v204 = vadd.f32 %v203, %v199
  %v205 = vsub.f32 %v204, %v202
  %vm206 = vcmp.gt.f32.partialorder %v205, 1.0
  %v207 = vsel %vm206, 1, 0
  %v208 = vcvt.s32.f32 %v207
  %209 = vmatprep.subr.mxu0 0.0
  %210 = vmatpush1.msra.mxu0 %v65
  %211 = vmatprep.subr.mxu0 0.0
  %212 = vmatpush1.msra.mxu0 %v64
  %213 = vmatprep.subr.mxu0 0.0
  %214 = vmatpush1.msra.mxu0 %v63
  %215 = vmatprep.subr.mxu0 0.0
  %216 = vmatpush1.msra.mxu0 %v62
  %217 = vmatprep.subr.mxu0 0.0
  %218 = vmatpush1.msra.mxu0 %v61
  %219 = vmatprep.subr.mxu0 0.0
  %220 = vmatpush1.msra.mxu0 %v60
  %221 = vmatprep.subr.mxu0 0.0
  %222 = vmatpush1.msra.mxu0 %v59
  %223 = vmatprep.subr.mxu0 0.0
  %224 = vmatpush1.msra.mxu0 %v58
  %225 = vmatprep.subr.mxu0 0.0
  %226 = vmatpush1.msra.mxu0 %v57
  %227 = vmatprep.subr.mxu0 0.0
  %228 = vmatpush1.msra.mxu0 %v56
  %229 = vmatprep.subr.mxu0 0.0
  %230 = vmatpush1.msra.mxu0 %v55
  %231 = vmatprep.subr.mxu0 0.0
  %232 = vmatpush1.msra.mxu0 %v54
  %233 = vmatprep.subr.mxu0 0.0
  %234 = vmatpush1.msra.mxu0 %v53
  %235 = vmatprep.subr.mxu0 0.0
  %236 = vmatpush1.msra.mxu0 %v52
  %237 = vmatprep.subr.mxu0 0.0
  %238 = vmatpush1.msra.mxu0 %v51
  %239 = vmatprep.subr.mxu0 0.0
  %240 = vmatpush1.msra.mxu0 %v50
  %241 = vmatprep.subr.mxu0 0.0
  %242 = vmatpush2.msra.mxu0 0.0
  %243 = vmatprep.subr.mxu0 0.0
  %244 = vmatpush2.msra.mxu0 0.0
  %245 = vmatprep.subr.mxu0 0.0
  %246 = vmatpush2.msra.mxu0 0.0
  %247 = vmatprep.subr.mxu0 0.0
  %248 = vmatpush2.msra.mxu0 0.0
  %249 = vmatprep.subr.mxu0 0.0
  %250 = vmatpush2.msra.mxu0 0.0
  %251 = vmatprep.subr.mxu0 0.0
  %252 = vmatpush2.msra.mxu0 0.0
  %253 = vmatprep.subr.mxu0 0.0
  %254 = vmatpush2.msra.mxu0 0.0
  %255 = vmatprep.subr.mxu0 0.0
  %256 = vmatpush2.msra.mxu0 0.0
  %257 = vmatprep.subr.mxu0 0.0
  %258 = vmatpush2.msra.mxu0 0.0
  %259 = vmatprep.subr.mxu0 0.0
  %260 = vmatpush2.msra.mxu0 0.0
  %261 = vmatprep.subr.mxu0 0.0
  %262 = vmatpush2.msra.mxu0 0.0
  %263 = vmatprep.subr.mxu0 0.0
  %264 = vmatpush2.msra.mxu0 0.0
  %265 = vmatprep.subr.mxu0 0.0
  %266 = vmatpush2.msra.mxu0 0.0
  %267 = vmatprep.subr.mxu0 0.0
  %268 = vmatpush2.msra.mxu0 0.0
  %269 = vmatprep.subr.mxu0 0.0
  %270 = vmatpush2.msra.mxu0 0.0
  %271 = vmatprep.subr.mxu0 0.0
  %272 = vmatpush2.msra.mxu0 0.0
  %273 = vmatprep.mubr.f32.mxu0 0.0
  %274 = vmatmul.mubr.f32.gmra.mxu0 %v208
  %v275 = vpop.f32.mrf.mxu0
  %v276 = vadd.f32 %v110, %v275
  %v277 = vpop.f32.mrf.mxu0
  %278 = vdwg.mxu0
  %v279 = vmax.f32 %v276, 0.0
  %vm280 = vcmp.gt.f32.partialorder %v125, 1.0
  %v281 = vsel %vm280, 1, 0
  %v282 = vcvt.s32.f32 %v281
  %v283 = vmul.f32 %v125, 0.95
  %v284 = vadd.f32 %v283, %v279
  %v285 = vsub.f32 %v284, %v282
  %vm286 = vcmp.gt.f32.partialorder %v285, 1.0
  %v287 = vsel %vm286, 1, 0
  %v288 = vcvt.s32.f32 %v287
  %289 = vmatprep.subr.mxu0 %v97
  %290 = vmatpush1.msra.mxu0 %v96
  %291 = vmatprep.subr.mxu0 %v95
  %292 = vmatpush1.msra.mxu0 %v94
  %293 = vmatprep.subr.mxu0 %v93
  %294 = vmatpush1.msra.mxu0 %v92
  %295 = vmatprep.subr.mxu0 %v91
  %296 = vmatpush1.msra.mxu0 %v90
  %297 = vmatprep.subr.mxu0 %v89
  %298 = vmatpush1.msra.mxu0 %v88
  %299 = vmatprep.subr.mxu0 %v87
  %300 = vmatpush1.msra.mxu0 %v86
  %301 = vmatprep.subr.mxu0 %v85
  %302 = vmatpush1.msra.mxu0 %v84
  %303 = vmatprep.subr.mxu0 %v83
  %304 = vmatpush1.msra.mxu0 %v82
  %305 = vmatprep.subr.mxu0 %v81
  %306 = vmatpush1.msra.mxu0 %v80
  %307 = vmatprep.subr.mxu0 %v79
  %308 = vmatpush1.msra.mxu0 %v78
  %309 = vmatprep.subr.mxu0 %v77
  %310 = vmatpush1.msra.mxu0 %v76
  %311 = vmatprep.subr.mxu0 %v75
  %312 = vmatpush1.msra.mxu0 %v74
  %313 = vmatprep.subr.mxu0 %v73
  %314 = vmatpush1.msra.mxu0 %v72
  %315 = vmatprep.subr.mxu0 %v71
  %316 = vmatpush1.msra.mxu0 %v70
  %317 = vmatprep.subr.mxu0 %v69
  %318 = vmatpush1.msra.mxu0 %v68
  %319 = vmatprep.subr.mxu0 %v67
  %320 = vmatpush1.msra.mxu0 %v66
  %321 = vmatprep.subr.mxu0 0.0
  %322 = vmatpush2.msra.mxu0 0.0
  %323 = vmatprep.subr.mxu0 0.0
  %324 = vmatpush2.msra.mxu0 0.0
  %325 = vmatprep.subr.mxu0 0.0
  %326 = vmatpush2.msra.mxu0 0.0
  %327 = vmatprep.subr.mxu0 0.0
  %328 = vmatpush2.msra.mxu0 0.0
  %329 = vmatprep.subr.mxu0 0.0
  %330 = vmatpush2.msra.mxu0 0.0
  %331 = vmatprep.subr.mxu0 0.0
  %332 = vmatpush2.msra.mxu0 0.0
  %333 = vmatprep.subr.mxu0 0.0
  %334 = vmatpush2.msra.mxu0 0.0
  %335 = vmatprep.subr.mxu0 0.0
  %336 = vmatpush2.msra.mxu0 0.0
  %337 = vmatprep.subr.mxu0 0.0
  %338 = vmatpush2.msra.mxu0 0.0
  %339 = vmatprep.subr.mxu0 0.0
  %340 = vmatpush2.msra.mxu0 0.0
  %341 = vmatprep.subr.mxu0 0.0
  %342 = vmatpush2.msra.mxu0 0.0
  %343 = vmatprep.subr.mxu0 0.0
  %344 = vmatpush2.msra.mxu0 0.0
  %345 = vmatprep.subr.mxu0 0.0
  %346 = vmatpush2.msra.mxu0 0.0
  %347 = vmatprep.subr.mxu0 0.0
  %348 = vmatpush2.msra.mxu0 0.0
  %349 = vmatprep.subr.mxu0 0.0
  %350 = vmatpush2.msra.mxu0 0.0
  %351 = vmatprep.subr.mxu0 0.0
  %352 = vmatpush2.msra.mxu0 0.0
  %353 = vmatprep.mubr.f32.mxu0 0.0
  %354 = vmatmul.mubr.f32.gmra.mxu0 %v288
  %v355 = vpop.f32.mrf.mxu0
  %v356 = vadd.f32 %v117, %v355
  %v357 = vpop.f32.mrf.mxu0
  %v358 = vadd.f32 %v121, %v357
  %359 = vdwg.mxu0
  %v360 = vmax.f32 %v356, 0.0
  %v361 = vmax.f32 %v358, 0.0
  %vm362 = vcmp.gt.f32.partialorder %v126, 1.0
  %vm363 = vcmp.gt.f32.partialorder %v127, 1.0
  %v364 = vsel %vm362, 1, 0
  %v365 = vsel %vm363, 1, 0
  %v366 = vcvt.s32.f32 %v364
  %v367 = vcvt.s32.f32 %v365
  %v368 = vmul.f32 %v126, 0.95
  %v369 = vmul.f32 %v127, 0.95
  %v370 = vadd.f32 %v368, %v360
  %v371 = vadd.f32 %v369, %v361
  %v372 = vsub.f32 %v370, %v366
  %v373 = vsub.f32 %v371, %v367
  %vm374 = vcmp.gt.f32.partialorder %v372, 1.0
  %vm375 = vcmp.gt.f32.partialorder %v373, 1.0
  %v376 = vsel %vm374, 1, 0
  %v377 = vsel %vm375, 1, 0
  %v378 = vcvt.s32.f32 %v376
  %v379 = vcvt.s32.f32 %v377
  %380 = vst [vmem:[%s7] sm:$0xff] %v378
  %381 = vst [vmem:[%s7 + $0x8] sm:$0xff] %v379
  %s382 = scalar_lea.vmem %s0, 8
  %v383 = vld [vmem:[%s382] sm:$0xff]
  %384 = vmatprep.subr.mxu0 0.0
  %385 = vmatpush1.msra.mxu0 %v49
  %386 = vmatprep.subr.mxu0 0.0
  %387 = vmatpush1.msra.mxu0 %v48
  %388 = vmatprep.subr.mxu0 0.0
  %389 = vmatpush1.msra.mxu0 %v47
  %390 = vmatprep.subr.mxu0 0.0
  %391 = vmatpush1.msra.mxu0 %v46
  %392 = vmatprep.subr.mxu0 0.0
  %393 = vmatpush1.msra.mxu0 %v45
  %394 = vmatprep.subr.mxu0 0.0
  %395 = vmatpush1.msra.mxu0 %v44
  %396 = vmatprep.subr.mxu0 0.0
  %397 = vmatpush1.msra.mxu0 %v43
  %398 = vmatprep.subr.mxu0 0.0
  %399 = vmatpush1.msra.mxu0 %v42
  %400 = vmatprep.subr.mxu0 0.0
  %401 = vmatpush1.msra.mxu0 %v41
  %402 = vmatprep.subr.mxu0 0.0
  %403 = vmatpush1.msra.mxu0 %v40
  %404 = vmatprep.subr.mxu0 0.0
  %405 = vmatpush1.msra.mxu0 %v39
  %406 = vmatprep.subr.mxu0 0.0
  %407 = vmatpush1.msra.mxu0 %v38
  %408 = vmatprep.subr.mxu0 0.0
  %409 = vmatpush1.msra.mxu0 %v37
  %410 = vmatprep.subr.mxu0 0.0
  %411 = vmatpush1.msra.mxu0 %v36
  %412 = vmatprep.subr.mxu0 0.0
  %413 = vmatpush1.msra.mxu0 %v35
  %414 = vmatprep.subr.mxu0 0.0
  %415 = vmatpush1.msra.mxu0 %v34
  %416 = vmatprep.subr.mxu0 0.0
  %417 = vmatpush2.msra.mxu0 0.0
  %418 = vmatprep.subr.mxu0 0.0
  %419 = vmatpush2.msra.mxu0 0.0
  %420 = vmatprep.subr.mxu0 0.0
  %421 = vmatpush2.msra.mxu0 0.0
  %422 = vmatprep.subr.mxu0 0.0
  %423 = vmatpush2.msra.mxu0 0.0
  %424 = vmatprep.subr.mxu0 0.0
  %425 = vmatpush2.msra.mxu0 0.0
  %426 = vmatprep.subr.mxu0 0.0
  %427 = vmatpush2.msra.mxu0 0.0
  %428 = vmatprep.subr.mxu0 0.0
  %429 = vmatpush2.msra.mxu0 0.0
  %430 = vmatprep.subr.mxu0 0.0
  %431 = vmatpush2.msra.mxu0 0.0
  %432 = vmatprep.subr.mxu0 0.0
  %433 = vmatpush2.msra.mxu0 0.0
  %434 = vmatprep.subr.mxu0 0.0
  %435 = vmatpush2.msra.mxu0 0.0
  %436 = vmatprep.subr.mxu0 0.0
  %437 = vmatpush2.msra.mxu0 0.0
  %438 = vmatprep.subr.mxu0 0.0
  %439 = vmatpush2.msra.mxu0 0.0
  %440 = vmatprep.subr.mxu0 0.0
  %441 = vmatpush2.msra.mxu0 0.0
  %442 = vmatprep.subr.mxu0 0.0
  %443 = vmatpush2.msra.mxu0 0.0
  %444 = vmatprep.subr.mxu0 0.0
  %445 = vmatpush2.msra.mxu0 0.0
  %446 = vmatprep.subr.mxu0 0.0
  %447 = vmatpush2.msra.mxu0 0.0
  %448 = vmatprep.mubr.f32.mxu0 0.0
  %449 = vmatmul.mubr.f32.gmra.mxu0 %v383
  %v450 = vpop.f32.mrf.mxu0
  %v451 = vadd.f32 %v103, %v450
  %v452 = vpop.f32.mrf.mxu0
  %453 = vdwg.mxu0
  %v454 = vmax.f32 %v451, 0.0
  %v455 = vmul.f32 %v205, 0.95
  %v456 = vadd.f32 %v455, %v454
  %v457 = vsub.f32 %v456, %v208
  %vm458 = vcmp.gt.f32.partialorder %v457, 1.0
  %v459 = vsel %vm458, 1, 0
  %v460 = vcvt.s32.f32 %v459
  %461 = vmatprep.subr.mxu0 0.0
  %462 = vmatpush1.msra.mxu0 %v65
  %463 = vmatprep.subr.mxu0 0.0
  %464 = vmatpush1.msra.mxu0 %v64
  %465 = vmatprep.subr.mxu0 0.0
  %466 = vmatpush1.msra.mxu0 %v63
  %467 = vmatprep.subr.mxu0 0.0
  %468 = vmatpush1.msra.mxu0 %v62
  %469 = vmatprep.subr.mxu0 0.0
  %470 = vmatpush1.msra.mxu0 %v61
  %471 = vmatprep.subr.mxu0 0.0
  %472 = vmatpush1.msra.mxu0 %v60
  %473 = vmatprep.subr.mxu0 0.0
  %474 = vmatpush1.msra.mxu0 %v59
  %475 = vmatprep.subr.mxu0 0.0
  %476 = vmatpush1.msra.mxu0 %v58
  %477 = vmatprep.subr.mxu0 0.0
  %478 = vmatpush1.msra.mxu0 %v57
  %479 = vmatprep.subr.mxu0 0.0
  %480 = vmatpush1.msra.mxu0 %v56
  %481 = vmatprep.subr.mxu0 0.0
  %482 = vmatpush1.msra.mxu0 %v55
  %483 = vmatprep.subr.mxu0 0.0
  %484 = vmatpush1.msra.mxu0 %v54
  %485 = vmatprep.subr.mxu0 0.0
  %486 = vmatpush1.msra.mxu0 %v53
  %487 = vmatprep.subr.mxu0 0.0
  %488 = vmatpush1.msra.mxu0 %v52
  %489 = vmatprep.subr.mxu0 0.0
  %490 = vmatpush1.msra.mxu0 %v51
  %491 = vmatprep.subr.mxu0 0.0
  %492 = vmatpush1.msra.mxu0 %v50
  %493 = vmatprep.subr.mxu0 0.0
  %494 = vmatpush2.msra.mxu0 0.0
  %495 = vmatprep.subr.mxu0 0.0
  %496 = vmatpush2.msra.mxu0 0.0
  %497 = vmatprep.subr.mxu0 0.0
  %498 = vmatpush2.msra.mxu0 0.0
  %499 = vmatprep.subr.mxu0 0.0
  %500 = vmatpush2.msra.mxu0 0.0
  %501 = vmatprep.subr.mxu0 0.0
  %502 = vmatpush2.msra.mxu0 0.0
  %503 = vmatprep.subr.mxu0 0.0
  %504 = vmatpush2.msra.mxu0 0.0
  %505 = vmatprep.subr.mxu0 0.0
  %506 = vmatpush2.msra.mxu0 0.0
  %507 = vmatprep.subr.mxu0 0.0
  %508 = vmatpush2.msra.mxu0 0.0
  %509 = vmatprep.subr.mxu0 0.0
  %510 = vmatpush2.msra.mxu0 0.0
  %511 = vmatprep.subr.mxu0 0.0
  %512 = vmatpush2.msra.mxu0 0.0
  %513 = vmatprep.subr.mxu0 0.0
  %514 = vmatpush2.msra.mxu0 0.0
  %515 = vmatprep.subr.mxu0 0.0
  %516 = vmatpush2.msra.mxu0 0.0
  %517 = vmatprep.subr.mxu0 0.0
  %518 = vmatpush2.msra.mxu0 0.0
  %519 = vmatprep.subr.mxu0 0.0
  %520 = vmatpush2.msra.mxu0 0.0
  %521 = vmatprep.subr.mxu0 0.0
  %522 = vmatpush2.msra.mxu0 0.0
  %523 = vmatprep.subr.mxu0 0.0
  %524 = vmatpush2.msra.mxu0 0.0
  %525 = vmatprep.mubr.f32.mxu0 0.0
  %526 = vmatmul.mubr.f32.gmra.mxu0 %v460
  %v527 = vpop.f32.mrf.mxu0
  %v528 = vadd.f32 %v110, %v527
  %v529 = vpop.f32.mrf.mxu0
  %530 = vdwg.mxu0
  %v531 = vmax.f32 %v528, 0.0
  %v532 = vmul.f32 %v285, 0.95
  %v533 = vadd.f32 %v532, %v531
  %v534 = vsub.f32 %v533, %v288
  %vm535 = vcmp.gt.f32.partialorder %v534, 1.0
  %v536 = vsel %vm535, 1, 0
  %v537 = vcvt.s32.f32 %v536
  %538 = vmatprep.subr.mxu0 %v97
  %539 = vmatpush1.msra.mxu0 %v96
  %540 = vmatprep.subr.mxu0 %v95
  %541 = vmatpush1.msra.mxu0 %v94
  %542 = vmatprep.subr.mxu0 %v93
  %543 = vmatpush1.msra.mxu0 %v92
  %544 = vmatprep.subr.mxu0 %v91
  %545 = vmatpush1.msra.mxu0 %v90
  %546 = vmatprep.subr.mxu0 %v89
  %547 = vmatpush1.msra.mxu0 %v88
  %548 = vmatprep.subr.mxu0 %v87
  %549 = vmatpush1.msra.mxu0 %v86
  %550 = vmatprep.subr.mxu0 %v85
  %551 = vmatpush1.msra.mxu0 %v84
  %552 = vmatprep.subr.mxu0 %v83
  %553 = vmatpush1.msra.mxu0 %v82
  %554 = vmatprep.subr.mxu0 %v81
  %555 = vmatpush1.msra.mxu0 %v80
  %556 = vmatprep.subr.mxu0 %v79
  %557 = vmatpush1.msra.mxu0 %v78
  %558 = vmatprep.subr.mxu0 %v77
  %559 = vmatpush1.msra.mxu0 %v76
  %560 = vmatprep.subr.mxu0 %v75
  %561 = vmatpush1.msra.mxu0 %v74
  %562 = vmatprep.subr.mxu0 %v73
  %563 = vmatpush1.msra.mxu0 %v72
  %564 = vmatprep.subr.mxu0 %v71
  %565 = vmatpush1.msra.mxu0 %v70
  %566 = vmatprep.subr.mxu0 %v69
  %567 = vmatpush1.msra.mxu0 %v68
  %568 = vmatprep.subr.mxu0 %v67
  %569 = vmatpush1.msra.mxu0 %v66
  %570 = vmatprep.subr.mxu0 0.0
  %571 = vmatpush2.msra.mxu0 0.0
  %572 = vmatprep.subr.mxu0 0.0
  %573 = vmatpush2.msra.mxu0 0.0
  %574 = vmatprep.subr.mxu0 0.0
  %575 = vmatpush2.msra.mxu0 0.0
  %576 = vmatprep.subr.mxu0 0.0
  %577 = vmatpush2.msra.mxu0 0.0
  %578 = vmatprep.subr.mxu0 0.0
  %579 = vmatpush2.msra.mxu0 0.0
  %580 = vmatprep.subr.mxu0 0.0
  %581 = vmatpush2.msra.mxu0 0.0
  %582 = vmatprep.subr.mxu0 0.0
  %583 = vmatpush2.msra.mxu0 0.0
  %584 = vmatprep.subr.mxu0 0.0
  %585 = vmatpush2.msra.mxu0 0.0
  %586 = vmatprep.subr.mxu0 0.0
  %587 = vmatpush2.msra.mxu0 0.0
  %588 = vmatprep.subr.mxu0 0.0
  %589 = vmatpush2.msra.mxu0 0.0
  %590 = vmatprep.subr.mxu0 0.0
  %591 = vmatpush2.msra.mxu0 0.0
  %592 = vmatprep.subr.mxu0 0.0
  %593 = vmatpush2.msra.mxu0 0.0
  %594 = vmatprep.subr.mxu0 0.0
  %595 = vmatpush2.msra.mxu0 0.0
  %596 = vmatprep.subr.mxu0 0.0
  %597 = vmatpush2.msra.mxu0 0.0
  %598 = vmatprep.subr.mxu0 0.0
  %599 = vmatpush2.msra.mxu0 0.0
  %600 = vmatprep.subr.mxu0 0.0
  %601 = vmatpush2.msra.mxu0 0.0
  %602 = vmatprep.mubr.f32.mxu0 0.0
  %603 = vmatmul.mubr.f32.gmra.mxu0 %v537
  %v604 = vpop.f32.mrf.mxu0
  %v605 = vadd.f32 %v117, %v604
  %v606 = vpop.f32.mrf.mxu0
  %v607 = vadd.f32 %v121, %v606
  %608 = vdwg.mxu0
  %v609 = vmax.f32 %v605, 0.0
  %v610 = vmax.f32 %v607, 0.0
  %v611 = vmul.f32 %v372, 0.95
  %v612 = vmul.f32 %v373, 0.95
  %v613 = vadd.f32 %v611, %v609
  %v614 = vadd.f32 %v612, %v610
  %v615 = vsub.f32 %v613, %v378
  %v616 = vsub.f32 %v614, %v379
  %vm617 = vcmp.gt.f32.partialorder %v615, 1.0
  %vm618 = vcmp.gt.f32.partialorder %v616, 1.0
  %v619 = vsel %vm617, 1, 0
  %v620 = vsel %vm618, 1, 0
  %v621 = vcvt.s32.f32 %v619
  %v622 = vcvt.s32.f32 %v620
  %s623 = scalar_lea.vmem %s7, 16
  %624 = vst [vmem:[%s623] sm:$0xff] %v621
  %625 = vst [vmem:[%s623 + $0x8] sm:$0xff] %v622
  %s626 = scalar_lea.vmem %s0, 16
  %v627 = vld [vmem:[%s626] sm:$0xff]
  %628 = vmatprep.subr.mxu0 0.0
  %629 = vmatpush1.msra.mxu0 %v49
  %630 = vmatprep.subr.mxu0 0.0
  %631 = vmatpush1.msra.mxu0 %v48
  %632 = vmatprep.subr.mxu0 0.0
  %633 = vmatpush1.msra.mxu0 %v47
  %634 = vmatprep.subr.mxu0 0.0
  %635 = vmatpush1.msra.mxu0 %v46
  %636 = vmatprep.subr.mxu0 0.0
  %637 = vmatpush1.msra.mxu0 %v45
  %638 = vmatprep.subr.mxu0 0.0
  %639 = vmatpush1.msra.mxu0 %v44
  %640 = vmatprep.subr.mxu0 0.0
  %641 = vmatpush1.msra.mxu0 %v43
  %642 = vmatprep.subr.mxu0 0.0
  %643 = vmatpush1.msra.mxu0 %v42
  %644 = vmatprep.subr.mxu0 0.0
  %645 = vmatpush1.msra.mxu0 %v41
  %646 = vmatprep.subr.mxu0 0.0
  %647 = vmatpush1.msra.mxu0 %v40
  %648 = vmatprep.subr.mxu0 0.0
  %649 = vmatpush1.msra.mxu0 %v39
  %650 = vmatprep.subr.mxu0 0.0
  %651 = vmatpush1.msra.mxu0 %v38
  %652 = vmatprep.subr.mxu0 0.0
  %653 = vmatpush1.msra.mxu0 %v37
  %654 = vmatprep.subr.mxu0 0.0
  %655 = vmatpush1.msra.mxu0 %v36
  %656 = vmatprep.subr.mxu0 0.0
  %657 = vmatpush1.msra.mxu0 %v35
  %658 = vmatprep.subr.mxu0 0.0
  %659 = vmatpush1.msra.mxu0 %v34
  %660 = vmatprep.subr.mxu0 0.0
  %661 = vmatpush2.msra.mxu0 0.0
  %662 = vmatprep.subr.mxu0 0.0
  %663 = vmatpush2.msra.mxu0 0.0
  %664 = vmatprep.subr.mxu0 0.0
  %665 = vmatpush2.msra.mxu0 0.0
  %666 = vmatprep.subr.mxu0 0.0
  %667 = vmatpush2.msra.mxu0 0.0
  %668 = vmatprep.subr.mxu0 0.0
  %669 = vmatpush2.msra.mxu0 0.0
  %670 = vmatprep.subr.mxu0 0.0
  %671 = vmatpush2.msra.mxu0 0.0
  %672 = vmatprep.subr.mxu0 0.0
  %673 = vmatpush2.msra.mxu0 0.0
  %674 = vmatprep.subr.mxu0 0.0
  %675 = vmatpush2.msra.mxu0 0.0
  %676 = vmatprep.subr.mxu0 0.0
  %677 = vmatpush2.msra.mxu0 0.0
  %678 = vmatprep.subr.mxu0 0.0
  %679 = vmatpush2.msra.mxu0 0.0
  %680 = vmatprep.subr.mxu0 0.0
  %681 = vmatpush2.msra.mxu0 0.0
  %682 = vmatprep.subr.mxu0 0.0
  %683 = vmatpush2.msra.mxu0 0.0
  %684 = vmatprep.subr.mxu0 0.0
  %685 = vmatpush2.msra.mxu0 0.0
  %686 = vmatprep.subr.mxu0 0.0
  %687 = vmatpush2.msra.mxu0 0.0
  %688 = vmatprep.subr.mxu0 0.0
  %689 = vmatpush2.msra.mxu0 0.0
  %690 = vmatprep.subr.mxu0 0.0
  %691 = vmatpush2.msra.mxu0 0.0
  %692 = vmatprep.mubr.f32.mxu0 0.0
  %693 = vmatmul.mubr.f32.gmra.mxu0 %v627
  %v694 = vpop.f32.mrf.mxu0
  %v695 = vadd.f32 %v103, %v694
  %v696 = vpop.f32.mrf.mxu0
  %697 = vdwg.mxu0
  %v698 = vmax.f32 %v695, 0.0
  %v699 = vmul.f32 %v457, 0.95
  %v700 = vadd.f32 %v699, %v698
  %v701 = vsub.f32 %v700, %v460
  %vm702 = vcmp.gt.f32.partialorder %v701, 1.0
  %v703 = vsel %vm702, 1, 0
  %v704 = vcvt.s32.f32 %v703
  %705 = vmatprep.subr.mxu0 0.0
  %706 = vmatpush1.msra.mxu0 %v65
  %707 = vmatprep.subr.mxu0 0.0
  %708 = vmatpush1.msra.mxu0 %v64
  %709 = vmatprep.subr.mxu0 0.0
  %710 = vmatpush1.msra.mxu0 %v63
  %711 = vmatprep.subr.mxu0 0.0
  %712 = vmatpush1.msra.mxu0 %v62
  %713 = vmatprep.subr.mxu0 0.0
  %714 = vmatpush1.msra.mxu0 %v61
  %715 = vmatprep.subr.mxu0 0.0
  %716 = vmatpush1.msra.mxu0 %v60
  %717 = vmatprep.subr.mxu0 0.0
  %718 = vmatpush1.msra.mxu0 %v59
  %719 = vmatprep.subr.mxu0 0.0
  %720 = vmatpush1.msra.mxu0 %v58
  %721 = vmatprep.subr.mxu0 0.0
  %722 = vmatpush1.msra.mxu0 %v57
  %723 = vmatprep.subr.mxu0 0.0
  %724 = vmatpush1.msra.mxu0 %v56
  %725 = vmatprep.subr.mxu0 0.0
  %726 = vmatpush1.msra.mxu0 %v55
  %727 = vmatprep.subr.mxu0 0.0
  %728 = vmatpush1.msra.mxu0 %v54
  %729 = vmatprep.subr.mxu0 0.0
  %730 = vmatpush1.msra.mxu0 %v53
  %731 = vmatprep.subr.mxu0 0.0
  %732 = vmatpush1.msra.mxu0 %v52
  %733 = vmatprep.subr.mxu0 0.0
  %734 = vmatpush1.msra.mxu0 %v51
  %735 = vmatprep.subr.mxu0 0.0
  %736 = vmatpush1.msra.mxu0 %v50
  %737 = vmatprep.subr.mxu0 0.0
  %738 = vmatpush2.msra.mxu0 0.0
  %739 = vmatprep.subr.mxu0 0.0
  %740 = vmatpush2.msra.mxu0 0.0
  %741 = vmatprep.subr.mxu0 0.0
  %742 = vmatpush2.msra.mxu0 0.0
  %743 = vmatprep.subr.mxu0 0.0
  %744 = vmatpush2.msra.mxu0 0.0
  %745 = vmatprep.subr.mxu0 0.0
  %746 = vmatpush2.msra.mxu0 0.0
  %747 = vmatprep.subr.mxu0 0.0
  %748 = vmatpush2.msra.mxu0 0.0
  %749 = vmatprep.subr.mxu0 0.0
  %750 = vmatpush2.msra.mxu0 0.0
  %751 = vmatprep.subr.mxu0 0.0
  %752 = vmatpush2.msra.mxu0 0.0
  %753 = vmatprep.subr.mxu0 0.0
  %754 = vmatpush2.msra.mxu0 0.0
  %755 = vmatprep.subr.mxu0 0.0
  %756 = vmatpush2.msra.mxu0 0.0
  %757 = vmatprep.subr.mxu0 0.0
  %758 = vmatpush2.msra.mxu0 0.0
  %759 = vmatprep.subr.mxu0 0.0
  %760 = vmatpush2.msra.mxu0 0.0
  %761 = vmatprep.subr.mxu0 0.0
  %762 = vmatpush2.msra.mxu0 0.0
  %763 = vmatprep.subr.mxu0 0.0
  %764 = vmatpush2.msra.mxu0 0.0
  %765 = vmatprep.subr.mxu0 0.0
  %766 = vmatpush2.msra.mxu0 0.0
  %767 = vmatprep.subr.mxu0 0.0
  %768 = vmatpush2.msra.mxu0 0.0
  %769 = vmatprep.mubr.f32.mxu0 0.0
  %770 = vmatmul.mubr.f32.gmra.mxu0 %v704
  %v771 = vpop.f32.mrf.mxu0
  %v772 = vadd.f32 %v110, %v771
  %v773 = vpop.f32.mrf.mxu0
  %774 = vdwg.mxu0
  %v775 = vmax.f32 %v772, 0.0
  %v776 = vmul.f32 %v534, 0.95
  %v777 = vadd.f32 %v776, %v775
  %v778 = vsub.f32 %v777, %v537
  %vm779 = vcmp.gt.f32.partialorder %v778, 1.0
  %v780 = vsel %vm779, 1, 0
  %v781 = vcvt.s32.f32 %v780
  %782 = vmatprep.subr.mxu0 %v97
  %783 = vmatpush1.msra.mxu0 %v96
  %784 = vmatprep.subr.mxu0 %v95
  %785 = vmatpush1.msra.mxu0 %v94
  %786 = vmatprep.subr.mxu0 %v93
  %787 = vmatpush1.msra.mxu0 %v92
  %788 = vmatprep.subr.mxu0 %v91
  %789 = vmatpush1.msra.mxu0 %v90
  %790 = vmatprep.subr.mxu0 %v89
  %791 = vmatpush1.msra.mxu0 %v88
  %792 = vmatprep.subr.mxu0 %v87
  %793 = vmatpush1.msra.mxu0 %v86
  %794 = vmatprep.subr.mxu0 %v85
  %795 = vmatpush1.msra.mxu0 %v84
  %796 = vmatprep.subr.mxu0 %v83
  %797 = vmatpush1.msra.mxu0 %v82
  %798 = vmatprep.subr.mxu0 %v81
  %799 = vmatpush1.msra.mxu0 %v80
  %800 = vmatprep.subr.mxu0 %v79
  %801 = vmatpush1.msra.mxu0 %v78
  %802 = vmatprep.subr.mxu0 %v77
  %803 = vmatpush1.msra.mxu0 %v76
  %804 = vmatprep.subr.mxu0 %v75
  %805 = vmatpush1.msra.mxu0 %v74
  %806 = vmatprep.subr.mxu0 %v73
  %807 = vmatpush1.msra.mxu0 %v72
  %808 = vmatprep.subr.mxu0 %v71
  %809 = vmatpush1.msra.mxu0 %v70
  %810 = vmatprep.subr.mxu0 %v69
  %811 = vmatpush1.msra.mxu0 %v68
  %812 = vmatprep.subr.mxu0 %v67
  %813 = vmatpush1.msra.mxu0 %v66
  %814 = vmatprep.subr.mxu0 0.0
  %815 = vmatpush2.msra.mxu0 0.0
  %816 = vmatprep.subr.mxu0 0.0
  %817 = vmatpush2.msra.mxu0 0.0
  %818 = vmatprep.subr.mxu0 0.0
  %819 = vmatpush2.msra.mxu0 0.0
  %820 = vmatprep.subr.mxu0 0.0
  %821 = vmatpush2.msra.mxu0 0.0
  %822 = vmatprep.subr.mxu0 0.0
  %823 = vmatpush2.msra.mxu0 0.0
  %824 = vmatprep.subr.mxu0 0.0
  %825 = vmatpush2.msra.mxu0 0.0
  %826 = vmatprep.subr.mxu0 0.0
  %827 = vmatpush2.msra.mxu0 0.0
  %828 = vmatprep.subr.mxu0 0.0
  %829 = vmatpush2.msra.mxu0 0.0
  %830 = vmatprep.subr.mxu0 0.0
  %831 = vmatpush2.msra.mxu0 0.0
  %832 = vmatprep.subr.mxu0 0.0
  %833 = vmatpush2.msra.mxu0 0.0
  %834 = vmatprep.subr.mxu0 0.0
  %835 = vmatpush2.msra.mxu0 0.0
  %836 = vmatprep.subr.mxu0 0.0
  %837 = vmatpush2.msra.mxu0 0.0
  %838 = vmatprep.subr.mxu0 0.0
  %839 = vmatpush2.msra.mxu0 0.0
  %840 = vmatprep.subr.mxu0 0.0
  %841 = vmatpush2.msra.mxu0 0.0
  %842 = vmatprep.subr.mxu0 0.0
  %843 = vmatpush2.msra.mxu0 0.0
  %844 = vmatprep.subr.mxu0 0.0
  %845 = vmatpush2.msra.mxu0 0.0
  %846 = vmatprep.mubr.f32.mxu0 0.0
  %847 = vmatmul.mubr.f32.gmra.mxu0 %v781
  %v848 = vpop.f32.mrf.mxu0
  %v849 = vadd.f32 %v117, %v848
  %v850 = vpop.f32.mrf.mxu0
  %v851 = vadd.f32 %v121, %v850
  %852 = vdwg.mxu0
  %v853 = vmax.f32 %v849, 0.0
  %v854 = vmax.f32 %v851, 0.0
  %v855 = vmul.f32 %v615, 0.95
  %v856 = vmul.f32 %v616, 0.95
  %v857 = vadd.f32 %v855, %v853
  %v858 = vadd.f32 %v856, %v854
  %v859 = vsub.f32 %v857, %v621
  %v860 = vsub.f32 %v858, %v622
  %vm861 = vcmp.gt.f32.partialorder %v859, 1.0
  %vm862 = vcmp.gt.f32.partialorder %v860, 1.0
  %v863 = vsel %vm861, 1, 0
  %v864 = vsel %vm862, 1, 0
  %v865 = vcvt.s32.f32 %v863
  %v866 = vcvt.s32.f32 %v864
  %s867 = scalar_lea.vmem %s7, 32
  %868 = vst [vmem:[%s867] sm:$0xff] %v865
  %869 = vst [vmem:[%s867 + $0x8] sm:$0xff] %v866
  %s870 = scalar_lea.vmem %s0, 24
  %v871 = vld [vmem:[%s870] sm:$0xff]
  %872 = vmatprep.subr.mxu0 0.0
  %873 = vmatpush1.msra.mxu0 %v49
  %874 = vmatprep.subr.mxu0 0.0
  %875 = vmatpush1.msra.mxu0 %v48
  %876 = vmatprep.subr.mxu0 0.0
  %877 = vmatpush1.msra.mxu0 %v47
  %878 = vmatprep.subr.mxu0 0.0
  %879 = vmatpush1.msra.mxu0 %v46
  %880 = vmatprep.subr.mxu0 0.0
  %881 = vmatpush1.msra.mxu0 %v45
  %882 = vmatprep.subr.mxu0 0.0
  %883 = vmatpush1.msra.mxu0 %v44
  %884 = vmatprep.subr.mxu0 0.0
  %885 = vmatpush1.msra.mxu0 %v43
  %886 = vmatprep.subr.mxu0 0.0
  %887 = vmatpush1.msra.mxu0 %v42
  %888 = vmatprep.subr.mxu0 0.0
  %889 = vmatpush1.msra.mxu0 %v41
  %890 = vmatprep.subr.mxu0 0.0
  %891 = vmatpush1.msra.mxu0 %v40
  %892 = vmatprep.subr.mxu0 0.0
  %893 = vmatpush1.msra.mxu0 %v39
  %894 = vmatprep.subr.mxu0 0.0
  %895 = vmatpush1.msra.mxu0 %v38
  %896 = vmatprep.subr.mxu0 0.0
  %897 = vmatpush1.msra.mxu0 %v37
  %898 = vmatprep.subr.mxu0 0.0
  %899 = vmatpush1.msra.mxu0 %v36
  %900 = vmatprep.subr.mxu0 0.0
  %901 = vmatpush1.msra.mxu0 %v35
  %902 = vmatprep.subr.mxu0 0.0
  %903 = vmatpush1.msra.mxu0 %v34
  %904 = vmatprep.subr.mxu0 0.0
  %905 = vmatpush2.msra.mxu0 0.0
  %906 = vmatprep.subr.mxu0 0.0
  %907 = vmatpush2.msra.mxu0 0.0
  %908 = vmatprep.subr.mxu0 0.0
  %909 = vmatpush2.msra.mxu0 0.0
  %910 = vmatprep.subr.mxu0 0.0
  %911 = vmatpush2.msra.mxu0 0.0
  %912 = vmatprep.subr.mxu0 0.0
  %913 = vmatpush2.msra.mxu0 0.0
  %914 = vmatprep.subr.mxu0 0.0
  %915 = vmatpush2.msra.mxu0 0.0
  %916 = vmatprep.subr.mxu0 0.0
  %917 = vmatpush2.msra.mxu0 0.0
  %918 = vmatprep.subr.mxu0 0.0
  %919 = vmatpush2.msra.mxu0 0.0
  %920 = vmatprep.subr.mxu0 0.0
  %921 = vmatpush2.msra.mxu0 0.0
  %922 = vmatprep.subr.mxu0 0.0
  %923 = vmatpush2.msra.mxu0 0.0
  %924 = vmatprep.subr.mxu0 0.0
  %925 = vmatpush2.msra.mxu0 0.0
  %926 = vmatprep.subr.mxu0 0.0
  %927 = vmatpush2.msra.mxu0 0.0
  %928 = vmatprep.subr.mxu0 0.0
  %929 = vmatpush2.msra.mxu0 0.0
  %930 = vmatprep.subr.mxu0 0.0
  %931 = vmatpush2.msra.mxu0 0.0
  %932 = vmatprep.subr.mxu0 0.0
  %933 = vmatpush2.msra.mxu0 0.0
  %934 = vmatprep.subr.mxu0 0.0
  %935 = vmatpush2.msra.mxu0 0.0
  %936 = vmatprep.mubr.f32.mxu0 0.0
  %937 = vmatmul.mubr.f32.gmra.mxu0 %v871
  %v938 = vpop.f32.mrf.mxu0
  %v939 = vadd.f32 %v103, %v938
  %v940 = vpop.f32.mrf.mxu0
  %941 = vdwg.mxu0
  %v942 = vmax.f32 %v939, 0.0
  %v943 = vmul.f32 %v701, 0.95
  %v944 = vadd.f32 %v943, %v942
  %v945 = vsub.f32 %v944, %v704
  %vm946 = vcmp.gt.f32.partialorder %v945, 1.0
  %v947 = vsel %vm946, 1, 0
  %v948 = vcvt.s32.f32 %v947
  %949 = vmatprep.subr.mxu0 0.0
  %950 = vmatpush1.msra.mxu0 %v65
  %951 = vmatprep.subr.mxu0 0.0
  %952 = vmatpush1.msra.mxu0 %v64
  %953 = vmatprep.subr.mxu0 0.0
  %954 = vmatpush1.msra.mxu0 %v63
  %955 = vmatprep.subr.mxu0 0.0
  %956 = vmatpush1.msra.mxu0 %v62
  %957 = vmatprep.subr.mxu0 0.0
  %958 = vmatpush1.msra.mxu0 %v61
  %959 = vmatprep.subr.mxu0 0.0
  %960 = vmatpush1.msra.mxu0 %v60
  %961 = vmatprep.subr.mxu0 0.0
  %962 = vmatpush1.msra.mxu0 %v59
  %963 = vmatprep.subr.mxu0 0.0
  %964 = vmatpush1.msra.mxu0 %v58
  %965 = vmatprep.subr.mxu0 0.0
  %966 = vmatpush1.msra.mxu0 %v57
  %967 = vmatprep.subr.mxu0 0.0
  %968 = vmatpush1.msra.mxu0 %v56
  %969 = vmatprep.subr.mxu0 0.0
  %970 = vmatpush1.msra.mxu0 %v55
  %971 = vmatprep.subr.mxu0 0.0
  %972 = vmatpush1.msra.mxu0 %v54
  %973 = vmatprep.subr.mxu0 0.0
  %974 = vmatpush1.msra.mxu0 %v53
  %975 = vmatprep.subr.mxu0 0.0
  %976 = vmatpush1.msra.mxu0 %v52
  %977 = vmatprep.subr.mxu0 0.0
  %978 = vmatpush1.msra.mxu0 %v51
  %979 = vmatprep.subr.mxu0 0.0
  %980 = vmatpush1.msra.mxu0 %v50
  %981 = vmatprep.subr.mxu0 0.0
  %982 = vmatpush2.msra.mxu0 0.0
  %983 = vmatprep.subr.mxu0 0.0
  %984 = vmatpush2.msra.mxu0 0.0
  %985 = vmatprep.subr.mxu0 0.0
  %986 = vmatpush2.msra.mxu0 0.0
  %987 = vmatprep.subr.mxu0 0.0
  %988 = vmatpush2.msra.mxu0 0.0
  %989 = vmatprep.subr.mxu0 0.0
  %990 = vmatpush2.msra.mxu0 0.0
  %991 = vmatprep.subr.mxu0 0.0
  %992 = vmatpush2.msra.mxu0 0.0
  %993 = vmatprep.subr.mxu0 0.0
  %994 = vmatpush2.msra.mxu0 0.0
  %995 = vmatprep.subr.mxu0 0.0
  %996 = vmatpush2.msra.mxu0 0.0
  %997 = vmatprep.subr.mxu0 0.0
  %998 = vmatpush2.msra.mxu0 0.0
  %999 = vmatprep.subr.mxu0 0.0
  %1000 = vmatpush2.msra.mxu0 0.0
  %1001 = vmatprep.subr.mxu0 0.0
  %1002 = vmatpush2.msra.mxu0 0.0
  %1003 = vmatprep.subr.mxu0 0.0
  %1004 = vmatpush2.msra.mxu0 0.0
  %1005 = vmatprep.subr.mxu0 0.0
  %1006 = vmatpush2.msra.mxu0 0.0
  %1007 = vmatprep.subr.mxu0 0.0
  %1008 = vmatpush2.msra.mxu0 0.0
  %1009 = vmatprep.subr.mxu0 0.0
  %1010 = vmatpush2.msra.mxu0 0.0
  %1011 = vmatprep.subr.mxu0 0.0
  %1012 = vmatpush2.msra.mxu0 0.0
  %1013 = vmatprep.mubr.f32.mxu0 0.0
  %1014 = vmatmul.mubr.f32.gmra.mxu0 %v948
  %v1015 = vpop.f32.mrf.mxu0
  %v1016 = vadd.f32 %v110, %v1015
  %v1017 = vpop.f32.mrf.mxu0
  %1018 = vdwg.mxu0
  %v1019 = vmax.f32 %v1016, 0.0
  %v1020 = vmul.f32 %v778, 0.95
  %v1021 = vadd.f32 %v1020, %v1019
  %v1022 = vsub.f32 %v1021, %v781
  %vm1023 = vcmp.gt.f32.partialorder %v1022, 1.0
  %v1024 = vsel %vm1023, 1, 0
  %v1025 = vcvt.s32.f32 %v1024
  %1026 = vmatprep.subr.mxu0 %v97
  %1027 = vmatpush1.msra.mxu0 %v96
  %1028 = vmatprep.subr.mxu0 %v95
  %1029 = vmatpush1.msra.mxu0 %v94
  %1030 = vmatprep.subr.mxu0 %v93
  %1031 = vmatpush1.msra.mxu0 %v92
  %1032 = vmatprep.subr.mxu0 %v91
  %1033 = vmatpush1.msra.mxu0 %v90
  %1034 = vmatprep.subr.mxu0 %v89
  %1035 = vmatpush1.msra.mxu0 %v88
  %1036 = vmatprep.subr.mxu0 %v87
  %1037 = vmatpush1.msra.mxu0 %v86
  %1038 = vmatprep.subr.mxu0 %v85
  %1039 = vmatpush1.msra.mxu0 %v84
  %1040 = vmatprep.subr.mxu0 %v83
  %1041 = vmatpush1.msra.mxu0 %v82
  %1042 = vmatprep.subr.mxu0 %v81
  %1043 = vmatpush1.msra.mxu0 %v80
  %1044 = vmatprep.subr.mxu0 %v79
  %1045 = vmatpush1.msra.mxu0 %v78
  %1046 = vmatprep.subr.mxu0 %v77
  %1047 = vmatpush1.msra.mxu0 %v76
  %1048 = vmatprep.subr.mxu0 %v75
  %1049 = vmatpush1.msra.mxu0 %v74
  %1050 = vmatprep.subr.mxu0 %v73
  %1051 = vmatpush1.msra.mxu0 %v72
  %1052 = vmatprep.subr.mxu0 %v71
  %1053 = vmatpush1.msra.mxu0 %v70
  %1054 = vmatprep.subr.mxu0 %v69
  %1055 = vmatpush1.msra.mxu0 %v68
  %1056 = vmatprep.subr.mxu0 %v67
  %1057 = vmatpush1.msra.mxu0 %v66
  %1058 = vmatprep.subr.mxu0 0.0
  %1059 = vmatpush2.msra.mxu0 0.0
  %1060 = vmatprep.subr.mxu0 0.0
  %1061 = vmatpush2.msra.mxu0 0.0
  %1062 = vmatprep.subr.mxu0 0.0
  %1063 = vmatpush2.msra.mxu0 0.0
  %1064 = vmatprep.subr.mxu0 0.0
  %1065 = vmatpush2.msra.mxu0 0.0
  %1066 = vmatprep.subr.mxu0 0.0
  %1067 = vmatpush2.msra.mxu0 0.0
  %1068 = vmatprep.subr.mxu0 0.0
  %1069 = vmatpush2.msra.mxu0 0.0
  %1070 = vmatprep.subr.mxu0 0.0
  %1071 = vmatpush2.msra.mxu0 0.0
  %1072 = vmatprep.subr.mxu0 0.0
  %1073 = vmatpush2.msra.mxu0 0.0
  %1074 = vmatprep.subr.mxu0 0.0
  %1075 = vmatpush2.msra.mxu0 0.0
  %1076 = vmatprep.subr.mxu0 0.0
  %1077 = vmatpush2.msra.mxu0 0.0
  %1078 = vmatprep.subr.mxu0 0.0
  %1079 = vmatpush2.msra.mxu0 0.0
  %1080 = vmatprep.subr.mxu0 0.0
  %1081 = vmatpush2.msra.mxu0 0.0
  %1082 = vmatprep.subr.mxu0 0.0
  %1083 = vmatpush2.msra.mxu0 0.0
  %1084 = vmatprep.subr.mxu0 0.0
  %1085 = vmatpush2.msra.mxu0 0.0
  %1086 = vmatprep.subr.mxu0 0.0
  %1087 = vmatpush2.msra.mxu0 0.0
  %1088 = vmatprep.subr.mxu0 0.0
  %1089 = vmatpush2.msra.mxu0 0.0
  %1090 = vmatprep.mubr.f32.mxu0 0.0
  %1091 = vmatmul.mubr.f32.gmra.mxu0 %v1025
  %v1092 = vpop.f32.mrf.mxu0
  %v1093 = vadd.f32 %v117, %v1092
  %v1094 = vpop.f32.mrf.mxu0
  %v1095 = vadd.f32 %v121, %v1094
  %1096 = vdwg.mxu0
  %v1097 = vmax.f32 %v1093, 0.0
  %v1098 = vmax.f32 %v1095, 0.0
  %v1099 = vmul.f32 %v859, 0.95
  %v1100 = vmul.f32 %v860, 0.95
  %v1101 = vadd.f32 %v1099, %v1097
  %v1102 = vadd.f32 %v1100, %v1098
  %v1103 = vsub.f32 %v1101, %v865
  %v1104 = vsub.f32 %v1102, %v866
  %vm1105 = vcmp.gt.f32.partialorder %v1103, 1.0
  %vm1106 = vcmp.gt.f32.partialorder %v1104, 1.0
  %v1107 = vsel %vm1105, 1, 0
  %v1108 = vsel %vm1106, 1, 0
  %v1109 = vcvt.s32.f32 %v1107
  %v1110 = vcvt.s32.f32 %v1108
  %s1111 = scalar_lea.vmem %s7, 48
  %1112 = vst [vmem:[%s1111] sm:$0xff] %v1109
  %1113 = vst [vmem:[%s1111 + $0x8] sm:$0xff] %v1110
  %s1114 = scalar_lea.vmem %s0, 32
  %v1115 = vld [vmem:[%s1114] sm:$0xff]
  %1116 = vmatprep.subr.mxu0 0.0
  %1117 = vmatpush1.msra.mxu0 %v49
  %1118 = vmatprep.subr.mxu0 0.0
  %1119 = vmatpush1.msra.mxu0 %v48
  %1120 = vmatprep.subr.mxu0 0.0
  %1121 = vmatpush1.msra.mxu0 %v47
  %1122 = vmatprep.subr.mxu0 0.0
  %1123 = vmatpush1.msra.mxu0 %v46
  %1124 = vmatprep.subr.mxu0 0.0
  %1125 = vmatpush1.msra.mxu0 %v45
  %1126 = vmatprep.subr.mxu0 0.0
  %1127 = vmatpush1.msra.mxu0 %v44
  %1128 = vmatprep.subr.mxu0 0.0
  %1129 = vmatpush1.msra.mxu0 %v43
  %1130 = vmatprep.subr.mxu0 0.0
  %1131 = vmatpush1.msra.mxu0 %v42
  %1132 = vmatprep.subr.mxu0 0.0
  %1133 = vmatpush1.msra.mxu0 %v41
  %1134 = vmatprep.subr.mxu0 0.0
  %1135 = vmatpush1.msra.mxu0 %v40
  %1136 = vmatprep.subr.mxu0 0.0
  %1137 = vmatpush1.msra.mxu0 %v39
  %1138 = vmatprep.subr.mxu0 0.0
  %1139 = vmatpush1.msra.mxu0 %v38
  %1140 = vmatprep.subr.mxu0 0.0
  %1141 = vmatpush1.msra.mxu0 %v37
  %1142 = vmatprep.subr.mxu0 0.0
  %1143 = vmatpush1.msra.mxu0 %v36
  %1144 = vmatprep.subr.mxu0 0.0
  %1145 = vmatpush1.msra.mxu0 %v35
  %1146 = vmatprep.subr.mxu0 0.0
  %1147 = vmatpush1.msra.mxu0 %v34
  %1148 = vmatprep.subr.mxu0 0.0
  %1149 = vmatpush2.msra.mxu0 0.0
  %1150 = vmatprep.subr.mxu0 0.0
  %1151 = vmatpush2.msra.mxu0 0.0
  %1152 = vmatprep.subr.mxu0 0.0
  %1153 = vmatpush2.msra.mxu0 0.0
  %1154 = vmatprep.subr.mxu0 0.0
  %1155 = vmatpush2.msra.mxu0 0.0
  %1156 = vmatprep.subr.mxu0 0.0
  %1157 = vmatpush2.msra.mxu0 0.0
  %1158 = vmatprep.subr.mxu0 0.0
  %1159 = vmatpush2.msra.mxu0 0.0
  %1160 = vmatprep.subr.mxu0 0.0
  %1161 = vmatpush2.msra.mxu0 0.0
  %1162 = vmatprep.subr.mxu0 0.0
  %1163 = vmatpush2.msra.mxu0 0.0
  %1164 = vmatprep.subr.mxu0 0.0
  %1165 = vmatpush2.msra.mxu0 0.0
  %1166 = vmatprep.subr.mxu0 0.0
  %1167 = vmatpush2.msra.mxu0 0.0
  %1168 = vmatprep.subr.mxu0 0.0
  %1169 = vmatpush2.msra.mxu0 0.0
  %1170 = vmatprep.subr.mxu0 0.0
  %1171 = vmatpush2.msra.mxu0 0.0
  %1172 = vmatprep.subr.mxu0 0.0
  %1173 = vmatpush2.msra.mxu0 0.0
  %1174 = vmatprep.subr.mxu0 0.0
  %1175 = vmatpush2.msra.mxu0 0.0
  %1176 = vmatprep.subr.mxu0 0.0
  %1177 = vmatpush2.msra.mxu0 0.0
  %1178 = vmatprep.subr.mxu0 0.0
  %1179 = vmatpush2.msra.mxu0 0.0
  %1180 = vmatprep.mubr.f32.mxu0 0.0
  %1181 = vmatmul.mubr.f32.gmra.mxu0 %v1115
  %v1182 = vpop.f32.mrf.mxu0
  %v1183 = vadd.f32 %v103, %v1182
  %v1184 = vpop.f32.mrf.mxu0
  %1185 = vdwg.mxu0
  %v1186 = vmax.f32 %v1183, 0.0
  %v1187 = vmul.f32 %v945, 0.95
  %v1188 = vadd.f32 %v1187, %v1186
  %v1189 = vsub.f32 %v1188, %v948
  %vm1190 = vcmp.gt.f32.partialorder %v1189, 1.0
  %v1191 = vsel %vm1190, 1, 0
  %v1192 = vcvt.s32.f32 %v1191
  %1193 = vmatprep.subr.mxu0 0.0
  %1194 = vmatpush1.msra.mxu0 %v65
  %1195 = vmatprep.subr.mxu0 0.0
  %1196 = vmatpush1.msra.mxu0 %v64
  %1197 = vmatprep.subr.mxu0 0.0
  %1198 = vmatpush1.msra.mxu0 %v63
  %1199 = vmatprep.subr.mxu0 0.0
  %1200 = vmatpush1.msra.mxu0 %v62
  %1201 = vmatprep.subr.mxu0 0.0
  %1202 = vmatpush1.msra.mxu0 %v61
  %1203 = vmatprep.subr.mxu0 0.0
  %1204 = vmatpush1.msra.mxu0 %v60
  %1205 = vmatprep.subr.mxu0 0.0
  %1206 = vmatpush1.msra.mxu0 %v59
  %1207 = vmatprep.subr.mxu0 0.0
  %1208 = vmatpush1.msra.mxu0 %v58
  %1209 = vmatprep.subr.mxu0 0.0
  %1210 = vmatpush1.msra.mxu0 %v57
  %1211 = vmatprep.subr.mxu0 0.0
  %1212 = vmatpush1.msra.mxu0 %v56
  %1213 = vmatprep.subr.mxu0 0.0
  %1214 = vmatpush1.msra.mxu0 %v55
  %1215 = vmatprep.subr.mxu0 0.0
  %1216 = vmatpush1.msra.mxu0 %v54
  %1217 = vmatprep.subr.mxu0 0.0
  %1218 = vmatpush1.msra.mxu0 %v53
  %1219 = vmatprep.subr.mxu0 0.0
  %1220 = vmatpush1.msra.mxu0 %v52
  %1221 = vmatprep.subr.mxu0 0.0
  %1222 = vmatpush1.msra.mxu0 %v51
  %1223 = vmatprep.subr.mxu0 0.0
  %1224 = vmatpush1.msra.mxu0 %v50
  %1225 = vmatprep.subr.mxu0 0.0
  %1226 = vmatpush2.msra.mxu0 0.0
  %1227 = vmatprep.subr.mxu0 0.0
  %1228 = vmatpush2.msra.mxu0 0.0
  %1229 = vmatprep.subr.mxu0 0.0
  %1230 = vmatpush2.msra.mxu0 0.0
  %1231 = vmatprep.subr.mxu0 0.0
  %1232 = vmatpush2.msra.mxu0 0.0
  %1233 = vmatprep.subr.mxu0 0.0
  %1234 = vmatpush2.msra.mxu0 0.0
  %1235 = vmatprep.subr.mxu0 0.0
  %1236 = vmatpush2.msra.mxu0 0.0
  %1237 = vmatprep.subr.mxu0 0.0
  %1238 = vmatpush2.msra.mxu0 0.0
  %1239 = vmatprep.subr.mxu0 0.0
  %1240 = vmatpush2.msra.mxu0 0.0
  %1241 = vmatprep.subr.mxu0 0.0
  %1242 = vmatpush2.msra.mxu0 0.0
  %1243 = vmatprep.subr.mxu0 0.0
  %1244 = vmatpush2.msra.mxu0 0.0
  %1245 = vmatprep.subr.mxu0 0.0
  %1246 = vmatpush2.msra.mxu0 0.0
  %1247 = vmatprep.subr.mxu0 0.0
  %1248 = vmatpush2.msra.mxu0 0.0
  %1249 = vmatprep.subr.mxu0 0.0
  %1250 = vmatpush2.msra.mxu0 0.0
  %1251 = vmatprep.subr.mxu0 0.0
  %1252 = vmatpush2.msra.mxu0 0.0
  %1253 = vmatprep.subr.mxu0 0.0
  %1254 = vmatpush2.msra.mxu0 0.0
  %1255 = vmatprep.subr.mxu0 0.0
  %1256 = vmatpush2.msra.mxu0 0.0
  %1257 = vmatprep.mubr.f32.mxu0 0.0
  %1258 = vmatmul.mubr.f32.gmra.mxu0 %v1192
  %v1259 = vpop.f32.mrf.mxu0
  %v1260 = vadd.f32 %v110, %v1259
  %v1261 = vpop.f32.mrf.mxu0
  %1262 = vdwg.mxu0
  %v1263 = vmax.f32 %v1260, 0.0
  %v1264 = vmul.f32 %v1022, 0.95
  %v1265 = vadd.f32 %v1264, %v1263
  %v1266 = vsub.f32 %v1265, %v1025
  %vm1267 = vcmp.gt.f32.partialorder %v1266, 1.0
  %v1268 = vsel %vm1267, 1, 0
  %v1269 = vcvt.s32.f32 %v1268
  %1270 = vmatprep.subr.mxu0 %v97
  %1271 = vmatpush1.msra.mxu0 %v96
  %1272 = vmatprep.subr.mxu0 %v95
  %1273 = vmatpush1.msra.mxu0 %v94
  %1274 = vmatprep.subr.mxu0 %v93
  %1275 = vmatpush1.msra.mxu0 %v92
  %1276 = vmatprep.subr.mxu0 %v91
  %1277 = vmatpush1.msra.mxu0 %v90
  %1278 = vmatprep.subr.mxu0 %v89
  %1279 = vmatpush1.msra.mxu0 %v88
  %1280 = vmatprep.subr.mxu0 %v87
  %1281 = vmatpush1.msra.mxu0 %v86
  %1282 = vmatprep.subr.mxu0 %v85
  %1283 = vmatpush1.msra.mxu0 %v84
  %1284 = vmatprep.subr.mxu0 %v83
  %1285 = vmatpush1.msra.mxu0 %v82
  %1286 = vmatprep.subr.mxu0 %v81
  %1287 = vmatpush1.msra.mxu0 %v80
  %1288 = vmatprep.subr.mxu0 %v79
  %1289 = vmatpush1.msra.mxu0 %v78
  %1290 = vmatprep.subr.mxu0 %v77
  %1291 = vmatpush1.msra.mxu0 %v76
  %1292 = vmatprep.subr.mxu0 %v75
  %1293 = vmatpush1.msra.mxu0 %v74
  %1294 = vmatprep.subr.mxu0 %v73
  %1295 = vmatpush1.msra.mxu0 %v72
  %1296 = vmatprep.subr.mxu0 %v71
  %1297 = vmatpush1.msra.mxu0 %v70
  %1298 = vmatprep.subr.mxu0 %v69
  %1299 = vmatpush1.msra.mxu0 %v68
  %1300 = vmatprep.subr.mxu0 %v67
  %1301 = vmatpush1.msra.mxu0 %v66
  %1302 = vmatprep.subr.mxu0 0.0
  %1303 = vmatpush2.msra.mxu0 0.0
  %1304 = vmatprep.subr.mxu0 0.0
  %1305 = vmatpush2.msra.mxu0 0.0
  %1306 = vmatprep.subr.mxu0 0.0
  %1307 = vmatpush2.msra.mxu0 0.0
  %1308 = vmatprep.subr.mxu0 0.0
  %1309 = vmatpush2.msra.mxu0 0.0
  %1310 = vmatprep.subr.mxu0 0.0
  %1311 = vmatpush2.msra.mxu0 0.0
  %1312 = vmatprep.subr.mxu0 0.0
  %1313 = vmatpush2.msra.mxu0 0.0
  %1314 = vmatprep.subr.mxu0 0.0
  %1315 = vmatpush2.msra.mxu0 0.0
  %1316 = vmatprep.subr.mxu0 0.0
  %1317 = vmatpush2.msra.mxu0 0.0
  %1318 = vmatprep.subr.mxu0 0.0
  %1319 = vmatpush2.msra.mxu0 0.0
  %1320 = vmatprep.subr.mxu0 0.0
  %1321 = vmatpush2.msra.mxu0 0.0
  %1322 = vmatprep.subr.mxu0 0.0
  %1323 = vmatpush2.msra.mxu0 0.0
  %1324 = vmatprep.subr.mxu0 0.0
  %1325 = vmatpush2.msra.mxu0 0.0
  %1326 = vmatprep.subr.mxu0 0.0
  %1327 = vmatpush2.msra.mxu0 0.0
  %1328 = vmatprep.subr.mxu0 0.0
  %1329 = vmatpush2.msra.mxu0 0.0
  %1330 = vmatprep.subr.mxu0 0.0
  %1331 = vmatpush2.msra.mxu0 0.0
  %1332 = vmatprep.subr.mxu0 0.0
  %1333 = vmatpush2.msra.mxu0 0.0
  %1334 = vmatprep.mubr.f32.mxu0 0.0
  %1335 = vmatmul.mubr.f32.gmra.mxu0 %v1269
  %v1336 = vpop.f32.mrf.mxu0
  %v1337 = vadd.f32 %v117, %v1336
  %v1338 = vpop.f32.mrf.mxu0
  %v1339 = vadd.f32 %v121, %v1338
  %1340 = vdwg.mxu0
  %v1341 = vmax.f32 %v1337, 0.0
  %v1342 = vmax.f32 %v1339, 0.0
  %v1343 = vmul.f32 %v1103, 0.95
  %v1344 = vmul.f32 %v1104, 0.95
  %v1345 = vadd.f32 %v1343, %v1341
  %v1346 = vadd.f32 %v1344, %v1342
  %v1347 = vsub.f32 %v1345, %v1109
  %v1348 = vsub.f32 %v1346, %v1110
  %vm1349 = vcmp.gt.f32.partialorder %v1347, 1.0
  %vm1350 = vcmp.gt.f32.partialorder %v1348, 1.0
  %v1351 = vsel %vm1349, 1, 0
  %v1352 = vsel %vm1350, 1, 0
  %v1353 = vcvt.s32.f32 %v1351
  %v1354 = vcvt.s32.f32 %v1352
  %s1355 = scalar_lea.vmem %s7, 64
  %1356 = vst [vmem:[%s1355] sm:$0xff] %v1353
  %1357 = vst [vmem:[%s1355 + $0x8] sm:$0xff] %v1354
  %s1358 = scalar_lea.vmem %s0, 40
  %v1359 = vld [vmem:[%s1358] sm:$0xff]
  %1360 = vmatprep.subr.mxu0 0.0
  %1361 = vmatpush1.msra.mxu0 %v49
  %1362 = vmatprep.subr.mxu0 0.0
  %1363 = vmatpush1.msra.mxu0 %v48
  %1364 = vmatprep.subr.mxu0 0.0
  %1365 = vmatpush1.msra.mxu0 %v47
  %1366 = vmatprep.subr.mxu0 0.0
  %1367 = vmatpush1.msra.mxu0 %v46
  %1368 = vmatprep.subr.mxu0 0.0
  %1369 = vmatpush1.msra.mxu0 %v45
  %1370 = vmatprep.subr.mxu0 0.0
  %1371 = vmatpush1.msra.mxu0 %v44
  %1372 = vmatprep.subr.mxu0 0.0
  %1373 = vmatpush1.msra.mxu0 %v43
  %1374 = vmatprep.subr.mxu0 0.0
  %1375 = vmatpush1.msra.mxu0 %v42
  %1376 = vmatprep.subr.mxu0 0.0
  %1377 = vmatpush1.msra.mxu0 %v41
  %1378 = vmatprep.subr.mxu0 0.0
  %1379 = vmatpush1.msra.mxu0 %v40
  %1380 = vmatprep.subr.mxu0 0.0
  %1381 = vmatpush1.msra.mxu0 %v39
  %1382 = vmatprep.subr.mxu0 0.0
  %1383 = vmatpush1.msra.mxu0 %v38
  %1384 = vmatprep.subr.mxu0 0.0
  %1385 = vmatpush1.msra.mxu0 %v37
  %1386 = vmatprep.subr.mxu0 0.0
  %1387 = vmatpush1.msra.mxu0 %v36
  %1388 = vmatprep.subr.mxu0 0.0
  %1389 = vmatpush1.msra.mxu0 %v35
  %1390 = vmatprep.subr.mxu0 0.0
  %1391 = vmatpush1.msra.mxu0 %v34
  %1392 = vmatprep.subr.mxu0 0.0
  %1393 = vmatpush2.msra.mxu0 0.0
  %1394 = vmatprep.subr.mxu0 0.0
  %1395 = vmatpush2.msra.mxu0 0.0
  %1396 = vmatprep.subr.mxu0 0.0
  %1397 = vmatpush2.msra.mxu0 0.0
  %1398 = vmatprep.subr.mxu0 0.0
  %1399 = vmatpush2.msra.mxu0 0.0
  %1400 = vmatprep.subr.mxu0 0.0
  %1401 = vmatpush2.msra.mxu0 0.0
  %1402 = vmatprep.subr.mxu0 0.0
  %1403 = vmatpush2.msra.mxu0 0.0
  %1404 = vmatprep.subr.mxu0 0.0
  %1405 = vmatpush2.msra.mxu0 0.0
  %1406 = vmatprep.subr.mxu0 0.0
  %1407 = vmatpush2.msra.mxu0 0.0
  %1408 = vmatprep.subr.mxu0 0.0
  %1409 = vmatpush2.msra.mxu0 0.0
  %1410 = vmatprep.subr.mxu0 0.0
  %1411 = vmatpush2.msra.mxu0 0.0
  %1412 = vmatprep.subr.mxu0 0.0
  %1413 = vmatpush2.msra.mxu0 0.0
  %1414 = vmatprep.subr.mxu0 0.0
  %1415 = vmatpush2.msra.mxu0 0.0
  %1416 = vmatprep.subr.mxu0 0.0
  %1417 = vmatpush2.msra.mxu0 0.0
  %1418 = vmatprep.subr.mxu0 0.0
  %1419 = vmatpush2.msra.mxu0 0.0
  %1420 = vmatprep.subr.mxu0 0.0
  %1421 = vmatpush2.msra.mxu0 0.0
  %1422 = vmatprep.subr.mxu0 0.0
  %1423 = vmatpush2.msra.mxu0 0.0
  %1424 = vmatprep.mubr.f32.mxu0 0.0
  %1425 = vmatmul.mubr.f32.gmra.mxu0 %v1359
  %v1426 = vpop.f32.mrf.mxu0
  %v1427 = vadd.f32 %v103, %v1426
  %v1428 = vpop.f32.mrf.mxu0
  %1429 = vdwg.mxu0
  %v1430 = vmax.f32 %v1427, 0.0
  %v1431 = vmul.f32 %v1189, 0.95
  %v1432 = vadd.f32 %v1431, %v1430
  %v1433 = vsub.f32 %v1432, %v1192
  %vm1434 = vcmp.gt.f32.partialorder %v1433, 1.0
  %v1435 = vsel %vm1434, 1, 0
  %v1436 = vcvt.s32.f32 %v1435
  %1437 = vmatprep.subr.mxu0 0.0
  %1438 = vmatpush1.msra.mxu0 %v65
  %1439 = vmatprep.subr.mxu0 0.0
  %1440 = vmatpush1.msra.mxu0 %v64
  %1441 = vmatprep.subr.mxu0 0.0
  %1442 = vmatpush1.msra.mxu0 %v63
  %1443 = vmatprep.subr.mxu0 0.0
  %1444 = vmatpush1.msra.mxu0 %v62
  %1445 = vmatprep.subr.mxu0 0.0
  %1446 = vmatpush1.msra.mxu0 %v61
  %1447 = vmatprep.subr.mxu0 0.0
  %1448 = vmatpush1.msra.mxu0 %v60
  %1449 = vmatprep.subr.mxu0 0.0
  %1450 = vmatpush1.msra.mxu0 %v59
  %1451 = vmatprep.subr.mxu0 0.0
  %1452 = vmatpush1.msra.mxu0 %v58
  %1453 = vmatprep.subr.mxu0 0.0
  %1454 = vmatpush1.msra.mxu0 %v57
  %1455 = vmatprep.subr.mxu0 0.0
  %1456 = vmatpush1.msra.mxu0 %v56
  %1457 = vmatprep.subr.mxu0 0.0
  %1458 = vmatpush1.msra.mxu0 %v55
  %1459 = vmatprep.subr.mxu0 0.0
  %1460 = vmatpush1.msra.mxu0 %v54
  %1461 = vmatprep.subr.mxu0 0.0
  %1462 = vmatpush1.msra.mxu0 %v53
  %1463 = vmatprep.subr.mxu0 0.0
  %1464 = vmatpush1.msra.mxu0 %v52
  %1465 = vmatprep.subr.mxu0 0.0
  %1466 = vmatpush1.msra.mxu0 %v51
  %1467 = vmatprep.subr.mxu0 0.0
  %1468 = vmatpush1.msra.mxu0 %v50
  %1469 = vmatprep.subr.mxu0 0.0
  %1470 = vmatpush2.msra.mxu0 0.0
  %1471 = vmatprep.subr.mxu0 0.0
  %1472 = vmatpush2.msra.mxu0 0.0
  %1473 = vmatprep.subr.mxu0 0.0
  %1474 = vmatpush2.msra.mxu0 0.0
  %1475 = vmatprep.subr.mxu0 0.0
  %1476 = vmatpush2.msra.mxu0 0.0
  %1477 = vmatprep.subr.mxu0 0.0
  %1478 = vmatpush2.msra.mxu0 0.0
  %1479 = vmatprep.subr.mxu0 0.0
  %1480 = vmatpush2.msra.mxu0 0.0
  %1481 = vmatprep.subr.mxu0 0.0
  %1482 = vmatpush2.msra.mxu0 0.0
  %1483 = vmatprep.subr.mxu0 0.0
  %1484 = vmatpush2.msra.mxu0 0.0
  %1485 = vmatprep.subr.mxu0 0.0
  %1486 = vmatpush2.msra.mxu0 0.0
  %1487 = vmatprep.subr.mxu0 0.0
  %1488 = vmatpush2.msra.mxu0 0.0
  %1489 = vmatprep.subr.mxu0 0.0
  %1490 = vmatpush2.msra.mxu0 0.0
  %1491 = vmatprep.subr.mxu0 0.0
  %1492 = vmatpush2.msra.mxu0 0.0
  %1493 = vmatprep.subr.mxu0 0.0
  %1494 = vmatpush2.msra.mxu0 0.0
  %1495 = vmatprep.subr.mxu0 0.0
  %1496 = vmatpush2.msra.mxu0 0.0
  %1497 = vmatprep.subr.mxu0 0.0
  %1498 = vmatpush2.msra.mxu0 0.0
  %1499 = vmatprep.subr.mxu0 0.0
  %1500 = vmatpush2.msra.mxu0 0.0
  %1501 = vmatprep.mubr.f32.mxu0 0.0
  %1502 = vmatmul.mubr.f32.gmra.mxu0 %v1436
  %v1503 = vpop.f32.mrf.mxu0
  %v1504 = vadd.f32 %v110, %v1503
  %v1505 = vpop.f32.mrf.mxu0
  %1506 = vdwg.mxu0
  %v1507 = vmax.f32 %v1504, 0.0
  %v1508 = vmul.f32 %v1266, 0.95
  %v1509 = vadd.f32 %v1508, %v1507
  %v1510 = vsub.f32 %v1509, %v1269
  %vm1511 = vcmp.gt.f32.partialorder %v1510, 1.0
  %v1512 = vsel %vm1511, 1, 0
  %v1513 = vcvt.s32.f32 %v1512
  %1514 = vmatprep.subr.mxu0 %v97
  %1515 = vmatpush1.msra.mxu0 %v96
  %1516 = vmatprep.subr.mxu0 %v95
  %1517 = vmatpush1.msra.mxu0 %v94
  %1518 = vmatprep.subr.mxu0 %v93
  %1519 = vmatpush1.msra.mxu0 %v92
  %1520 = vmatprep.subr.mxu0 %v91
  %1521 = vmatpush1.msra.mxu0 %v90
  %1522 = vmatprep.subr.mxu0 %v89
  %1523 = vmatpush1.msra.mxu0 %v88
  %1524 = vmatprep.subr.mxu0 %v87
  %1525 = vmatpush1.msra.mxu0 %v86
  %1526 = vmatprep.subr.mxu0 %v85
  %1527 = vmatpush1.msra.mxu0 %v84
  %1528 = vmatprep.subr.mxu0 %v83
  %1529 = vmatpush1.msra.mxu0 %v82
  %1530 = vmatprep.subr.mxu0 %v81
  %1531 = vmatpush1.msra.mxu0 %v80
  %1532 = vmatprep.subr.mxu0 %v79
  %1533 = vmatpush1.msra.mxu0 %v78
  %1534 = vmatprep.subr.mxu0 %v77
  %1535 = vmatpush1.msra.mxu0 %v76
  %1536 = vmatprep.subr.mxu0 %v75
  %1537 = vmatpush1.msra.mxu0 %v74
  %1538 = vmatprep.subr.mxu0 %v73
  %1539 = vmatpush1.msra.mxu0 %v72
  %1540 = vmatprep.subr.mxu0 %v71
  %1541 = vmatpush1.msra.mxu0 %v70
  %1542 = vmatprep.subr.mxu0 %v69
  %1543 = vmatpush1.msra.mxu0 %v68
  %1544 = vmatprep.subr.mxu0 %v67
  %1545 = vmatpush1.msra.mxu0 %v66
  %1546 = vmatprep.subr.mxu0 0.0
  %1547 = vmatpush2.msra.mxu0 0.0
  %1548 = vmatprep.subr.mxu0 0.0
  %1549 = vmatpush2.msra.mxu0 0.0
  %1550 = vmatprep.subr.mxu0 0.0
  %1551 = vmatpush2.msra.mxu0 0.0
  %1552 = vmatprep.subr.mxu0 0.0
  %1553 = vmatpush2.msra.mxu0 0.0
  %1554 = vmatprep.subr.mxu0 0.0
  %1555 = vmatpush2.msra.mxu0 0.0
  %1556 = vmatprep.subr.mxu0 0.0
  %1557 = vmatpush2.msra.mxu0 0.0
  %1558 = vmatprep.subr.mxu0 0.0
  %1559 = vmatpush2.msra.mxu0 0.0
  %1560 = vmatprep.subr.mxu0 0.0
  %1561 = vmatpush2.msra.mxu0 0.0
  %1562 = vmatprep.subr.mxu0 0.0
  %1563 = vmatpush2.msra.mxu0 0.0
  %1564 = vmatprep.subr.mxu0 0.0
  %1565 = vmatpush2.msra.mxu0 0.0
  %1566 = vmatprep.subr.mxu0 0.0
  %1567 = vmatpush2.msra.mxu0 0.0
  %1568 = vmatprep.subr.mxu0 0.0
  %1569 = vmatpush2.msra.mxu0 0.0
  %1570 = vmatprep.subr.mxu0 0.0
  %1571 = vmatpush2.msra.mxu0 0.0
  %1572 = vmatprep.subr.mxu0 0.0
  %1573 = vmatpush2.msra.mxu0 0.0
  %1574 = vmatprep.subr.mxu0 0.0
  %1575 = vmatpush2.msra.mxu0 0.0
  %1576 = vmatprep.subr.mxu0 0.0
  %1577 = vmatpush2.msra.mxu0 0.0
  %1578 = vmatprep.mubr.f32.mxu0 0.0
  %1579 = vmatmul.mubr.f32.gmra.mxu0 %v1513
  %v1580 = vpop.f32.mrf.mxu0
  %v1581 = vadd.f32 %v117, %v1580
  %v1582 = vpop.f32.mrf.mxu0
  %v1583 = vadd.f32 %v121, %v1582
  %1584 = vdwg.mxu0
  %v1585 = vmax.f32 %v1581, 0.0
  %v1586 = vmax.f32 %v1583, 0.0
  %v1587 = vmul.f32 %v1347, 0.95
  %v1588 = vmul.f32 %v1348, 0.95
  %v1589 = vadd.f32 %v1587, %v1585
  %v1590 = vadd.f32 %v1588, %v1586
  %v1591 = vsub.f32 %v1589, %v1353
  %v1592 = vsub.f32 %v1590, %v1354
  %vm1593 = vcmp.gt.f32.partialorder %v1591, 1.0
  %vm1594 = vcmp.gt.f32.partialorder %v1592, 1.0
  %v1595 = vsel %vm1593, 1, 0
  %v1596 = vsel %vm1594, 1, 0
  %v1597 = vcvt.s32.f32 %v1595
  %v1598 = vcvt.s32.f32 %v1596
  %s1599 = scalar_lea.vmem %s7, 80
  %1600 = vst [vmem:[%s1599] sm:$0xff] %v1597
  %1601 = vst [vmem:[%s1599 + $0x8] sm:$0xff] %v1598
  %s1602 = scalar_lea.vmem %s0, 48
  %v1603 = vld [vmem:[%s1602] sm:$0xff]
  %1604 = vmatprep.subr.mxu0 0.0
  %1605 = vmatpush1.msra.mxu0 %v49
  %1606 = vmatprep.subr.mxu0 0.0
  %1607 = vmatpush1.msra.mxu0 %v48
  %1608 = vmatprep.subr.mxu0 0.0
  %1609 = vmatpush1.msra.mxu0 %v47
  %1610 = vmatprep.subr.mxu0 0.0
  %1611 = vmatpush1.msra.mxu0 %v46
  %1612 = vmatprep.subr.mxu0 0.0
  %1613 = vmatpush1.msra.mxu0 %v45
  %1614 = vmatprep.subr.mxu0 0.0
  %1615 = vmatpush1.msra.mxu0 %v44
  %1616 = vmatprep.subr.mxu0 0.0
  %1617 = vmatpush1.msra.mxu0 %v43
  %1618 = vmatprep.subr.mxu0 0.0
  %1619 = vmatpush1.msra.mxu0 %v42
  %1620 = vmatprep.subr.mxu0 0.0
  %1621 = vmatpush1.msra.mxu0 %v41
  %1622 = vmatprep.subr.mxu0 0.0
  %1623 = vmatpush1.msra.mxu0 %v40
  %1624 = vmatprep.subr.mxu0 0.0
  %1625 = vmatpush1.msra.mxu0 %v39
  %1626 = vmatprep.subr.mxu0 0.0
  %1627 = vmatpush1.msra.mxu0 %v38
  %1628 = vmatprep.subr.mxu0 0.0
  %1629 = vmatpush1.msra.mxu0 %v37
  %1630 = vmatprep.subr.mxu0 0.0
  %1631 = vmatpush1.msra.mxu0 %v36
  %1632 = vmatprep.subr.mxu0 0.0
  %1633 = vmatpush1.msra.mxu0 %v35
  %1634 = vmatprep.subr.mxu0 0.0
  %1635 = vmatpush1.msra.mxu0 %v34
  %1636 = vmatprep.subr.mxu0 0.0
  %1637 = vmatpush2.msra.mxu0 0.0
  %1638 = vmatprep.subr.mxu0 0.0
  %1639 = vmatpush2.msra.mxu0 0.0
  %1640 = vmatprep.subr.mxu0 0.0
  %1641 = vmatpush2.msra.mxu0 0.0
  %1642 = vmatprep.subr.mxu0 0.0
  %1643 = vmatpush2.msra.mxu0 0.0
  %1644 = vmatprep.subr.mxu0 0.0
  %1645 = vmatpush2.msra.mxu0 0.0
  %1646 = vmatprep.subr.mxu0 0.0
  %1647 = vmatpush2.msra.mxu0 0.0
  %1648 = vmatprep.subr.mxu0 0.0
  %1649 = vmatpush2.msra.mxu0 0.0
  %1650 = vmatprep.subr.mxu0 0.0
  %1651 = vmatpush2.msra.mxu0 0.0
  %1652 = vmatprep.subr.mxu0 0.0
  %1653 = vmatpush2.msra.mxu0 0.0
  %1654 = vmatprep.subr.mxu0 0.0
  %1655 = vmatpush2.msra.mxu0 0.0
  %1656 = vmatprep.subr.mxu0 0.0
  %1657 = vmatpush2.msra.mxu0 0.0
  %1658 = vmatprep.subr.mxu0 0.0
  %1659 = vmatpush2.msra.mxu0 0.0
  %1660 = vmatprep.subr.mxu0 0.0
  %1661 = vmatpush2.msra.mxu0 0.0
  %1662 = vmatprep.subr.mxu0 0.0
  %1663 = vmatpush2.msra.mxu0 0.0
  %1664 = vmatprep.subr.mxu0 0.0
  %1665 = vmatpush2.msra.mxu0 0.0
  %1666 = vmatprep.subr.mxu0 0.0
  %1667 = vmatpush2.msra.mxu0 0.0
  %1668 = vmatprep.mubr.f32.mxu0 0.0
  %1669 = vmatmul.mubr.f32.gmra.mxu0 %v1603
  %v1670 = vpop.f32.mrf.mxu0
  %v1671 = vadd.f32 %v103, %v1670
  %v1672 = vpop.f32.mrf.mxu0
  %1673 = vdwg.mxu0
  %v1674 = vmax.f32 %v1671, 0.0
  %v1675 = vmul.f32 %v1433, 0.95
  %v1676 = vadd.f32 %v1675, %v1674
  %v1677 = vsub.f32 %v1676, %v1436
  %vm1678 = vcmp.gt.f32.partialorder %v1677, 1.0
  %v1679 = vsel %vm1678, 1, 0
  %v1680 = vcvt.s32.f32 %v1679
  %1681 = vmatprep.subr.mxu0 0.0
  %1682 = vmatpush1.msra.mxu0 %v65
  %1683 = vmatprep.subr.mxu0 0.0
  %1684 = vmatpush1.msra.mxu0 %v64
  %1685 = vmatprep.subr.mxu0 0.0
  %1686 = vmatpush1.msra.mxu0 %v63
  %1687 = vmatprep.subr.mxu0 0.0
  %1688 = vmatpush1.msra.mxu0 %v62
  %1689 = vmatprep.subr.mxu0 0.0
  %1690 = vmatpush1.msra.mxu0 %v61
  %1691 = vmatprep.subr.mxu0 0.0
  %1692 = vmatpush1.msra.mxu0 %v60
  %1693 = vmatprep.subr.mxu0 0.0
  %1694 = vmatpush1.msra.mxu0 %v59
  %1695 = vmatprep.subr.mxu0 0.0
  %1696 = vmatpush1.msra.mxu0 %v58
  %1697 = vmatprep.subr.mxu0 0.0
  %1698 = vmatpush1.msra.mxu0 %v57
  %1699 = vmatprep.subr.mxu0 0.0
  %1700 = vmatpush1.msra.mxu0 %v56
  %1701 = vmatprep.subr.mxu0 0.0
  %1702 = vmatpush1.msra.mxu0 %v55
  %1703 = vmatprep.subr.mxu0 0.0
  %1704 = vmatpush1.msra.mxu0 %v54
  %1705 = vmatprep.subr.mxu0 0.0
  %1706 = vmatpush1.msra.mxu0 %v53
  %1707 = vmatprep.subr.mxu0 0.0
  %1708 = vmatpush1.msra.mxu0 %v52
  %1709 = vmatprep.subr.mxu0 0.0
  %1710 = vmatpush1.msra.mxu0 %v51
  %1711 = vmatprep.subr.mxu0 0.0
  %1712 = vmatpush1.msra.mxu0 %v50
  %1713 = vmatprep.subr.mxu0 0.0
  %1714 = vmatpush2.msra.mxu0 0.0
  %1715 = vmatprep.subr.mxu0 0.0
  %1716 = vmatpush2.msra.mxu0 0.0
  %1717 = vmatprep.subr.mxu0 0.0
  %1718 = vmatpush2.msra.mxu0 0.0
  %1719 = vmatprep.subr.mxu0 0.0
  %1720 = vmatpush2.msra.mxu0 0.0
  %1721 = vmatprep.subr.mxu0 0.0
  %1722 = vmatpush2.msra.mxu0 0.0
  %1723 = vmatprep.subr.mxu0 0.0
  %1724 = vmatpush2.msra.mxu0 0.0
  %1725 = vmatprep.subr.mxu0 0.0
  %1726 = vmatpush2.msra.mxu0 0.0
  %1727 = vmatprep.subr.mxu0 0.0
  %1728 = vmatpush2.msra.mxu0 0.0
  %1729 = vmatprep.subr.mxu0 0.0
  %1730 = vmatpush2.msra.mxu0 0.0
  %1731 = vmatprep.subr.mxu0 0.0
  %1732 = vmatpush2.msra.mxu0 0.0
  %1733 = vmatprep.subr.mxu0 0.0
  %1734 = vmatpush2.msra.mxu0 0.0
  %1735 = vmatprep.subr.mxu0 0.0
  %1736 = vmatpush2.msra.mxu0 0.0
  %1737 = vmatprep.subr.mxu0 0.0
  %1738 = vmatpush2.msra.mxu0 0.0
  %1739 = vmatprep.subr.mxu0 0.0
  %1740 = vmatpush2.msra.mxu0 0.0
  %1741 = vmatprep.subr.mxu0 0.0
  %1742 = vmatpush2.msra.mxu0 0.0
  %1743 = vmatprep.subr.mxu0 0.0
  %1744 = vmatpush2.msra.mxu0 0.0
  %1745 = vmatprep.mubr.f32.mxu0 0.0
  %1746 = vmatmul.mubr.f32.gmra.mxu0 %v1680
  %v1747 = vpop.f32.mrf.mxu0
  %v1748 = vadd.f32 %v110, %v1747
  %v1749 = vpop.f32.mrf.mxu0
  %1750 = vdwg.mxu0
  %v1751 = vmax.f32 %v1748, 0.0
  %v1752 = vmul.f32 %v1510, 0.95
  %v1753 = vadd.f32 %v1752, %v1751
  %v1754 = vsub.f32 %v1753, %v1513
  %vm1755 = vcmp.gt.f32.partialorder %v1754, 1.0
  %v1756 = vsel %vm1755, 1, 0
  %v1757 = vcvt.s32.f32 %v1756
  %1758 = vmatprep.subr.mxu0 %v97
  %1759 = vmatpush1.msra.mxu0 %v96
  %1760 = vmatprep.subr.mxu0 %v95
  %1761 = vmatpush1.msra.mxu0 %v94
  %1762 = vmatprep.subr.mxu0 %v93
  %1763 = vmatpush1.msra.mxu0 %v92
  %1764 = vmatprep.subr.mxu0 %v91
  %1765 = vmatpush1.msra.mxu0 %v90
  %1766 = vmatprep.subr.mxu0 %v89
  %1767 = vmatpush1.msra.mxu0 %v88
  %1768 = vmatprep.subr.mxu0 %v87
  %1769 = vmatpush1.msra.mxu0 %v86
  %1770 = vmatprep.subr.mxu0 %v85
  %1771 = vmatpush1.msra.mxu0 %v84
  %1772 = vmatprep.subr.mxu0 %v83
  %1773 = vmatpush1.msra.mxu0 %v82
  %1774 = vmatprep.subr.mxu0 %v81
  %1775 = vmatpush1.msra.mxu0 %v80
  %1776 = vmatprep.subr.mxu0 %v79
  %1777 = vmatpush1.msra.mxu0 %v78
  %1778 = vmatprep.subr.mxu0 %v77
  %1779 = vmatpush1.msra.mxu0 %v76
  %1780 = vmatprep.subr.mxu0 %v75
  %1781 = vmatpush1.msra.mxu0 %v74
  %1782 = vmatprep.subr.mxu0 %v73
  %1783 = vmatpush1.msra.mxu0 %v72
  %1784 = vmatprep.subr.mxu0 %v71
  %1785 = vmatpush1.msra.mxu0 %v70
  %1786 = vmatprep.subr.mxu0 %v69
  %1787 = vmatpush1.msra.mxu0 %v68
  %1788 = vmatprep.subr.mxu0 %v67
  %1789 = vmatpush1.msra.mxu0 %v66
  %1790 = vmatprep.subr.mxu0 0.0
  %1791 = vmatpush2.msra.mxu0 0.0
  %1792 = vmatprep.subr.mxu0 0.0
  %1793 = vmatpush2.msra.mxu0 0.0
  %1794 = vmatprep.subr.mxu0 0.0
  %1795 = vmatpush2.msra.mxu0 0.0
  %1796 = vmatprep.subr.mxu0 0.0
  %1797 = vmatpush2.msra.mxu0 0.0
  %1798 = vmatprep.subr.mxu0 0.0
  %1799 = vmatpush2.msra.mxu0 0.0
  %1800 = vmatprep.subr.mxu0 0.0
  %1801 = vmatpush2.msra.mxu0 0.0
  %1802 = vmatprep.subr.mxu0 0.0
  %1803 = vmatpush2.msra.mxu0 0.0
  %1804 = vmatprep.subr.mxu0 0.0
  %1805 = vmatpush2.msra.mxu0 0.0
  %1806 = vmatprep.subr.mxu0 0.0
  %1807 = vmatpush2.msra.mxu0 0.0
  %1808 = vmatprep.subr.mxu0 0.0
  %1809 = vmatpush2.msra.mxu0 0.0
  %1810 = vmatprep.subr.mxu0 0.0
  %1811 = vmatpush2.msra.mxu0 0.0
  %1812 = vmatprep.subr.mxu0 0.0
  %1813 = vmatpush2.msra.mxu0 0.0
  %1814 = vmatprep.subr.mxu0 0.0
  %1815 = vmatpush2.msra.mxu0 0.0
  %1816 = vmatprep.subr.mxu0 0.0
  %1817 = vmatpush2.msra.mxu0 0.0
  %1818 = vmatprep.subr.mxu0 0.0
  %1819 = vmatpush2.msra.mxu0 0.0
  %1820 = vmatprep.subr.mxu0 0.0
  %1821 = vmatpush2.msra.mxu0 0.0
  %1822 = vmatprep.mubr.f32.mxu0 0.0
  %1823 = vmatmul.mubr.f32.gmra.mxu0 %v1757
  %v1824 = vpop.f32.mrf.mxu0
  %v1825 = vadd.f32 %v117, %v1824
  %v1826 = vpop.f32.mrf.mxu0
  %v1827 = vadd.f32 %v121, %v1826
  %1828 = vdwg.mxu0
  %v1829 = vmax.f32 %v1825, 0.0
  %v1830 = vmax.f32 %v1827, 0.0
  %v1831 = vmul.f32 %v1591, 0.95
  %v1832 = vmul.f32 %v1592, 0.95
  %v1833 = vadd.f32 %v1831, %v1829
  %v1834 = vadd.f32 %v1832, %v1830
  %v1835 = vsub.f32 %v1833, %v1597
  %v1836 = vsub.f32 %v1834, %v1598
  %vm1837 = vcmp.gt.f32.partialorder %v1835, 1.0
  %vm1838 = vcmp.gt.f32.partialorder %v1836, 1.0
  %v1839 = vsel %vm1837, 1, 0
  %v1840 = vsel %vm1838, 1, 0
  %v1841 = vcvt.s32.f32 %v1839
  %v1842 = vcvt.s32.f32 %v1840
  %s1843 = scalar_lea.vmem %s7, 96
  %1844 = vst [vmem:[%s1843] sm:$0xff] %v1841
  %1845 = vst [vmem:[%s1843 + $0x8] sm:$0xff] %v1842
  %s1846 = scalar_lea.vmem %s0, 56
  %v1847 = vld [vmem:[%s1846] sm:$0xff]
  %1848 = vmatprep.subr.mxu0 0.0
  %1849 = vmatpush1.msra.mxu0 %v49
  %1850 = vmatprep.subr.mxu0 0.0
  %1851 = vmatpush1.msra.mxu0 %v48
  %1852 = vmatprep.subr.mxu0 0.0
  %1853 = vmatpush1.msra.mxu0 %v47
  %1854 = vmatprep.subr.mxu0 0.0
  %1855 = vmatpush1.msra.mxu0 %v46
  %1856 = vmatprep.subr.mxu0 0.0
  %1857 = vmatpush1.msra.mxu0 %v45
  %1858 = vmatprep.subr.mxu0 0.0
  %1859 = vmatpush1.msra.mxu0 %v44
  %1860 = vmatprep.subr.mxu0 0.0
  %1861 = vmatpush1.msra.mxu0 %v43
  %1862 = vmatprep.subr.mxu0 0.0
  %1863 = vmatpush1.msra.mxu0 %v42
  %1864 = vmatprep.subr.mxu0 0.0
  %1865 = vmatpush1.msra.mxu0 %v41
  %1866 = vmatprep.subr.mxu0 0.0
  %1867 = vmatpush1.msra.mxu0 %v40
  %1868 = vmatprep.subr.mxu0 0.0
  %1869 = vmatpush1.msra.mxu0 %v39
  %1870 = vmatprep.subr.mxu0 0.0
  %1871 = vmatpush1.msra.mxu0 %v38
  %1872 = vmatprep.subr.mxu0 0.0
  %1873 = vmatpush1.msra.mxu0 %v37
  %1874 = vmatprep.subr.mxu0 0.0
  %1875 = vmatpush1.msra.mxu0 %v36
  %1876 = vmatprep.subr.mxu0 0.0
  %1877 = vmatpush1.msra.mxu0 %v35
  %1878 = vmatprep.subr.mxu0 0.0
  %1879 = vmatpush1.msra.mxu0 %v34
  %1880 = vmatprep.subr.mxu0 0.0
  %1881 = vmatpush2.msra.mxu0 0.0
  %1882 = vmatprep.subr.mxu0 0.0
  %1883 = vmatpush2.msra.mxu0 0.0
  %1884 = vmatprep.subr.mxu0 0.0
  %1885 = vmatpush2.msra.mxu0 0.0
  %1886 = vmatprep.subr.mxu0 0.0
  %1887 = vmatpush2.msra.mxu0 0.0
  %1888 = vmatprep.subr.mxu0 0.0
  %1889 = vmatpush2.msra.mxu0 0.0
  %1890 = vmatprep.subr.mxu0 0.0
  %1891 = vmatpush2.msra.mxu0 0.0
  %1892 = vmatprep.subr.mxu0 0.0
  %1893 = vmatpush2.msra.mxu0 0.0
  %1894 = vmatprep.subr.mxu0 0.0
  %1895 = vmatpush2.msra.mxu0 0.0
  %1896 = vmatprep.subr.mxu0 0.0
  %1897 = vmatpush2.msra.mxu0 0.0
  %1898 = vmatprep.subr.mxu0 0.0
  %1899 = vmatpush2.msra.mxu0 0.0
  %1900 = vmatprep.subr.mxu0 0.0
  %1901 = vmatpush2.msra.mxu0 0.0
  %1902 = vmatprep.subr.mxu0 0.0
  %1903 = vmatpush2.msra.mxu0 0.0
  %1904 = vmatprep.subr.mxu0 0.0
  %1905 = vmatpush2.msra.mxu0 0.0
  %1906 = vmatprep.subr.mxu0 0.0
  %1907 = vmatpush2.msra.mxu0 0.0
  %1908 = vmatprep.subr.mxu0 0.0
  %1909 = vmatpush2.msra.mxu0 0.0
  %1910 = vmatprep.subr.mxu0 0.0
  %1911 = vmatpush2.msra.mxu0 0.0
  %1912 = vmatprep.mubr.f32.mxu0 0.0
  %1913 = vmatmul.mubr.f32.gmra.mxu0 %v1847
  %v1914 = vpop.f32.mrf.mxu0
  %v1915 = vadd.f32 %v103, %v1914
  %v1916 = vpop.f32.mrf.mxu0
  %1917 = vdwg.mxu0
  %v1918 = vmax.f32 %v1915, 0.0
  %v1919 = vmul.f32 %v1677, 0.95
  %v1920 = vadd.f32 %v1919, %v1918
  %v1921 = vsub.f32 %v1920, %v1680
  %vm1922 = vcmp.gt.f32.partialorder %v1921, 1.0
  %v1923 = vsel %vm1922, 1, 0
  %v1924 = vcvt.s32.f32 %v1923
  %1925 = vmatprep.subr.mxu0 0.0
  %1926 = vmatpush1.msra.mxu0 %v65
  %1927 = vmatprep.subr.mxu0 0.0
  %1928 = vmatpush1.msra.mxu0 %v64
  %1929 = vmatprep.subr.mxu0 0.0
  %1930 = vmatpush1.msra.mxu0 %v63
  %1931 = vmatprep.subr.mxu0 0.0
  %1932 = vmatpush1.msra.mxu0 %v62
  %1933 = vmatprep.subr.mxu0 0.0
  %1934 = vmatpush1.msra.mxu0 %v61
  %1935 = vmatprep.subr.mxu0 0.0
  %1936 = vmatpush1.msra.mxu0 %v60
  %1937 = vmatprep.subr.mxu0 0.0
  %1938 = vmatpush1.msra.mxu0 %v59
  %1939 = vmatprep.subr.mxu0 0.0
  %1940 = vmatpush1.msra.mxu0 %v58
  %1941 = vmatprep.subr.mxu0 0.0
  %1942 = vmatpush1.msra.mxu0 %v57
  %1943 = vmatprep.subr.mxu0 0.0
  %1944 = vmatpush1.msra.mxu0 %v56
  %1945 = vmatprep.subr.mxu0 0.0
  %1946 = vmatpush1.msra.mxu0 %v55
  %1947 = vmatprep.subr.mxu0 0.0
  %1948 = vmatpush1.msra.mxu0 %v54
  %1949 = vmatprep.subr.mxu0 0.0
  %1950 = vmatpush1.msra.mxu0 %v53
  %1951 = vmatprep.subr.mxu0 0.0
  %1952 = vmatpush1.msra.mxu0 %v52
  %1953 = vmatprep.subr.mxu0 0.0
  %1954 = vmatpush1.msra.mxu0 %v51
  %1955 = vmatprep.subr.mxu0 0.0
  %1956 = vmatpush1.msra.mxu0 %v50
  %1957 = vmatprep.subr.mxu0 0.0
  %1958 = vmatpush2.msra.mxu0 0.0
  %1959 = vmatprep.subr.mxu0 0.0
  %1960 = vmatpush2.msra.mxu0 0.0
  %1961 = vmatprep.subr.mxu0 0.0
  %1962 = vmatpush2.msra.mxu0 0.0
  %1963 = vmatprep.subr.mxu0 0.0
  %1964 = vmatpush2.msra.mxu0 0.0
  %1965 = vmatprep.subr.mxu0 0.0
  %1966 = vmatpush2.msra.mxu0 0.0
  %1967 = vmatprep.subr.mxu0 0.0
  %1968 = vmatpush2.msra.mxu0 0.0
  %1969 = vmatprep.subr.mxu0 0.0
  %1970 = vmatpush2.msra.mxu0 0.0
  %1971 = vmatprep.subr.mxu0 0.0
  %1972 = vmatpush2.msra.mxu0 0.0
  %1973 = vmatprep.subr.mxu0 0.0
  %1974 = vmatpush2.msra.mxu0 0.0
  %1975 = vmatprep.subr.mxu0 0.0
  %1976 = vmatpush2.msra.mxu0 0.0
  %1977 = vmatprep.subr.mxu0 0.0
  %1978 = vmatpush2.msra.mxu0 0.0
  %1979 = vmatprep.subr.mxu0 0.0
  %1980 = vmatpush2.msra.mxu0 0.0
  %1981 = vmatprep.subr.mxu0 0.0
  %1982 = vmatpush2.msra.mxu0 0.0
  %1983 = vmatprep.subr.mxu0 0.0
  %1984 = vmatpush2.msra.mxu0 0.0
  %1985 = vmatprep.subr.mxu0 0.0
  %1986 = vmatpush2.msra.mxu0 0.0
  %1987 = vmatprep.subr.mxu0 0.0
  %1988 = vmatpush2.msra.mxu0 0.0
  %1989 = vmatprep.mubr.f32.mxu0 0.0
  %1990 = vmatmul.mubr.f32.gmra.mxu0 %v1924
  %v1991 = vpop.f32.mrf.mxu0
  %v1992 = vadd.f32 %v110, %v1991
  %v1993 = vpop.f32.mrf.mxu0
  %1994 = vdwg.mxu0
  %v1995 = vmax.f32 %v1992, 0.0
  %v1996 = vmul.f32 %v1754, 0.95
  %v1997 = vadd.f32 %v1996, %v1995
  %v1998 = vsub.f32 %v1997, %v1757
  %vm1999 = vcmp.gt.f32.partialorder %v1998, 1.0
  %v2000 = vsel %vm1999, 1, 0
  %v2001 = vcvt.s32.f32 %v2000
  %2002 = vmatprep.subr.mxu0 %v97
  %2003 = vmatpush1.msra.mxu0 %v96
  %2004 = vmatprep.subr.mxu0 %v95
  %2005 = vmatpush1.msra.mxu0 %v94
  %2006 = vmatprep.subr.mxu0 %v93
  %2007 = vmatpush1.msra.mxu0 %v92
  %2008 = vmatprep.subr.mxu0 %v91
  %2009 = vmatpush1.msra.mxu0 %v90
  %2010 = vmatprep.subr.mxu0 %v89
  %2011 = vmatpush1.msra.mxu0 %v88
  %2012 = vmatprep.subr.mxu0 %v87
  %2013 = vmatpush1.msra.mxu0 %v86
  %2014 = vmatprep.subr.mxu0 %v85
  %2015 = vmatpush1.msra.mxu0 %v84
  %2016 = vmatprep.subr.mxu0 %v83
  %2017 = vmatpush1.msra.mxu0 %v82
  %2018 = vmatprep.subr.mxu0 %v81
  %2019 = vmatpush1.msra.mxu0 %v80
  %2020 = vmatprep.subr.mxu0 %v79
  %2021 = vmatpush1.msra.mxu0 %v78
  %2022 = vmatprep.subr.mxu0 %v77
  %2023 = vmatpush1.msra.mxu0 %v76
  %2024 = vmatprep.subr.mxu0 %v75
  %2025 = vmatpush1.msra.mxu0 %v74
  %2026 = vmatprep.subr.mxu0 %v73
  %2027 = vmatpush1.msra.mxu0 %v72
  %2028 = vmatprep.subr.mxu0 %v71
  %2029 = vmatpush1.msra.mxu0 %v70
  %2030 = vmatprep.subr.mxu0 %v69
  %2031 = vmatpush1.msra.mxu0 %v68
  %2032 = vmatprep.subr.mxu0 %v67
  %2033 = vmatpush1.msra.mxu0 %v66
  %2034 = vmatprep.subr.mxu0 0.0
  %2035 = vmatpush2.msra.mxu0 0.0
  %2036 = vmatprep.subr.mxu0 0.0
  %2037 = vmatpush2.msra.mxu0 0.0
  %2038 = vmatprep.subr.mxu0 0.0
  %2039 = vmatpush2.msra.mxu0 0.0
  %2040 = vmatprep.subr.mxu0 0.0
  %2041 = vmatpush2.msra.mxu0 0.0
  %2042 = vmatprep.subr.mxu0 0.0
  %2043 = vmatpush2.msra.mxu0 0.0
  %2044 = vmatprep.subr.mxu0 0.0
  %2045 = vmatpush2.msra.mxu0 0.0
  %2046 = vmatprep.subr.mxu0 0.0
  %2047 = vmatpush2.msra.mxu0 0.0
  %2048 = vmatprep.subr.mxu0 0.0
  %2049 = vmatpush2.msra.mxu0 0.0
  %2050 = vmatprep.subr.mxu0 0.0
  %2051 = vmatpush2.msra.mxu0 0.0
  %2052 = vmatprep.subr.mxu0 0.0
  %2053 = vmatpush2.msra.mxu0 0.0
  %2054 = vmatprep.subr.mxu0 0.0
  %2055 = vmatpush2.msra.mxu0 0.0
  %2056 = vmatprep.subr.mxu0 0.0
  %2057 = vmatpush2.msra.mxu0 0.0
  %2058 = vmatprep.subr.mxu0 0.0
  %2059 = vmatpush2.msra.mxu0 0.0
  %2060 = vmatprep.subr.mxu0 0.0
  %2061 = vmatpush2.msra.mxu0 0.0
  %2062 = vmatprep.subr.mxu0 0.0
  %2063 = vmatpush2.msra.mxu0 0.0
  %2064 = vmatprep.subr.mxu0 0.0
  %2065 = vmatpush2.msra.mxu0 0.0
  %2066 = vmatprep.mubr.f32.mxu0 0.0
  %2067 = vmatmul.mubr.f32.gmra.mxu0 %v2001
  %v2068 = vpop.f32.mrf.mxu0
  %v2069 = vadd.f32 %v117, %v2068
  %v2070 = vpop.f32.mrf.mxu0
  %v2071 = vadd.f32 %v121, %v2070
  %2072 = vdwg.mxu0
  %v2073 = vmax.f32 %v2069, 0.0
  %v2074 = vmax.f32 %v2071, 0.0
  %v2075 = vmul.f32 %v1835, 0.95
  %v2076 = vmul.f32 %v1836, 0.95
  %v2077 = vadd.f32 %v2075, %v2073
  %v2078 = vadd.f32 %v2076, %v2074
  %v2079 = vsub.f32 %v2077, %v1841
  %v2080 = vsub.f32 %v2078, %v1842
  %vm2081 = vcmp.gt.f32.partialorder %v2079, 1.0
  %vm2082 = vcmp.gt.f32.partialorder %v2080, 1.0
  %v2083 = vsel %vm2081, 1, 0
  %v2084 = vsel %vm2082, 1, 0
  %v2085 = vcvt.s32.f32 %v2083
  %v2086 = vcvt.s32.f32 %v2084
  %s2087 = scalar_lea.vmem %s7, 112
  %2088 = vst [vmem:[%s2087] sm:$0xff] %v2085
  %2089 = vst [vmem:[%s2087 + $0x8] sm:$0xff] %v2086
  %2090 = vst [vmem:[#allocation2] sm:$0xff] %v1921
  %2091 = vst [vmem:[#allocation3] sm:$0xff] %v1998
  %2092 = vst [vmem:[#allocation4] sm:$0xff] %v2079
  %2093 = vst [vmem:[#allocation4 + $0x8] sm:$0xff] %v2080
  // Predicated region
  $region34: #{generator_forward.1} parent=0 // pred_check
    _
  $region35: #{generator_forward.1} parent=0 // pred_check_branch
    %2095 = sbr.rel (0) target = $region37
  $region36: #{generator_forward.1} parent=0 // pred_region
    _
  $region37: #{generator_forward.1} parent=0 // pred_fallthru
    _
  // Predicated region
  $region38: #{generator_forward.1} parent=0 // pred_check
    _
  $region39: #{generator_forward.1} parent=0 // pred_check_branch
    %2097 = sbr.rel (0) target = $region41
  $region40: #{generator_forward.1} parent=0 // pred_region
    _
  $region41: #{generator_forward.1} parent=0 // pred_fallthru
    _

</llo_original>
